<compile_context>
chip_gen: v5e
topology: v5e:2x2
jax: 0.10.0
libtpu: 0.0.40
codegen_flags: <defaults>
</compile_context>

<pallas_src>
import functools

import jax
import jax.numpy as jnp
from jax import lax
from jax.experimental import pallas as pl
from jax.experimental.pallas import tpu as pltpu

_LANES = 128   # lane-facing dims (conv2's K, fc2's out) are padded to this
_BB = 8        # samples per grid step (== f32 sublane count -> aligned slabs)


# ------------------------------ small helpers ------------------------------ #

def _round_up(x, m):
    return -(-x // m) * m


def _space_to_depth(x, s):
    """[N, H, W, C] -> [N, H//s, W//s, s*s*C], channel packing order (di, dj, c)."""
    n, h, w, c = x.shape
    x = x.reshape(n, h // s, s, w // s, s, c)
    x = jnp.transpose(x, (0, 1, 3, 2, 4, 5))
    return x.reshape(n, h // s, w // s, s * s * c)


def _fold_stride(wt, s):
    """[k, k, ci, o] stride-s conv weight -> [k//s, k//s, s*s*ci, o] stride-1
    weight acting on the space-to-depth(s)'d input (packing order (di, dj, ci))."""
    k, _, ci, o = wt.shape
    m = k // s
    wt = wt.reshape(m, s, m, s, ci, o)
    wt = jnp.transpose(wt, (0, 2, 1, 3, 4, 5))
    return wt.reshape(m, m, s * s * ci, o)


def feature_size(input_shape):
    c, h, w = input_shape
    h1, w1 = (h - 8) // 4 + 1, (w - 8) // 4 + 1
    h2, w2 = (h1 - 4) // 2 + 1, (w1 - 4) // 2 + 1
    h3, w3 = h2 - 2, w2 - 2
    return 64 * h3 * w3


# ------------------------------- Pallas kernel ------------------------------ #

def _cnn_dqn_kernel(xs_ref, w1_ref, b1_ref, w2_ref, b2_ref, w3_ref, b3_ref,
                    fw1_ref, fb1_ref, fw2_ref, fb2_ref, o_ref,
                    a1_ref, a2_ref, *, bb, ho2, wo2, ho3, wo3):
    """Fused conv1 + s2d + conv2 + conv3 + fc1 + fc2 for one tile of `bb` samples.

    xs_ref : [ho2+2, wo2+2, bb, 64*Cin] f32  input, space-to-depth'd by 4 then 2
    w1_ref : [2, 2, 64*Cin, 128]             conv1 weight with the act1->conv2
                                             space-to-depth folded in (4 phases
                                             packed into the 128 out channels)
    w2_ref : [2, 2, 128, 64]    w3_ref : [3, 3, 64, 64]
    fw1_ref: [ho3*wo3, 64, 512]              fc1 with torch's (c,h,w) flatten folded in
    fw2_ref: [512, 128]                      fc2, out columns zero-padded to 128 lanes
    o_ref  : [bb, 128] f32
    a1_ref : [ho2+1, wo2+1, bb, 128] f32 scratch (conv1 output, s2d(2) layout)
    a2_ref : [ho2,   wo2,   bb,  64] f32 scratch (conv2 output)
    """
    f32 = jnp.float32

    # ---- conv1 (emits directly in the s2d(2) layout conv2 consumes) ----
    k1 = xs_ref.shape[3]
    c1 = w1_ref.shape[3]                       # 128 = 4 phases x 32 channels
    n1 = (ho2 + 1) * (wo2 + 1) * bb
    acc = jnp.broadcast_to(b1_ref[...], (n1, c1)).astype(f32)
    for a in range(2):
        for c in range(2):
            slab = xs_ref[a:a + ho2 + 1, c:c + wo2 + 1, :, :].reshape(n1, k1)
            acc = acc + jnp.dot(slab, w1_ref[a, c], preferred_element_type=f32)
    a1_ref[...] = jnp.maximum(acc, 0.0).reshape(ho2 + 1, wo2 + 1, bb, c1)

    # ---- conv2: 2x2 stride-1 taps over the s2d'd conv1 output (K = 128) ----
    c2 = w2_ref.shape[3]
    n2 = ho2 * wo2 * bb
    acc = jnp.broadcast_to(b2_ref[...], (n2, c2)).astype(f32)
    for a in range(2):
        for c in range(2):
            slab = a1_ref[a:a + ho2, c:c + wo2, :, :].reshape(n2, c1)
            acc = acc + jnp.dot(slab, w2_ref[a, c], preferred_element_type=f32)
    a2_ref[...] = jnp.maximum(acc, 0.0).reshape(ho2, wo2, bb, c2)

    # ---- conv3: 3x3 stride-1 taps (K = 64) ----
    c3 = w3_ref.shape[3]
    n3 = ho3 * wo3 * bb
    acc = jnp.broadcast_to(b3_ref[...], (n3, c3)).astype(f32)
    for a in range(3):
        for c in range(3):
            slab = a2_ref[a:a + ho3, c:c + wo3, :, :].reshape(n3, c2)
            acc = acc + jnp.dot(slab, w3_ref[a, c], preferred_element_type=f32)
    a3 = jnp.maximum(acc, 0.0)                 # rows ordered (h, w, batch)

    # ---- fc1: per-spatial-position dots with the batch filling M ----
    d1 = fw1_ref.shape[2]
    acc = jnp.broadcast_to(fb1_ref[...], (bb, d1)).astype(f32)
    for s in range(ho3 * wo3):
        acc = acc + jnp.dot(a3[s * bb:(s + 1) * bb, :], fw1_ref[s],
                            preferred_element_type=f32)
    hid = jnp.maximum(acc, 0.0)

    # ---- fc2: single lane-dense (bb, 128) store ----
    o_ref[...] = jnp.dot(hid, fw2_ref[...],
                         preferred_element_type=f32) + fb2_ref[...]


# ----------------------------- pallas_call wrapper --------------------------- #

def _fused_call(xs8, params, *, bb, ho2, wo2, ho3, wo3, apad):
    h8, w8, n_pad, c_in = xs8.shape
    grid = (n_pad // bb,)

    weights = (params["w1"], params["b1"], params["w2"], params["b2"],
               params["w3"], params["b3"], params["fw1"], params["fb1"],
               params["fw2"], params["fb2"])

    flops = 2 * n_pad * (
        4 * (ho2 + 1) * (wo2 + 1) * c_in * 128
        + 4 * ho2 * wo2 * 128 * 64
        + 9 * ho3 * wo3 * 64 * 64
        + ho3 * wo3 * 64 * 512
        + 512 * apad)
    bytes_accessed = (xs8.size + sum(w.size for w in weights) + n_pad * apad) * 4

    def full(shape):
        n_dim = len(shape)

        def imap(i):
            return (0,) * n_dim

        return pl.BlockSpec(shape, imap)

    return pl.pallas_call(
        functools.partial(_cnn_dqn_kernel, bb=bb, ho2=ho2, wo2=wo2,
                          ho3=ho3, wo3=wo3),
        out_shape=jax.ShapeDtypeStruct((n_pad, apad), jnp.float32),
        grid=grid,
        in_specs=[
            pl.BlockSpec((h8, w8, bb, c_in), lambda i: (0, 0, i, 0)),
            full(params["w1"].shape), full(params["b1"].shape),
            full(params["w2"].shape), full(params["b2"].shape),
            full(params["w3"].shape), full(params["b3"].shape),
            full(params["fw1"].shape), full(params["fb1"].shape),
            full(params["fw2"].shape), full(params["fb2"].shape),
        ],
        out_specs=pl.BlockSpec((bb, apad), lambda i: (i, 0)),
        scratch_shapes=[
            pltpu.VMEM((ho2 + 1, wo2 + 1, bb, 128), jnp.float32),
            pltpu.VMEM((ho2, wo2, bb, 64), jnp.float32),
        ],
        compiler_params=pltpu.CompilerParams(
            dimension_semantics=("parallel",),
            vmem_limit_bytes=32 * 1024 * 1024),
        cost_estimate=pl.CostEstimate(flops=flops, transcendentals=0,
                                      bytes_accessed=bytes_accessed),
    )(xs8, *weights)


# ------------------------ parameter init & preparation ----------------------- #

def init_raw_params(key, in_channels, feat, num_actions):
    """PyTorch-default (uniform +-1/sqrt(fan_in)) params in PyTorch layouts."""
    ks = jax.random.split(key, 10)

    def u(k, shape, bound):
        return jax.random.uniform(k, shape, jnp.float32, -bound, bound)

    def conv(kw, kb, o, ci, k):
        bound = 1.0 / (ci * k * k) ** 0.5
        return u(kw, (o, ci, k, k), bound), u(kb, (o,), bound)

    def lin(kw, kb, o, i):
        bound = 1.0 / i ** 0.5
        return u(kw, (o, i), bound), u(kb, (o,), bound)

    w1, b1 = conv(ks[0], ks[1], 32, in_channels, 8)
    w2, b2 = conv(ks[2], ks[3], 64, 32, 4)
    w3, b3 = conv(ks[4], ks[5], 64, 64, 3)
    fc1_w, fc1_b = lin(ks[6], ks[7], 512, feat)
    fc2_w, fc2_b = lin(ks[8], ks[9], num_actions, 512)
    return dict(w1=w1, b1=b1, w2=w2, b2=b2, w3=w3, b3=b3,
                fc1_w=fc1_w, fc1_b=fc1_b, fc2_w=fc2_w, fc2_b=fc2_b)


def prep_params(raw, input_shape, num_actions):
    """One-time layout work (hoisted out of the forward hot path)."""
    cin, h, w = input_shape
    h1, w1 = (h - 8) // 4 + 1, (w - 8) // 4 + 1
    h2, w2 = (h1 - 4) // 2 + 1, (w1 - 4) // 2 + 1
    h3, w3 = h2 - 2, w2 - 2
    f32 = jnp.float32

    # conv1: torch [32, cin, 8, 8] -> stride-1 weight over the s2d(4) input,
    # then fold the act1 -> conv2 space-to-depth(2) into it: build the
    # (kernel-4, stride-2) conv whose 4*32 = 128 output channels are the four
    # s2d phases (di, dj) of conv1's output, and fold THAT stride with s2d(2).
    w1s4 = _fold_stride(jnp.transpose(raw["w1"], (2, 3, 1, 0)), 4)   # [2,2,16cin,32]
    c16 = w1s4.shape[2]
    w1e = jnp.zeros((4, 4, c16, 4 * 32), f32)
    for di in range(2):
        for dj in range(2):
            off = (di * 2 + dj) * 32
            for a in range(2):
                for c in range(2):
                    w1e = w1e.at[di + a, dj + c, :, off:off + 32].set(w1s4[a, c])
    w1p = _fold_stride(w1e, 2)                                        # [2,2,64cin,128]
    b1p = jnp.tile(raw["b1"], 4).reshape(1, 128)

    # conv2: torch [64, 32, 4, 4] -> stride-1 weight over the s2d(2)'d act1 (K=128).
    w2p = _fold_stride(jnp.transpose(raw["w2"], (2, 3, 1, 0)), 2)     # [2,2,128,64]
    b2p = raw["b2"].reshape(1, -1)

    # conv3: stride 1 -> channels-last only.
    w3p = jnp.transpose(raw["w3"], (2, 3, 1, 0))                      # [3,3,64,64]
    b3p = raw["b3"].reshape(1, -1)

    # fc1: fold torch's NCHW (c, h, w) flatten into per-spatial [64, 512] blocks.
    fw1 = raw["fc1_w"].reshape(512, 64, h3, w3)
    fw1 = jnp.transpose(fw1, (2, 3, 1, 0)).reshape(h3 * w3, 64, 512)
    fb1 = raw["fc1_b"].reshape(1, -1)

    apad = _round_up(num_actions, _LANES)
    fw2 = jnp.pad(raw["fc2_w"].T, ((0, 0), (0, apad - num_actions)))
    fb2 = jnp.pad(raw["fc2_b"], (0, apad - num_actions)).reshape(1, -1)

    return dict(w1=w1p.astype(f32), b1=b1p.astype(f32),
                w2=w2p.astype(f32), b2=b2p.astype(f32),
                w3=w3p.astype(f32), b3=b3p.astype(f32),
                fw1=fw1.astype(f32), fb1=fb1.astype(f32),
                fw2=fw2.astype(f32), fb2=fb2.astype(f32))


# ---------------------------------- forward ---------------------------------- #

def cnn_dqn_forward(params, x_nchw, *, num_actions):
    n, _, h, w = x_nchw.shape
    ho1, wo1 = (h - 8) // 4 + 1, (w - 8) // 4 + 1
    ho2, wo2 = (ho1 - 4) // 2 + 1, (wo1 - 4) // 2 + 1
    ho3, wo3 = ho2 - 2, wo2 - 2
    bb = _BB
    n_pad = _round_up(n, bb)
    apad = _round_up(num_actions, _LANES)

    # One-time input relayout (pure data movement, done by XLA once per
    # forward): crop to the receptive field actually consumed downstream, go
    # channels-last, and space-to-depth by conv1's stride (4) then conv2's
    # stride (2) so both convs are stride-1 slab matmuls inside the kernel.
    x = jnp.transpose(x_nchw, (0, 2, 3, 1)).astype(jnp.float32)        # NHWC
    x = x[:, :8 * ho2 + 12, :8 * wo2 + 12, :]
    xs4 = _space_to_depth(x, 4)                     # [n, 2*ho2+3, 2*wo2+3, 16*cin]
    xs4 = jnp.pad(xs4, ((0, n_pad - n), (0, 1), (0, 1), (0, 0)))
    xs8 = _space_to_depth(xs4, 2)                   # [n_pad, ho2+2, wo2+2, 64*cin]
    xs8 = jnp.transpose(xs8, (1, 2, 0, 3))          # batch 3rd-minor -> slab rows (h, w, b)

    q = _fused_call(xs8, params, bb=bb, ho2=ho2, wo2=wo2, ho3=ho3, wo3=wo3,
                    apad=apad)                      # [n_pad, apad] f32
    return q[:n, :num_actions]


# ----------------------------- pure-JAX reference ----------------------------- #

def reference_forward(raw, x_nchw):
    """fp32 reference matching the PyTorch module (for the correctness check)."""
    hp = lax.Precision.HIGHEST

    def conv(z, w, b, s):
        z = lax.conv_general_dilated(z, w, (s, s), "VALID",
                                     dimension_numbers=("NCHW", "OIHW", "NCHW"),
                                     precision=hp)
        return jnp.maximum(z + b[None, :, None, None], 0.0)

    z = conv(x_nchw, raw["w1"], raw["b1"], 4)
    z = conv(z, raw["w2"], raw["b2"], 2)
    z = conv(z, raw["w3"], raw["b3"], 1)
    z = z.reshape(z.shape[0], -1)                   # torch (c, h, w) flatten
    z = jnp.maximum(jnp.dot(z, raw["fc1_w"].T, precision=hp) + raw["fc1_b"], 0.0)
    return jnp.dot(z, raw["fc2_w"].T, precision=hp) + raw["fc2_b"]


# ------------------------------------ main ----------------------------------- #

if __name__ == "__main__":
    # Small-but-valid shapes: batch=2, 4 input channels, 44x44 spatial,
    # num_actions=2 (CartPole). Conv stack: 44 -> 10 -> 4 -> 2, feat = 64*2*2.
    batch = 2
    input_shape = (4, 44, 44)
    num_actions = 2

    feat = feature_size(input_shape)
    key = jax.random.PRNGKey(0)
    k_params, k_x = jax.random.split(key)

    raw = init_raw_params(k_params, input_shape[0], feat, num_actions)
    params = prep_params(raw, input_shape, num_actions)
    x = jax.random.normal(k_x, (batch,) + input_shape, dtype=jnp.float32)

    fwd = jax.jit(functools.partial(cnn_dqn_forward, num_actions=num_actions))
    q_values = jax.block_until_ready(fwd(params, x))
    assert q_values.shape == (batch, num_actions), q_values.shape

    # Correctness check against the fp32 reference of the PyTorch module.
    q_ref = reference_forward(raw, x)
    max_err = float(jnp.max(jnp.abs(q_values - q_ref)))
    assert max_err < 2e-2, f"kernel mismatch vs fp32 reference: {max_err}"

    print("KERNEL_OK")
</pallas_src>

<mosaic_0001>
module attributes {stable_mosaic.version = 11 : i64} {
  func.func @_cnn_dqn_kernel(%arg0: i32, %arg1: memref<6x6x8x256xf32, #tpu.memory_space<vmem>>, %arg2: memref<2x2x256x128xf32, #tpu.memory_space<vmem>>, %arg3: memref<1x128xf32, #tpu.memory_space<vmem>>, %arg4: memref<2x2x128x64xf32, #tpu.memory_space<vmem>>, %arg5: memref<1x64xf32, #tpu.memory_space<vmem>>, %arg6: memref<3x3x64x64xf32, #tpu.memory_space<vmem>>, %arg7: memref<1x64xf32, #tpu.memory_space<vmem>>, %arg8: memref<4x64x512xf32, #tpu.memory_space<vmem>>, %arg9: memref<1x512xf32, #tpu.memory_space<vmem>>, %arg10: memref<512x128xf32, #tpu.memory_space<vmem>>, %arg11: memref<1x128xf32, #tpu.memory_space<vmem>>, %arg12: memref<8x128xf32, #tpu.memory_space<vmem>>, %arg13: memref<5x5x8x128xf32, #tpu.memory_space<vmem>>, %arg14: memref<4x4x8x64xf32, #tpu.memory_space<vmem>>) attributes {dimension_semantics = [#tpu.dimension_semantics<parallel>], iteration_bounds = array<i64: 1>, scalar_prefetch = 0 : i64, scratch_operands = 2 : i64, tpu.core_type = #tpu.core_type<tc>, window_params = [{transform_indices = @transform_0, window_bounds = array<i64: 6, 6, 8, 256>}, {pipeline_mode = #tpu.pipeline_mode<synchronous>, transform_indices = @transform_1, window_bounds = array<i64: 2, 2, 256, 128>}, {pipeline_mode = #tpu.pipeline_mode<synchronous>, transform_indices = @transform_2, window_bounds = array<i64: 1, 128>}, {pipeline_mode = #tpu.pipeline_mode<synchronous>, transform_indices = @transform_3, window_bounds = array<i64: 2, 2, 128, 64>}, {pipeline_mode = #tpu.pipeline_mode<synchronous>, transform_indices = @transform_4, window_bounds = array<i64: 1, 64>}, {pipeline_mode = #tpu.pipeline_mode<synchronous>, transform_indices = @transform_5, window_bounds = array<i64: 3, 3, 64, 64>}, {pipeline_mode = #tpu.pipeline_mode<synchronous>, transform_indices = @transform_6, window_bounds = array<i64: 1, 64>}, {pipeline_mode = #tpu.pipeline_mode<synchronous>, transform_indices = @transform_7, window_bounds = array<i64: 4, 64, 512>}, {pipeline_mode = #tpu.pipeline_mode<synchronous>, transform_indices = @transform_8, window_bounds = array<i64: 1, 512>}, {pipeline_mode = #tpu.pipeline_mode<synchronous>, transform_indices = @transform_9, window_bounds = array<i64: 512, 128>}, {pipeline_mode = #tpu.pipeline_mode<synchronous>, transform_indices = @transform_10, window_bounds = array<i64: 1, 128>}, {transform_indices = @transform_11, window_bounds = array<i64: 8, 128>}]} {
    %c0 = arith.constant 0 : index
    %c0_0 = arith.constant 0 : index
    %0 = vector.load %arg3[%c0, %c0_0] : memref<1x128xf32, #tpu.memory_space<vmem>>, vector<1x128xf32>
    %1 = vector.shape_cast %0 : vector<1x128xf32> to vector<1x128xf32>
    %2 = vector.broadcast %1 : vector<1x128xf32> to vector<200x128xf32>
    %c0_1 = arith.constant 0 : index
    %c0_2 = arith.constant 0 : index
    %c0_3 = arith.constant 0 : index
    %c0_4 = arith.constant 0 : index
    %3 = vector.load %arg1[%c0_1, %c0_2, %c0_3, %c0_4] : memref<6x6x8x256xf32, #tpu.memory_space<vmem>>, vector<5x5x8x256xf32>
    %4 = vector.shape_cast %3 : vector<5x5x8x256xf32> to vector<200x256xf32>
    %c0_5 = arith.constant 0 : index
    %c0_6 = arith.constant 0 : index
    %c0_7 = arith.constant 0 : index
    %c0_8 = arith.constant 0 : index
    %5 = vector.load %arg2[%c0_5, %c0_6, %c0_7, %c0_8] : memref<2x2x256x128xf32, #tpu.memory_space<vmem>>, vector<1x1x256x128xf32>
    %6 = vector.shape_cast %5 : vector<1x1x256x128xf32> to vector<256x128xf32>
    %cst = arith.constant dense<0.000000e+00> : vector<200x128xf32>
    %7 = tpu.matmul %4, %6, %cst {dimension_numbers = #tpu.dot_dimension_numbers<[1], [0], [0], [1], [0, 0, 1, 1], [], []>} : vector<200x256xf32>, vector<256x128xf32>, vector<200x128xf32> -> vector<200x128xf32>
    %8 = arith.addf %2, %7 : vector<200x128xf32>
    %c0_9 = arith.constant 0 : index
    %c1 = arith.constant 1 : index
    %c0_10 = arith.constant 0 : index
    %c0_11 = arith.constant 0 : index
    %9 = vector.load %arg1[%c0_9, %c1, %c0_10, %c0_11] : memref<6x6x8x256xf32, #tpu.memory_space<vmem>>, vector<5x5x8x256xf32>
    %10 = vector.shape_cast %9 : vector<5x5x8x256xf32> to vector<200x256xf32>
    %c0_12 = arith.constant 0 : index
    %c1_13 = arith.constant 1 : index
    %c0_14 = arith.constant 0 : index
    %c0_15 = arith.constant 0 : index
    %11 = vector.load %arg2[%c0_12, %c1_13, %c0_14, %c0_15] : memref<2x2x256x128xf32, #tpu.memory_space<vmem>>, vector<1x1x256x128xf32>
    %12 = vector.shape_cast %11 : vector<1x1x256x128xf32> to vector<256x128xf32>
    %cst_16 = arith.constant dense<0.000000e+00> : vector<200x128xf32>
    %13 = tpu.matmul %10, %12, %cst_16 {dimension_numbers = #tpu.dot_dimension_numbers<[1], [0], [0], [1], [0, 0, 1, 1], [], []>} : vector<200x256xf32>, vector<256x128xf32>, vector<200x128xf32> -> vector<200x128xf32>
    %14 = arith.addf %8, %13 : vector<200x128xf32>
    %c1_17 = arith.constant 1 : index
    %c0_18 = arith.constant 0 : index
    %c0_19 = arith.constant 0 : index
    %c0_20 = arith.constant 0 : index
    %15 = vector.load %arg1[%c1_17, %c0_18, %c0_19, %c0_20] : memref<6x6x8x256xf32, #tpu.memory_space<vmem>>, vector<5x5x8x256xf32>
    %16 = vector.shape_cast %15 : vector<5x5x8x256xf32> to vector<200x256xf32>
    %c1_21 = arith.constant 1 : index
    %c0_22 = arith.constant 0 : index
    %c0_23 = arith.constant 0 : index
    %c0_24 = arith.constant 0 : index
    %17 = vector.load %arg2[%c1_21, %c0_22, %c0_23, %c0_24] : memref<2x2x256x128xf32, #tpu.memory_space<vmem>>, vector<1x1x256x128xf32>
    %18 = vector.shape_cast %17 : vector<1x1x256x128xf32> to vector<256x128xf32>
    %cst_25 = arith.constant dense<0.000000e+00> : vector<200x128xf32>
    %19 = tpu.matmul %16, %18, %cst_25 {dimension_numbers = #tpu.dot_dimension_numbers<[1], [0], [0], [1], [0, 0, 1, 1], [], []>} : vector<200x256xf32>, vector<256x128xf32>, vector<200x128xf32> -> vector<200x128xf32>
    %20 = arith.addf %14, %19 : vector<200x128xf32>
    %c1_26 = arith.constant 1 : index
    %c1_27 = arith.constant 1 : index
    %c0_28 = arith.constant 0 : index
    %c0_29 = arith.constant 0 : index
    %21 = vector.load %arg1[%c1_26, %c1_27, %c0_28, %c0_29] : memref<6x6x8x256xf32, #tpu.memory_space<vmem>>, vector<5x5x8x256xf32>
    %22 = vector.shape_cast %21 : vector<5x5x8x256xf32> to vector<200x256xf32>
    %c1_30 = arith.constant 1 : index
    %c1_31 = arith.constant 1 : index
    %c0_32 = arith.constant 0 : index
    %c0_33 = arith.constant 0 : index
    %23 = vector.load %arg2[%c1_30, %c1_31, %c0_32, %c0_33] : memref<2x2x256x128xf32, #tpu.memory_space<vmem>>, vector<1x1x256x128xf32>
    %24 = vector.shape_cast %23 : vector<1x1x256x128xf32> to vector<256x128xf32>
    %cst_34 = arith.constant dense<0.000000e+00> : vector<200x128xf32>
    %25 = tpu.matmul %22, %24, %cst_34 {dimension_numbers = #tpu.dot_dimension_numbers<[1], [0], [0], [1], [0, 0, 1, 1], [], []>} : vector<200x256xf32>, vector<256x128xf32>, vector<200x128xf32> -> vector<200x128xf32>
    %26 = arith.addf %20, %25 : vector<200x128xf32>
    %cst_35 = arith.constant 0.000000e+00 : f32
    %27 = vector.broadcast %cst_35 : f32 to vector<200x128xf32>
    %28 = arith.maximumf %26, %27 : vector<200x128xf32>
    %29 = vector.shape_cast %28 : vector<200x128xf32> to vector<5x5x8x128xf32>
    %c0_36 = arith.constant 0 : index
    %c0_37 = arith.constant 0 : index
    %c0_38 = arith.constant 0 : index
    %c0_39 = arith.constant 0 : index
    %30 = vector.load %arg13[%c0_36, %c0_37, %c0_38, %c0_39] : memref<5x5x8x128xf32, #tpu.memory_space<vmem>>, vector<5x5x8x128xf32>
    tpu.vector_store %arg13[%c0_36, %c0_37, %c0_38, %c0_39], %29 {strides = array<i32>} : memref<5x5x8x128xf32, #tpu.memory_space<vmem>>, vector<5x5x8x128xf32>,
    %c0_40 = arith.constant 0 : index
    %c0_41 = arith.constant 0 : index
    %31 = vector.load %arg5[%c0_40, %c0_41] : memref<1x64xf32, #tpu.memory_space<vmem>>, vector<1x64xf32>
    %32 = vector.shape_cast %31 : vector<1x64xf32> to vector<1x64xf32>
    %33 = vector.broadcast %32 : vector<1x64xf32> to vector<128x64xf32>
    %c0_42 = arith.constant 0 : index
    %c0_43 = arith.constant 0 : index
    %c0_44 = arith.constant 0 : index
    %c0_45 = arith.constant 0 : index
    %34 = vector.load %arg13[%c0_42, %c0_43, %c0_44, %c0_45] : memref<5x5x8x128xf32, #tpu.memory_space<vmem>>, vector<4x4x8x128xf32>
    %35 = vector.shape_cast %34 : vector<4x4x8x128xf32> to vector<128x128xf32>
    %c0_46 = arith.constant 0 : index
    %c0_47 = arith.constant 0 : index
    %c0_48 = arith.constant 0 : index
    %c0_49 = arith.constant 0 : index
    %36 = vector.load %arg4[%c0_46, %c0_47, %c0_48, %c0_49] : memref<2x2x128x64xf32, #tpu.memory_space<vmem>>, vector<1x1x128x64xf32>
    %37 = vector.shape_cast %36 : vector<1x1x128x64xf32> to vector<128x64xf32>
    %cst_50 = arith.constant dense<0.000000e+00> : vector<128x64xf32>
    %38 = tpu.matmul %35, %37, %cst_50 {dimension_numbers = #tpu.dot_dimension_numbers<[1], [0], [0], [1], [0, 0, 1, 1], [], []>} : vector<128x128xf32>, vector<128x64xf32>, vector<128x64xf32> -> vector<128x64xf32>
    %39 = arith.addf %33, %38 : vector<128x64xf32>
    %c0_51 = arith.constant 0 : index
    %c1_52 = arith.constant 1 : index
    %c0_53 = arith.constant 0 : index
    %c0_54 = arith.constant 0 : index
    %40 = vector.load %arg13[%c0_51, %c1_52, %c0_53, %c0_54] : memref<5x5x8x128xf32, #tpu.memory_space<vmem>>, vector<4x4x8x128xf32>
    %41 = vector.shape_cast %40 : vector<4x4x8x128xf32> to vector<128x128xf32>
    %c0_55 = arith.constant 0 : index
    %c1_56 = arith.constant 1 : index
    %c0_57 = arith.constant 0 : index
    %c0_58 = arith.constant 0 : index
    %42 = vector.load %arg4[%c0_55, %c1_56, %c0_57, %c0_58] : memref<2x2x128x64xf32, #tpu.memory_space<vmem>>, vector<1x1x128x64xf32>
    %43 = vector.shape_cast %42 : vector<1x1x128x64xf32> to vector<128x64xf32>
    %cst_59 = arith.constant dense<0.000000e+00> : vector<128x64xf32>
    %44 = tpu.matmul %41, %43, %cst_59 {dimension_numbers = #tpu.dot_dimension_numbers<[1], [0], [0], [1], [0, 0, 1, 1], [], []>} : vector<128x128xf32>, vector<128x64xf32>, vector<128x64xf32> -> vector<128x64xf32>
    %45 = arith.addf %39, %44 : vector<128x64xf32>
    %c1_60 = arith.constant 1 : index
    %c0_61 = arith.constant 0 : index
    %c0_62 = arith.constant 0 : index
    %c0_63 = arith.constant 0 : index
    %46 = vector.load %arg13[%c1_60, %c0_61, %c0_62, %c0_63] : memref<5x5x8x128xf32, #tpu.memory_space<vmem>>, vector<4x4x8x128xf32>
    %47 = vector.shape_cast %46 : vector<4x4x8x128xf32> to vector<128x128xf32>
    %c1_64 = arith.constant 1 : index
    %c0_65 = arith.constant 0 : index
    %c0_66 = arith.constant 0 : index
    %c0_67 = arith.constant 0 : index
    %48 = vector.load %arg4[%c1_64, %c0_65, %c0_66, %c0_67] : memref<2x2x128x64xf32, #tpu.memory_space<vmem>>, vector<1x1x128x64xf32>
    %49 = vector.shape_cast %48 : vector<1x1x128x64xf32> to vector<128x64xf32>
    %cst_68 = arith.constant dense<0.000000e+00> : vector<128x64xf32>
    %50 = tpu.matmul %47, %49, %cst_68 {dimension_numbers = #tpu.dot_dimension_numbers<[1], [0], [0], [1], [0, 0, 1, 1], [], []>} : vector<128x128xf32>, vector<128x64xf32>, vector<128x64xf32> -> vector<128x64xf32>
    %51 = arith.addf %45, %50 : vector<128x64xf32>
    %c1_69 = arith.constant 1 : index
    %c1_70 = arith.constant 1 : index
    %c0_71 = arith.constant 0 : index
    %c0_72 = arith.constant 0 : index
    %52 = vector.load %arg13[%c1_69, %c1_70, %c0_71, %c0_72] : memref<5x5x8x128xf32, #tpu.memory_space<vmem>>, vector<4x4x8x128xf32>
    %53 = vector.shape_cast %52 : vector<4x4x8x128xf32> to vector<128x128xf32>
    %c1_73 = arith.constant 1 : index
    %c1_74 = arith.constant 1 : index
    %c0_75 = arith.constant 0 : index
    %c0_76 = arith.constant 0 : index
    %54 = vector.load %arg4[%c1_73, %c1_74, %c0_75, %c0_76] : memref<2x2x128x64xf32, #tpu.memory_space<vmem>>, vector<1x1x128x64xf32>
    %55 = vector.shape_cast %54 : vector<1x1x128x64xf32> to vector<128x64xf32>
    %cst_77 = arith.constant dense<0.000000e+00> : vector<128x64xf32>
    %56 = tpu.matmul %53, %55, %cst_77 {dimension_numbers = #tpu.dot_dimension_numbers<[1], [0], [0], [1], [0, 0, 1, 1], [], []>} : vector<128x128xf32>, vector<128x64xf32>, vector<128x64xf32> -> vector<128x64xf32>
    %57 = arith.addf %51, %56 : vector<128x64xf32>
    %cst_78 = arith.constant 0.000000e+00 : f32
    %58 = vector.broadcast %cst_78 : f32 to vector<128x64xf32>
    %59 = arith.maximumf %57, %58 : vector<128x64xf32>
    %60 = vector.shape_cast %59 : vector<128x64xf32> to vector<4x4x8x64xf32>
    %c0_79 = arith.constant 0 : index
    %c0_80 = arith.constant 0 : index
    %c0_81 = arith.constant 0 : index
    %c0_82 = arith.constant 0 : index
    %61 = vector.load %arg14[%c0_79, %c0_80, %c0_81, %c0_82] : memref<4x4x8x64xf32, #tpu.memory_space<vmem>>, vector<4x4x8x64xf32>
    tpu.vector_store %arg14[%c0_79, %c0_80, %c0_81, %c0_82], %60 {strides = array<i32>} : memref<4x4x8x64xf32, #tpu.memory_space<vmem>>, vector<4x4x8x64xf32>,
    %c0_83 = arith.constant 0 : index
    %c0_84 = arith.constant 0 : index
    %62 = vector.load %arg7[%c0_83, %c0_84] : memref<1x64xf32, #tpu.memory_space<vmem>>, vector<1x64xf32>
    %63 = vector.shape_cast %62 : vector<1x64xf32> to vector<1x64xf32>
    %64 = vector.broadcast %63 : vector<1x64xf32> to vector<32x64xf32>
    %c0_85 = arith.constant 0 : index
    %c0_86 = arith.constant 0 : index
    %c0_87 = arith.constant 0 : index
    %c0_88 = arith.constant 0 : index
    %65 = vector.load %arg14[%c0_85, %c0_86, %c0_87, %c0_88] : memref<4x4x8x64xf32, #tpu.memory_space<vmem>>, vector<2x2x8x64xf32>
    %66 = vector.shape_cast %65 : vector<2x2x8x64xf32> to vector<32x64xf32>
    %c0_89 = arith.constant 0 : index
    %c0_90 = arith.constant 0 : index
    %c0_91 = arith.constant 0 : index
    %c0_92 = arith.constant 0 : index
    %67 = vector.load %arg6[%c0_89, %c0_90, %c0_91, %c0_92] : memref<3x3x64x64xf32, #tpu.memory_space<vmem>>, vector<1x1x64x64xf32>
    %68 = vector.shape_cast %67 : vector<1x1x64x64xf32> to vector<64x64xf32>
    %cst_93 = arith.constant dense<0.000000e+00> : vector<32x64xf32>
    %69 = tpu.matmul %66, %68, %cst_93 {dimension_numbers = #tpu.dot_dimension_numbers<[1], [0], [0], [1], [0, 0, 1, 1], [], []>} : vector<32x64xf32>, vector<64x64xf32>, vector<32x64xf32> -> vector<32x64xf32>
    %70 = arith.addf %64, %69 : vector<32x64xf32>
    %c0_94 = arith.constant 0 : index
    %c1_95 = arith.constant 1 : index
    %c0_96 = arith.constant 0 : index
    %c0_97 = arith.constant 0 : index
    %71 = vector.load %arg14[%c0_94, %c1_95, %c0_96, %c0_97] : memref<4x4x8x64xf32, #tpu.memory_space<vmem>>, vector<2x2x8x64xf32>
    %72 = vector.shape_cast %71 : vector<2x2x8x64xf32> to vector<32x64xf32>
    %c0_98 = arith.constant 0 : index
    %c1_99 = arith.constant 1 : index
    %c0_100 = arith.constant 0 : index
    %c0_101 = arith.constant 0 : index
    %73 = vector.load %arg6[%c0_98, %c1_99, %c0_100, %c0_101] : memref<3x3x64x64xf32, #tpu.memory_space<vmem>>, vector<1x1x64x64xf32>
    %74 = vector.shape_cast %73 : vector<1x1x64x64xf32> to vector<64x64xf32>
    %cst_102 = arith.constant dense<0.000000e+00> : vector<32x64xf32>
    %75 = tpu.matmul %72, %74, %cst_102 {dimension_numbers = #tpu.dot_dimension_numbers<[1], [0], [0], [1], [0, 0, 1, 1], [], []>} : vector<32x64xf32>, vector<64x64xf32>, vector<32x64xf32> -> vector<32x64xf32>
    %76 = arith.addf %70, %75 : vector<32x64xf32>
    %c0_103 = arith.constant 0 : index
    %c2 = arith.constant 2 : index
    %c0_104 = arith.constant 0 : index
    %c0_105 = arith.constant 0 : index
    %77 = vector.load %arg14[%c0_103, %c2, %c0_104, %c0_105] : memref<4x4x8x64xf32, #tpu.memory_space<vmem>>, vector<2x2x8x64xf32>
    %78 = vector.shape_cast %77 : vector<2x2x8x64xf32> to vector<32x64xf32>
    %c0_106 = arith.constant 0 : index
    %c2_107 = arith.constant 2 : index
    %c0_108 = arith.constant 0 : index
    %c0_109 = arith.constant 0 : index
    %79 = vector.load %arg6[%c0_106, %c2_107, %c0_108, %c0_109] : memref<3x3x64x64xf32, #tpu.memory_space<vmem>>, vector<1x1x64x64xf32>
    %80 = vector.shape_cast %79 : vector<1x1x64x64xf32> to vector<64x64xf32>
    %cst_110 = arith.constant dense<0.000000e+00> : vector<32x64xf32>
    %81 = tpu.matmul %78, %80, %cst_110 {dimension_numbers = #tpu.dot_dimension_numbers<[1], [0], [0], [1], [0, 0, 1, 1], [], []>} : vector<32x64xf32>, vector<64x64xf32>, vector<32x64xf32> -> vector<32x64xf32>
    %82 = arith.addf %76, %81 : vector<32x64xf32>
    %c1_111 = arith.constant 1 : index
    %c0_112 = arith.constant 0 : index
    %c0_113 = arith.constant 0 : index
    %c0_114 = arith.constant 0 : index
    %83 = vector.load %arg14[%c1_111, %c0_112, %c0_113, %c0_114] : memref<4x4x8x64xf32, #tpu.memory_space<vmem>>, vector<2x2x8x64xf32>
    %84 = vector.shape_cast %83 : vector<2x2x8x64xf32> to vector<32x64xf32>
    %c1_115 = arith.constant 1 : index
    %c0_116 = arith.constant 0 : index
    %c0_117 = arith.constant 0 : index
    %c0_118 = arith.constant 0 : index
    %85 = vector.load %arg6[%c1_115, %c0_116, %c0_117, %c0_118] : memref<3x3x64x64xf32, #tpu.memory_space<vmem>>, vector<1x1x64x64xf32>
    %86 = vector.shape_cast %85 : vector<1x1x64x64xf32> to vector<64x64xf32>
    %cst_119 = arith.constant dense<0.000000e+00> : vector<32x64xf32>
    %87 = tpu.matmul %84, %86, %cst_119 {dimension_numbers = #tpu.dot_dimension_numbers<[1], [0], [0], [1], [0, 0, 1, 1], [], []>} : vector<32x64xf32>, vector<64x64xf32>, vector<32x64xf32> -> vector<32x64xf32>
    %88 = arith.addf %82, %87 : vector<32x64xf32>
    %c1_120 = arith.constant 1 : index
    %c1_121 = arith.constant 1 : index
    %c0_122 = arith.constant 0 : index
    %c0_123 = arith.constant 0 : index
    %89 = vector.load %arg14[%c1_120, %c1_121, %c0_122, %c0_123] : memref<4x4x8x64xf32, #tpu.memory_space<vmem>>, vector<2x2x8x64xf32>
    %90 = vector.shape_cast %89 : vector<2x2x8x64xf32> to vector<32x64xf32>
    %c1_124 = arith.constant 1 : index
    %c1_125 = arith.constant 1 : index
    %c0_126 = arith.constant 0 : index
    %c0_127 = arith.constant 0 : index
    %91 = vector.load %arg6[%c1_124, %c1_125, %c0_126, %c0_127] : memref<3x3x64x64xf32, #tpu.memory_space<vmem>>, vector<1x1x64x64xf32>
    %92 = vector.shape_cast %91 : vector<1x1x64x64xf32> to vector<64x64xf32>
    %cst_128 = arith.constant dense<0.000000e+00> : vector<32x64xf32>
    %93 = tpu.matmul %90, %92, %cst_128 {dimension_numbers = #tpu.dot_dimension_numbers<[1], [0], [0], [1], [0, 0, 1, 1], [], []>} : vector<32x64xf32>, vector<64x64xf32>, vector<32x64xf32> -> vector<32x64xf32>
    %94 = arith.addf %88, %93 : vector<32x64xf32>
    %c1_129 = arith.constant 1 : index
    %c2_130 = arith.constant 2 : index
    %c0_131 = arith.constant 0 : index
    %c0_132 = arith.constant 0 : index
    %95 = vector.load %arg14[%c1_129, %c2_130, %c0_131, %c0_132] : memref<4x4x8x64xf32, #tpu.memory_space<vmem>>, vector<2x2x8x64xf32>
    %96 = vector.shape_cast %95 : vector<2x2x8x64xf32> to vector<32x64xf32>
    %c1_133 = arith.constant 1 : index
    %c2_134 = arith.constant 2 : index
    %c0_135 = arith.constant 0 : index
    %c0_136 = arith.constant 0 : index
    %97 = vector.load %arg6[%c1_133, %c2_134, %c0_135, %c0_136] : memref<3x3x64x64xf32, #tpu.memory_space<vmem>>, vector<1x1x64x64xf32>
    %98 = vector.shape_cast %97 : vector<1x1x64x64xf32> to vector<64x64xf32>
    %cst_137 = arith.constant dense<0.000000e+00> : vector<32x64xf32>
    %99 = tpu.matmul %96, %98, %cst_137 {dimension_numbers = #tpu.dot_dimension_numbers<[1], [0], [0], [1], [0, 0, 1, 1], [], []>} : vector<32x64xf32>, vector<64x64xf32>, vector<32x64xf32> -> vector<32x64xf32>
    %100 = arith.addf %94, %99 : vector<32x64xf32>
    %c2_138 = arith.constant 2 : index
    %c0_139 = arith.constant 0 : index
    %c0_140 = arith.constant 0 : index
    %c0_141 = arith.constant 0 : index
    %101 = vector.load %arg14[%c2_138, %c0_139, %c0_140, %c0_141] : memref<4x4x8x64xf32, #tpu.memory_space<vmem>>, vector<2x2x8x64xf32>
    %102 = vector.shape_cast %101 : vector<2x2x8x64xf32> to vector<32x64xf32>
    %c2_142 = arith.constant 2 : index
    %c0_143 = arith.constant 0 : index
    %c0_144 = arith.constant 0 : index
    %c0_145 = arith.constant 0 : index
    %103 = vector.load %arg6[%c2_142, %c0_143, %c0_144, %c0_145] : memref<3x3x64x64xf32, #tpu.memory_space<vmem>>, vector<1x1x64x64xf32>
    %104 = vector.shape_cast %103 : vector<1x1x64x64xf32> to vector<64x64xf32>
    %cst_146 = arith.constant dense<0.000000e+00> : vector<32x64xf32>
    %105 = tpu.matmul %102, %104, %cst_146 {dimension_numbers = #tpu.dot_dimension_numbers<[1], [0], [0], [1], [0, 0, 1, 1], [], []>} : vector<32x64xf32>, vector<64x64xf32>, vector<32x64xf32> -> vector<32x64xf32>
    %106 = arith.addf %100, %105 : vector<32x64xf32>
    %c2_147 = arith.constant 2 : index
    %c1_148 = arith.constant 1 : index
    %c0_149 = arith.constant 0 : index
    %c0_150 = arith.constant 0 : index
    %107 = vector.load %arg14[%c2_147, %c1_148, %c0_149, %c0_150] : memref<4x4x8x64xf32, #tpu.memory_space<vmem>>, vector<2x2x8x64xf32>
    %108 = vector.shape_cast %107 : vector<2x2x8x64xf32> to vector<32x64xf32>
    %c2_151 = arith.constant 2 : index
    %c1_152 = arith.constant 1 : index
    %c0_153 = arith.constant 0 : index
    %c0_154 = arith.constant 0 : index
    %109 = vector.load %arg6[%c2_151, %c1_152, %c0_153, %c0_154] : memref<3x3x64x64xf32, #tpu.memory_space<vmem>>, vector<1x1x64x64xf32>
    %110 = vector.shape_cast %109 : vector<1x1x64x64xf32> to vector<64x64xf32>
    %cst_155 = arith.constant dense<0.000000e+00> : vector<32x64xf32>
    %111 = tpu.matmul %108, %110, %cst_155 {dimension_numbers = #tpu.dot_dimension_numbers<[1], [0], [0], [1], [0, 0, 1, 1], [], []>} : vector<32x64xf32>, vector<64x64xf32>, vector<32x64xf32> -> vector<32x64xf32>
    %112 = arith.addf %106, %111 : vector<32x64xf32>
    %c2_156 = arith.constant 2 : index
    %c2_157 = arith.constant 2 : index
    %c0_158 = arith.constant 0 : index
    %c0_159 = arith.constant 0 : index
    %113 = vector.load %arg14[%c2_156, %c2_157, %c0_158, %c0_159] : memref<4x4x8x64xf32, #tpu.memory_space<vmem>>, vector<2x2x8x64xf32>
    %114 = vector.shape_cast %113 : vector<2x2x8x64xf32> to vector<32x64xf32>
    %c2_160 = arith.constant 2 : index
    %c2_161 = arith.constant 2 : index
    %c0_162 = arith.constant 0 : index
    %c0_163 = arith.constant 0 : index
    %115 = vector.load %arg6[%c2_160, %c2_161, %c0_162, %c0_163] : memref<3x3x64x64xf32, #tpu.memory_space<vmem>>, vector<1x1x64x64xf32>
    %116 = vector.shape_cast %115 : vector<1x1x64x64xf32> to vector<64x64xf32>
    %cst_164 = arith.constant dense<0.000000e+00> : vector<32x64xf32>
    %117 = tpu.matmul %114, %116, %cst_164 {dimension_numbers = #tpu.dot_dimension_numbers<[1], [0], [0], [1], [0, 0, 1, 1], [], []>} : vector<32x64xf32>, vector<64x64xf32>, vector<32x64xf32> -> vector<32x64xf32>
    %118 = arith.addf %112, %117 : vector<32x64xf32>
    %cst_165 = arith.constant 0.000000e+00 : f32
    %119 = vector.broadcast %cst_165 : f32 to vector<32x64xf32>
    %120 = arith.maximumf %118, %119 : vector<32x64xf32>
    %c0_166 = arith.constant 0 : index
    %c0_167 = arith.constant 0 : index
    %121 = vector.load %arg9[%c0_166, %c0_167] : memref<1x512xf32, #tpu.memory_space<vmem>>, vector<1x512xf32>
    %122 = vector.shape_cast %121 : vector<1x512xf32> to vector<1x512xf32>
    %123 = vector.broadcast %122 : vector<1x512xf32> to vector<8x512xf32>
    %124 = vector.extract_strided_slice %120 {offsets = [0, 0], sizes = [8, 64], strides = [1, 1]} : vector<32x64xf32> to vector<8x64xf32>
    %c0_168 = arith.constant 0 : index
    %c0_169 = arith.constant 0 : index
    %c0_170 = arith.constant 0 : index
    %125 = vector.load %arg8[%c0_168, %c0_169, %c0_170] : memref<4x64x512xf32, #tpu.memory_space<vmem>>, vector<1x64x512xf32>
    %126 = vector.shape_cast %125 : vector<1x64x512xf32> to vector<64x512xf32>
    %cst_171 = arith.constant dense<0.000000e+00> : vector<8x512xf32>
    %127 = tpu.matmul %124, %126, %cst_171 {dimension_numbers = #tpu.dot_dimension_numbers<[1], [0], [0], [1], [0, 0, 1, 1], [], []>} : vector<8x64xf32>, vector<64x512xf32>, vector<8x512xf32> -> vector<8x512xf32>
    %128 = arith.addf %123, %127 : vector<8x512xf32>
    %129 = vector.extract_strided_slice %120 {offsets = [8, 0], sizes = [8, 64], strides = [1, 1]} : vector<32x64xf32> to vector<8x64xf32>
    %c1_172 = arith.constant 1 : index
    %c0_173 = arith.constant 0 : index
    %c0_174 = arith.constant 0 : index
    %130 = vector.load %arg8[%c1_172, %c0_173, %c0_174] : memref<4x64x512xf32, #tpu.memory_space<vmem>>, vector<1x64x512xf32>
    %131 = vector.shape_cast %130 : vector<1x64x512xf32> to vector<64x512xf32>
    %cst_175 = arith.constant dense<0.000000e+00> : vector<8x512xf32>
    %132 = tpu.matmul %129, %131, %cst_175 {dimension_numbers = #tpu.dot_dimension_numbers<[1], [0], [0], [1], [0, 0, 1, 1], [], []>} : vector<8x64xf32>, vector<64x512xf32>, vector<8x512xf32> -> vector<8x512xf32>
    %133 = arith.addf %128, %132 : vector<8x512xf32>
    %134 = vector.extract_strided_slice %120 {offsets = [16, 0], sizes = [8, 64], strides = [1, 1]} : vector<32x64xf32> to vector<8x64xf32>
    %c2_176 = arith.constant 2 : index
    %c0_177 = arith.constant 0 : index
    %c0_178 = arith.constant 0 : index
    %135 = vector.load %arg8[%c2_176, %c0_177, %c0_178] : memref<4x64x512xf32, #tpu.memory_space<vmem>>, vector<1x64x512xf32>
    %136 = vector.shape_cast %135 : vector<1x64x512xf32> to vector<64x512xf32>
    %cst_179 = arith.constant dense<0.000000e+00> : vector<8x512xf32>
    %137 = tpu.matmul %134, %136, %cst_179 {dimension_numbers = #tpu.dot_dimension_numbers<[1], [0], [0], [1], [0, 0, 1, 1], [], []>} : vector<8x64xf32>, vector<64x512xf32>, vector<8x512xf32> -> vector<8x512xf32>
    %138 = arith.addf %133, %137 : vector<8x512xf32>
    %139 = vector.extract_strided_slice %120 {offsets = [24, 0], sizes = [8, 64], strides = [1, 1]} : vector<32x64xf32> to vector<8x64xf32>
    %c3 = arith.constant 3 : index
    %c0_180 = arith.constant 0 : index
    %c0_181 = arith.constant 0 : index
    %140 = vector.load %arg8[%c3, %c0_180, %c0_181] : memref<4x64x512xf32, #tpu.memory_space<vmem>>, vector<1x64x512xf32>
    %141 = vector.shape_cast %140 : vector<1x64x512xf32> to vector<64x512xf32>
    %cst_182 = arith.constant dense<0.000000e+00> : vector<8x512xf32>
    %142 = tpu.matmul %139, %141, %cst_182 {dimension_numbers = #tpu.dot_dimension_numbers<[1], [0], [0], [1], [0, 0, 1, 1], [], []>} : vector<8x64xf32>, vector<64x512xf32>, vector<8x512xf32> -> vector<8x512xf32>
    %143 = arith.addf %138, %142 : vector<8x512xf32>
    %cst_183 = arith.constant 0.000000e+00 : f32
    %144 = vector.broadcast %cst_183 : f32 to vector<8x512xf32>
    %145 = arith.maximumf %143, %144 : vector<8x512xf32>
    %c0_184 = arith.constant 0 : index
    %c0_185 = arith.constant 0 : index
    %146 = vector.load %arg10[%c0_184, %c0_185] : memref<512x128xf32, #tpu.memory_space<vmem>>, vector<512x128xf32>
    %cst_186 = arith.constant dense<0.000000e+00> : vector<8x128xf32>
    %147 = tpu.matmul %145, %146, %cst_186 {dimension_numbers = #tpu.dot_dimension_numbers<[1], [0], [0], [1], [0, 0, 1, 1], [], []>} : vector<8x512xf32>, vector<512x128xf32>, vector<8x128xf32> -> vector<8x128xf32>
    %c0_187 = arith.constant 0 : index
    %c0_188 = arith.constant 0 : index
    %148 = vector.load %arg11[%c0_187, %c0_188] : memref<1x128xf32, #tpu.memory_space<vmem>>, vector<1x128xf32>
    %149 = vector.broadcast %148 : vector<1x128xf32> to vector<8x128xf32>
    %150 = arith.addf %147, %149 : vector<8x128xf32>
    %c0_189 = arith.constant 0 : index
    %c0_190 = arith.constant 0 : index
    %151 = vector.load %arg12[%c0_189, %c0_190] : memref<8x128xf32, #tpu.memory_space<vmem>>, vector<8x128xf32>
    tpu.vector_store %arg12[%c0_189, %c0_190], %150 {strides = array<i32>} : memref<8x128xf32, #tpu.memory_space<vmem>>, vector<8x128xf32>,
    return
  }
  func.func @transform_0(%arg0: i32) -> (i32, i32, i32, i32) {
    %c0_i32 = arith.constant 0 : i32
    %c0_i32_0 = arith.constant 0 : i32
    %c0_i32_1 = arith.constant 0 : i32
    %c0_i32_2 = arith.constant 0 : i32
    return %c0_i32, %c0_i32_0, %arg0, %c0_i32_1 : i32, i32, i32, i32
  }
  func.func @transform_1(%arg0: i32) -> (i32, i32, i32, i32) {
    %c0_i32 = arith.constant 0 : i32
    %c0_i32_0 = arith.constant 0 : i32
    %c0_i32_1 = arith.constant 0 : i32
    %c0_i32_2 = arith.constant 0 : i32
    %c0_i32_3 = arith.constant 0 : i32
    return %c0_i32, %c0_i32_0, %c0_i32_1, %c0_i32_2 : i32, i32, i32, i32
  }
  func.func @transform_2(%arg0: i32) -> (i32, i32) {
    %c0_i32 = arith.constant 0 : i32
    %c0_i32_0 = arith.constant 0 : i32
    %c0_i32_1 = arith.constant 0 : i32
    return %c0_i32, %c0_i32_0 : i32, i32
  }
  func.func @transform_3(%arg0: i32) -> (i32, i32, i32, i32) {
    %c0_i32 = arith.constant 0 : i32
    %c0_i32_0 = arith.constant 0 : i32
    %c0_i32_1 = arith.constant 0 : i32
    %c0_i32_2 = arith.constant 0 : i32
    %c0_i32_3 = arith.constant 0 : i32
    return %c0_i32, %c0_i32_0, %c0_i32_1, %c0_i32_2 : i32, i32, i32, i32
  }
  func.func @transform_4(%arg0: i32) -> (i32, i32) {
    %c0_i32 = arith.constant 0 : i32
    %c0_i32_0 = arith.constant 0 : i32
    %c0_i32_1 = arith.constant 0 : i32
    return %c0_i32, %c0_i32_0 : i32, i32
  }
  func.func @transform_5(%arg0: i32) -> (i32, i32, i32, i32) {
    %c0_i32 = arith.constant 0 : i32
    %c0_i32_0 = arith.constant 0 : i32
    %c0_i32_1 = arith.constant 0 : i32
    %c0_i32_2 = arith.constant 0 : i32
    %c0_i32_3 = arith.constant 0 : i32
    return %c0_i32, %c0_i32_0, %c0_i32_1, %c0_i32_2 : i32, i32, i32, i32
  }
  func.func @transform_6(%arg0: i32) -> (i32, i32) {
    %c0_i32 = arith.constant 0 : i32
    %c0_i32_0 = arith.constant 0 : i32
    %c0_i32_1 = arith.constant 0 : i32
    return %c0_i32, %c0_i32_0 : i32, i32
  }
  func.func @transform_7(%arg0: i32) -> (i32, i32, i32) {
    %c0_i32 = arith.constant 0 : i32
    %c0_i32_0 = arith.constant 0 : i32
    %c0_i32_1 = arith.constant 0 : i32
    %c0_i32_2 = arith.constant 0 : i32
    return %c0_i32, %c0_i32_0, %c0_i32_1 : i32, i32, i32
  }
  func.func @transform_8(%arg0: i32) -> (i32, i32) {
    %c0_i32 = arith.constant 0 : i32
    %c0_i32_0 = arith.constant 0 : i32
    %c0_i32_1 = arith.constant 0 : i32
    return %c0_i32, %c0_i32_0 : i32, i32
  }
  func.func @transform_9(%arg0: i32) -> (i32, i32) {
    %c0_i32 = arith.constant 0 : i32
    %c0_i32_0 = arith.constant 0 : i32
    %c0_i32_1 = arith.constant 0 : i32
    return %c0_i32, %c0_i32_0 : i32, i32
  }
  func.func @transform_10(%arg0: i32) -> (i32, i32) {
    %c0_i32 = arith.constant 0 : i32
    %c0_i32_0 = arith.constant 0 : i32
    %c0_i32_1 = arith.constant 0 : i32
    return %c0_i32, %c0_i32_0 : i32, i32
  }
  func.func @transform_11(%arg0: i32) -> (i32, i32) {
    %c0_i32 = arith.constant 0 : i32
    %c0_i32_0 = arith.constant 0 : i32
    return %arg0, %c0_i32 : i32, i32
  }
}

</mosaic_0001>

<llo_original>
// kernel: cnn_dqn_forward.1
$region0: #{cnn_dqn_forward.1}
  #allocation0 [shape = 'u32[]', space=smem, size = 0x4, offset = 0x4, fixed_abs, tag = 'smem constant byte address 0x4 - core index']
  #allocation1 [shape = 'u32[72,128]{1,0:T(1,128)}', space=vmem, size = 0x9000, scoped, tag = 'internal scratch']
  #allocation2 [shape = 'f32[5,5,8,128]{3,2,1,0:T(8,128)}', space=vmem, size = 0x19000, scoped, tag = 'scratch operand']
  #allocation3 [shape = 'f32[4,4,8,64]{3,2,1,0:T(8,128)}', space=vmem, size = 0x10000, scoped, tag = 'scratch operand']
  %s0 = inlined_call_operand.vmem [shape: f32[6,6,8,256], index: 0, kind: input, shape index: {}]
  %s1 = inlined_call_operand.vmem [shape: f32[2,2,256,128], index: 1, kind: input, shape index: {}]
  %s2 = inlined_call_operand.vmem [shape: f32[1,128], index: 2, kind: input, shape index: {}]
  %s3 = inlined_call_operand.vmem [shape: f32[2,2,128,64], index: 3, kind: input, shape index: {}]
  %s4 = inlined_call_operand.vmem [shape: f32[1,64], index: 4, kind: input, shape index: {}]
  %s5 = inlined_call_operand.vmem [shape: f32[3,3,64,64], index: 5, kind: input, shape index: {}]
  %s6 = inlined_call_operand.vmem [shape: f32[1,64], index: 6, kind: input, shape index: {}]
  %s7 = inlined_call_operand.vmem [shape: f32[4,64,512], index: 7, kind: input, shape index: {}]
  %s8 = inlined_call_operand.vmem [shape: f32[1,512], index: 8, kind: input, shape index: {}]
  %s9 = inlined_call_operand.vmem [shape: f32[512,128], index: 9, kind: input, shape index: {}]
  %s10 = inlined_call_operand.vmem [shape: f32[1,128], index: 10, kind: input, shape index: {}]
  %s11 = inlined_call_operand.vmem [shape: f32[8,128], index: 11, kind: output, shape index: {}]
  %s12 = sld [smem:[#allocation0]]
  $region54: #{cnn_dqn_forward.1} parent=0
    _
  %s14 = ssub.s32 1, %s12
  %s15 = scalar_select 0, %s14, %s12
  // Predicated region
  $region2: #{cnn_dqn_forward.1} parent=0 // pred_check
    _
  $region3: #{cnn_dqn_forward.1} parent=0 // pred_check_branch
    %17 = sbr.rel (0) target = $region5
  $region4: #{cnn_dqn_forward.1} parent=0 // pred_region
    _
  $region5: #{cnn_dqn_forward.1} parent=0 // pred_fallthru
    _
  // Predicated region
  $region6: #{cnn_dqn_forward.1} parent=0 // pred_check
    _
  $region7: #{cnn_dqn_forward.1} parent=0 // pred_check_branch
    %19 = sbr.rel (0) target = $region9
  $region8: #{cnn_dqn_forward.1} parent=0 // pred_region
    _
  $region9: #{cnn_dqn_forward.1} parent=0 // pred_fallthru
    _
  // Predicated region
  $region10: #{cnn_dqn_forward.1} parent=0 // pred_check
    _
  $region11: #{cnn_dqn_forward.1} parent=0 // pred_check_branch
    %21 = sbr.rel (0) target = $region13
  $region12: #{cnn_dqn_forward.1} parent=0 // pred_region
    _
  $region13: #{cnn_dqn_forward.1} parent=0 // pred_fallthru
    _
  // Predicated region
  $region14: #{cnn_dqn_forward.1} parent=0 // pred_check
    _
  $region15: #{cnn_dqn_forward.1} parent=0 // pred_check_branch
    %23 = sbr.rel (0) target = $region17
  $region16: #{cnn_dqn_forward.1} parent=0 // pred_region
    _
  $region17: #{cnn_dqn_forward.1} parent=0 // pred_fallthru
    _
  // Predicated region
  $region18: #{cnn_dqn_forward.1} parent=0 // pred_check
    _
  $region19: #{cnn_dqn_forward.1} parent=0 // pred_check_branch
    %25 = sbr.rel (0) target = $region21
  $region20: #{cnn_dqn_forward.1} parent=0 // pred_region
    _
  $region21: #{cnn_dqn_forward.1} parent=0 // pred_fallthru
    _
  // Predicated region
  $region22: #{cnn_dqn_forward.1} parent=0 // pred_check
    _
  $region23: #{cnn_dqn_forward.1} parent=0 // pred_check_branch
    %27 = sbr.rel (0) target = $region25
  $region24: #{cnn_dqn_forward.1} parent=0 // pred_region
    _
  $region25: #{cnn_dqn_forward.1} parent=0 // pred_fallthru
    _
  // Predicated region
  $region26: #{cnn_dqn_forward.1} parent=0 // pred_check
    _
  $region27: #{cnn_dqn_forward.1} parent=0 // pred_check_branch
    %29 = sbr.rel (0) target = $region29
  $region28: #{cnn_dqn_forward.1} parent=0 // pred_region
    _
  $region29: #{cnn_dqn_forward.1} parent=0 // pred_fallthru
    _
  // Predicated region
  $region30: #{cnn_dqn_forward.1} parent=0 // pred_check
    _
  $region31: #{cnn_dqn_forward.1} parent=0 // pred_check_branch
    %31 = sbr.rel (0) target = $region33
  $region32: #{cnn_dqn_forward.1} parent=0 // pred_region
    _
  $region33: #{cnn_dqn_forward.1} parent=0 // pred_fallthru
    _
  // Predicated region
  $region34: #{cnn_dqn_forward.1} parent=0 // pred_check
    _
  $region35: #{cnn_dqn_forward.1} parent=0 // pred_check_branch
    %33 = sbr.rel (0) target = $region37
  $region36: #{cnn_dqn_forward.1} parent=0 // pred_region
    _
  $region37: #{cnn_dqn_forward.1} parent=0 // pred_fallthru
    _
  // Predicated region
  $region38: #{cnn_dqn_forward.1} parent=0 // pred_check
    _
  $region39: #{cnn_dqn_forward.1} parent=0 // pred_check_branch
    %35 = sbr.rel (0) target = $region41
  $region40: #{cnn_dqn_forward.1} parent=0 // pred_region
    _
  $region41: #{cnn_dqn_forward.1} parent=0 // pred_fallthru
    _
  // Predicated region
  $region42: #{cnn_dqn_forward.1} parent=0 // pred_check
    _
  $region43: #{cnn_dqn_forward.1} parent=0 // pred_check_branch
    %37 = sbr.rel (0) target = $region45
  $region44: #{cnn_dqn_forward.1} parent=0 // pred_region
    _
  $region45: #{cnn_dqn_forward.1} parent=0 // pred_fallthru
    _
  %v38 = vld [vmem:[%s2] sm:$0x1]
  %v40 = vperm.slane %v38, 0
  %v42 = vld [vmem:[%s0] sm:$0xff]
  %v43 = vld [vmem:[%s0 + $0x8] sm:$0xff]
  %v44 = vld [vmem:[%s0 + $0x10] sm:$0xff]
  %v45 = vld [vmem:[%s0 + $0x18] sm:$0xff]
  %v46 = vld [vmem:[%s0 + $0x20] sm:$0xff]
  %v47 = vld [vmem:[%s0 + $0x28] sm:$0xff]
  %v48 = vld [vmem:[%s0 + $0x30] sm:$0xff]
  %v49 = vld [vmem:[%s0 + $0x38] sm:$0xff]
  %v50 = vld [vmem:[%s0 + $0x40] sm:$0xff]
  %v51 = vld [vmem:[%s0 + $0x48] sm:$0xff]
  %v52 = vld [vmem:[%s0 + $0x60] sm:$0xff]
  %v53 = vld [vmem:[%s0 + $0x68] sm:$0xff]
  %v54 = vld [vmem:[%s0 + $0x70] sm:$0xff]
  %v55 = vld [vmem:[%s0 + $0x78] sm:$0xff]
  %v56 = vld [vmem:[%s0 + $0x80] sm:$0xff]
  %v57 = vld [vmem:[%s0 + $0x88] sm:$0xff]
  %v58 = vld [vmem:[%s0 + $0x90] sm:$0xff]
  %v59 = vld [vmem:[%s0 + $0x98] sm:$0xff]
  %v60 = vld [vmem:[%s0 + $0xa0] sm:$0xff]
  %v61 = vld [vmem:[%s0 + $0xa8] sm:$0xff]
  %v62 = vld [vmem:[%s0 + $0xc0] sm:$0xff]
  %v63 = vld [vmem:[%s0 + $0xc8] sm:$0xff]
  %v64 = vld [vmem:[%s0 + $0xd0] sm:$0xff]
  %v65 = vld [vmem:[%s0 + $0xd8] sm:$0xff]
  %v66 = vld [vmem:[%s0 + $0xe0] sm:$0xff]
  %v67 = vld [vmem:[%s0 + $0xe8] sm:$0xff]
  %v68 = vld [vmem:[%s0 + $0xf0] sm:$0xff]
  %v69 = vld [vmem:[%s0 + $0xf8] sm:$0xff]
  %v70 = vld [vmem:[%s0 + $0x100] sm:$0xff]
  %v71 = vld [vmem:[%s0 + $0x108] sm:$0xff]
  %v72 = vld [vmem:[%s0 + $0x120] sm:$0xff]
  %v73 = vld [vmem:[%s0 + $0x128] sm:$0xff]
  %v74 = vld [vmem:[%s0 + $0x130] sm:$0xff]
  %v75 = vld [vmem:[%s0 + $0x138] sm:$0xff]
  %v76 = vld [vmem:[%s0 + $0x140] sm:$0xff]
  %v77 = vld [vmem:[%s0 + $0x148] sm:$0xff]
  %v78 = vld [vmem:[%s0 + $0x150] sm:$0xff]
  %v79 = vld [vmem:[%s0 + $0x158] sm:$0xff]
  %v80 = vld [vmem:[%s0 + $0x160] sm:$0xff]
  %v81 = vld [vmem:[%s0 + $0x168] sm:$0xff]
  %v82 = vld [vmem:[%s0 + $0x180] sm:$0xff]
  %v83 = vld [vmem:[%s0 + $0x188] sm:$0xff]
  %v84 = vld [vmem:[%s0 + $0x190] sm:$0xff]
  %v85 = vld [vmem:[%s0 + $0x198] sm:$0xff]
  %v86 = vld [vmem:[%s0 + $0x1a0] sm:$0xff]
  %v87 = vld [vmem:[%s0 + $0x1a8] sm:$0xff]
  %v88 = vld [vmem:[%s0 + $0x1b0] sm:$0xff]
  %v89 = vld [vmem:[%s0 + $0x1b8] sm:$0xff]
  %v90 = vld [vmem:[%s0 + $0x1c0] sm:$0xff]
  %v91 = vld [vmem:[%s0 + $0x1c8] sm:$0xff]
  %v92 = vld [vmem:[%s1] sm:$0xff]
  %v93 = vld [vmem:[%s1 + $0x8] sm:$0xff]
  %v94 = vld [vmem:[%s1 + $0x10] sm:$0xff]
  %v95 = vld [vmem:[%s1 + $0x18] sm:$0xff]
  %v96 = vld [vmem:[%s1 + $0x20] sm:$0xff]
  %v97 = vld [vmem:[%s1 + $0x28] sm:$0xff]
  %v98 = vld [vmem:[%s1 + $0x30] sm:$0xff]
  %v99 = vld [vmem:[%s1 + $0x38] sm:$0xff]
  %v100 = vld [vmem:[%s1 + $0x40] sm:$0xff]
  %v101 = vld [vmem:[%s1 + $0x48] sm:$0xff]
  %v102 = vld [vmem:[%s1 + $0x50] sm:$0xff]
  %v103 = vld [vmem:[%s1 + $0x58] sm:$0xff]
  %v104 = vld [vmem:[%s1 + $0x60] sm:$0xff]
  %v105 = vld [vmem:[%s1 + $0x68] sm:$0xff]
  %v106 = vld [vmem:[%s1 + $0x70] sm:$0xff]
  %v107 = vld [vmem:[%s1 + $0x78] sm:$0xff]
  %v108 = vld [vmem:[%s1 + $0x80] sm:$0xff]
  %v109 = vld [vmem:[%s1 + $0x88] sm:$0xff]
  %v110 = vld [vmem:[%s1 + $0x90] sm:$0xff]
  %v111 = vld [vmem:[%s1 + $0x98] sm:$0xff]
  %v112 = vld [vmem:[%s1 + $0xa0] sm:$0xff]
  %v113 = vld [vmem:[%s1 + $0xa8] sm:$0xff]
  %v114 = vld [vmem:[%s1 + $0xb0] sm:$0xff]
  %v115 = vld [vmem:[%s1 + $0xb8] sm:$0xff]
  %v116 = vld [vmem:[%s1 + $0xc0] sm:$0xff]
  %v117 = vld [vmem:[%s1 + $0xc8] sm:$0xff]
  %v118 = vld [vmem:[%s1 + $0xd0] sm:$0xff]
  %v119 = vld [vmem:[%s1 + $0xd8] sm:$0xff]
  %v120 = vld [vmem:[%s1 + $0xe0] sm:$0xff]
  %v121 = vld [vmem:[%s1 + $0xe8] sm:$0xff]
  %v122 = vld [vmem:[%s1 + $0xf0] sm:$0xff]
  %v123 = vld [vmem:[%s1 + $0xf8] sm:$0xff]
  %124 = vmatpush.msra.mxu0 %v107
  %125 = vmatpush.msra.mxu0 %v106
  %126 = vmatpush.msra.mxu0 %v105
  %127 = vmatpush.msra.mxu0 %v104
  %128 = vmatpush.msra.mxu0 %v103
  %129 = vmatpush.msra.mxu0 %v102
  %130 = vmatpush.msra.mxu0 %v101
  %131 = vmatpush.msra.mxu0 %v100
  %132 = vmatpush.msra.mxu0 %v99
  %133 = vmatpush.msra.mxu0 %v98
  %134 = vmatpush.msra.mxu0 %v97
  %135 = vmatpush.msra.mxu0 %v96
  %136 = vmatpush.msra.mxu0 %v95
  %137 = vmatpush.msra.mxu0 %v94
  %138 = vmatpush.msra.mxu0 %v93
  %139 = vmatpush.msra.mxu0 %v92
  %140 = vmatmul.f32.gmra.mxu0 %v42
  %v141 = vpop.f32.mrf.mxu0
  %v142 = vadd.f32 0.0, %v141
  %143 = vmatmul.f32.gmra.mxu0 %v44
  %v144 = vpop.f32.mrf.mxu0
  %v145 = vadd.f32 0.0, %v144
  %146 = vmatmul.f32.gmra.mxu0 %v46
  %v147 = vpop.f32.mrf.mxu0
  %v148 = vadd.f32 0.0, %v147
  %149 = vmatmul.f32.gmra.mxu0 %v48
  %v150 = vpop.f32.mrf.mxu0
  %v151 = vadd.f32 0.0, %v150
  %152 = vmatmul.f32.gmra.mxu0 %v50
  %v153 = vpop.f32.mrf.mxu0
  %v154 = vadd.f32 0.0, %v153
  %155 = vmatmul.f32.gmra.mxu0 %v52
  %v156 = vpop.f32.mrf.mxu0
  %v157 = vadd.f32 0.0, %v156
  %158 = vmatmul.f32.gmra.mxu0 %v54
  %v159 = vpop.f32.mrf.mxu0
  %v160 = vadd.f32 0.0, %v159
  %161 = vmatmul.f32.gmra.mxu0 %v56
  %v162 = vpop.f32.mrf.mxu0
  %v163 = vadd.f32 0.0, %v162
  %164 = vmatmul.f32.gmra.mxu0 %v58
  %v165 = vpop.f32.mrf.mxu0
  %v166 = vadd.f32 0.0, %v165
  %167 = vmatmul.f32.gmra.mxu0 %v60
  %v168 = vpop.f32.mrf.mxu0
  %v169 = vadd.f32 0.0, %v168
  %170 = vmatmul.f32.gmra.mxu0 %v62
  %v171 = vpop.f32.mrf.mxu0
  %v172 = vadd.f32 0.0, %v171
  %173 = vmatmul.f32.gmra.mxu0 %v64
  %v174 = vpop.f32.mrf.mxu0
  %v175 = vadd.f32 0.0, %v174
  %176 = vmatmul.f32.gmra.mxu0 %v66
  %v177 = vpop.f32.mrf.mxu0
  %v178 = vadd.f32 0.0, %v177
  %179 = vmatmul.f32.gmra.mxu0 %v68
  %v180 = vpop.f32.mrf.mxu0
  %v181 = vadd.f32 0.0, %v180
  %182 = vmatmul.f32.gmra.mxu0 %v70
  %v183 = vpop.f32.mrf.mxu0
  %v184 = vadd.f32 0.0, %v183
  %185 = vmatmul.f32.gmra.mxu0 %v72
  %v186 = vpop.f32.mrf.mxu0
  %v187 = vadd.f32 0.0, %v186
  %188 = vmatmul.f32.gmra.mxu0 %v74
  %v189 = vpop.f32.mrf.mxu0
  %v190 = vadd.f32 0.0, %v189
  %191 = vmatmul.f32.gmra.mxu0 %v76
  %v192 = vpop.f32.mrf.mxu0
  %v193 = vadd.f32 0.0, %v192
  %194 = vmatmul.f32.gmra.mxu0 %v78
  %v195 = vpop.f32.mrf.mxu0
  %v196 = vadd.f32 0.0, %v195
  %197 = vmatmul.f32.gmra.mxu0 %v80
  %v198 = vpop.f32.mrf.mxu0
  %v199 = vadd.f32 0.0, %v198
  %200 = vmatmul.f32.gmra.mxu0 %v82
  %v201 = vpop.f32.mrf.mxu0
  %v202 = vadd.f32 0.0, %v201
  %203 = vmatmul.f32.gmra.mxu0 %v84
  %v204 = vpop.f32.mrf.mxu0
  %v205 = vadd.f32 0.0, %v204
  %206 = vmatmul.f32.gmra.mxu0 %v86
  %v207 = vpop.f32.mrf.mxu0
  %v208 = vadd.f32 0.0, %v207
  %209 = vmatmul.f32.gmra.mxu0 %v88
  %v210 = vpop.f32.mrf.mxu0
  %v211 = vadd.f32 0.0, %v210
  %212 = vmatmul.f32.gmra.mxu0 %v90
  %v213 = vpop.f32.mrf.mxu0
  %v214 = vadd.f32 0.0, %v213
  %215 = vdwg.mxu0
  %216 = vmatpush.msra.mxu0 %v123
  %217 = vmatpush.msra.mxu0 %v122
  %218 = vmatpush.msra.mxu0 %v121
  %219 = vmatpush.msra.mxu0 %v120
  %220 = vmatpush.msra.mxu0 %v119
  %221 = vmatpush.msra.mxu0 %v118
  %222 = vmatpush.msra.mxu0 %v117
  %223 = vmatpush.msra.mxu0 %v116
  %224 = vmatpush.msra.mxu0 %v115
  %225 = vmatpush.msra.mxu0 %v114
  %226 = vmatpush.msra.mxu0 %v113
  %227 = vmatpush.msra.mxu0 %v112
  %228 = vmatpush.msra.mxu0 %v111
  %229 = vmatpush.msra.mxu0 %v110
  %230 = vmatpush.msra.mxu0 %v109
  %231 = vmatpush.msra.mxu0 %v108
  %232 = vmatmul.f32.gmra.mxu0 %v43
  %v233 = vpop.f32.mrf.mxu0
  %v234 = vadd.f32 %v142, %v233
  %235 = vmatmul.f32.gmra.mxu0 %v45
  %v236 = vpop.f32.mrf.mxu0
  %v237 = vadd.f32 %v145, %v236
  %238 = vmatmul.f32.gmra.mxu0 %v47
  %v239 = vpop.f32.mrf.mxu0
  %v240 = vadd.f32 %v148, %v239
  %241 = vmatmul.f32.gmra.mxu0 %v49
  %v242 = vpop.f32.mrf.mxu0
  %v243 = vadd.f32 %v151, %v242
  %244 = vmatmul.f32.gmra.mxu0 %v51
  %v245 = vpop.f32.mrf.mxu0
  %v246 = vadd.f32 %v154, %v245
  %247 = vmatmul.f32.gmra.mxu0 %v53
  %v248 = vpop.f32.mrf.mxu0
  %v249 = vadd.f32 %v157, %v248
  %250 = vmatmul.f32.gmra.mxu0 %v55
  %v251 = vpop.f32.mrf.mxu0
  %v252 = vadd.f32 %v160, %v251
  %253 = vmatmul.f32.gmra.mxu0 %v57
  %v254 = vpop.f32.mrf.mxu0
  %v255 = vadd.f32 %v163, %v254
  %256 = vmatmul.f32.gmra.mxu0 %v59
  %v257 = vpop.f32.mrf.mxu0
  %v258 = vadd.f32 %v166, %v257
  %259 = vmatmul.f32.gmra.mxu0 %v61
  %v260 = vpop.f32.mrf.mxu0
  %v261 = vadd.f32 %v169, %v260
  %262 = vmatmul.f32.gmra.mxu0 %v63
  %v263 = vpop.f32.mrf.mxu0
  %v264 = vadd.f32 %v172, %v263
  %265 = vmatmul.f32.gmra.mxu0 %v65
  %v266 = vpop.f32.mrf.mxu0
  %v267 = vadd.f32 %v175, %v266
  %268 = vmatmul.f32.gmra.mxu0 %v67
  %v269 = vpop.f32.mrf.mxu0
  %v270 = vadd.f32 %v178, %v269
  %271 = vmatmul.f32.gmra.mxu0 %v69
  %v272 = vpop.f32.mrf.mxu0
  %v273 = vadd.f32 %v181, %v272
  %274 = vmatmul.f32.gmra.mxu0 %v71
  %v275 = vpop.f32.mrf.mxu0
  %v276 = vadd.f32 %v184, %v275
  %277 = vmatmul.f32.gmra.mxu0 %v73
  %v278 = vpop.f32.mrf.mxu0
  %v279 = vadd.f32 %v187, %v278
  %280 = vmatmul.f32.gmra.mxu0 %v75
  %v281 = vpop.f32.mrf.mxu0
  %v282 = vadd.f32 %v190, %v281
  %283 = vmatmul.f32.gmra.mxu0 %v77
  %v284 = vpop.f32.mrf.mxu0
  %v285 = vadd.f32 %v193, %v284
  %286 = vmatmul.f32.gmra.mxu0 %v79
  %v287 = vpop.f32.mrf.mxu0
  %v288 = vadd.f32 %v196, %v287
  %289 = vmatmul.f32.gmra.mxu0 %v81
  %v290 = vpop.f32.mrf.mxu0
  %v291 = vadd.f32 %v199, %v290
  %292 = vmatmul.f32.gmra.mxu0 %v83
  %v293 = vpop.f32.mrf.mxu0
  %v294 = vadd.f32 %v202, %v293
  %295 = vmatmul.f32.gmra.mxu0 %v85
  %v296 = vpop.f32.mrf.mxu0
  %v297 = vadd.f32 %v205, %v296
  %298 = vmatmul.f32.gmra.mxu0 %v87
  %v299 = vpop.f32.mrf.mxu0
  %v300 = vadd.f32 %v208, %v299
  %301 = vmatmul.f32.gmra.mxu0 %v89
  %v302 = vpop.f32.mrf.mxu0
  %v303 = vadd.f32 %v211, %v302
  %304 = vmatmul.f32.gmra.mxu0 %v91
  %v305 = vpop.f32.mrf.mxu0
  %v306 = vadd.f32 %v214, %v305
  %307 = vdwg.mxu0
  %v308 = vadd.f32 %v40, %v234
  %v309 = vadd.f32 %v40, %v237
  %v310 = vadd.f32 %v40, %v240
  %v311 = vadd.f32 %v40, %v243
  %v312 = vadd.f32 %v40, %v246
  %v313 = vadd.f32 %v40, %v249
  %v314 = vadd.f32 %v40, %v252
  %v315 = vadd.f32 %v40, %v255
  %v316 = vadd.f32 %v40, %v258
  %v317 = vadd.f32 %v40, %v261
  %v318 = vadd.f32 %v40, %v264
  %v319 = vadd.f32 %v40, %v267
  %v320 = vadd.f32 %v40, %v270
  %v321 = vadd.f32 %v40, %v273
  %v322 = vadd.f32 %v40, %v276
  %v323 = vadd.f32 %v40, %v279
  %v324 = vadd.f32 %v40, %v282
  %v325 = vadd.f32 %v40, %v285
  %v326 = vadd.f32 %v40, %v288
  %v327 = vadd.f32 %v40, %v291
  %v328 = vadd.f32 %v40, %v294
  %v329 = vadd.f32 %v40, %v297
  %v330 = vadd.f32 %v40, %v300
  %v331 = vadd.f32 %v40, %v303
  %v332 = vadd.f32 %v40, %v306
  %s333 = scalar_lea.vmem %s0, 16
  %v334 = vld [vmem:[%s333] sm:$0xff]
  %v335 = vld [vmem:[%s333 + $0x8] sm:$0xff]
  %v336 = vld [vmem:[%s333 + $0x10] sm:$0xff]
  %v337 = vld [vmem:[%s333 + $0x18] sm:$0xff]
  %v338 = vld [vmem:[%s333 + $0x20] sm:$0xff]
  %v339 = vld [vmem:[%s333 + $0x28] sm:$0xff]
  %v340 = vld [vmem:[%s333 + $0x30] sm:$0xff]
  %v341 = vld [vmem:[%s333 + $0x38] sm:$0xff]
  %v342 = vld [vmem:[%s333 + $0x40] sm:$0xff]
  %v343 = vld [vmem:[%s333 + $0x48] sm:$0xff]
  %v344 = vld [vmem:[%s333 + $0x60] sm:$0xff]
  %v345 = vld [vmem:[%s333 + $0x68] sm:$0xff]
  %v346 = vld [vmem:[%s333 + $0x70] sm:$0xff]
  %v347 = vld [vmem:[%s333 + $0x78] sm:$0xff]
  %v348 = vld [vmem:[%s333 + $0x80] sm:$0xff]
  %v349 = vld [vmem:[%s333 + $0x88] sm:$0xff]
  %v350 = vld [vmem:[%s333 + $0x90] sm:$0xff]
  %v351 = vld [vmem:[%s333 + $0x98] sm:$0xff]
  %v352 = vld [vmem:[%s333 + $0xa0] sm:$0xff]
  %v353 = vld [vmem:[%s333 + $0xa8] sm:$0xff]
  %v354 = vld [vmem:[%s333 + $0xc0] sm:$0xff]
  %v355 = vld [vmem:[%s333 + $0xc8] sm:$0xff]
  %v356 = vld [vmem:[%s333 + $0xd0] sm:$0xff]
  %v357 = vld [vmem:[%s333 + $0xd8] sm:$0xff]
  %v358 = vld [vmem:[%s333 + $0xe0] sm:$0xff]
  %v359 = vld [vmem:[%s333 + $0xe8] sm:$0xff]
  %v360 = vld [vmem:[%s333 + $0xf0] sm:$0xff]
  %v361 = vld [vmem:[%s333 + $0xf8] sm:$0xff]
  %v362 = vld [vmem:[%s333 + $0x100] sm:$0xff]
  %v363 = vld [vmem:[%s333 + $0x108] sm:$0xff]
  %v364 = vld [vmem:[%s333 + $0x120] sm:$0xff]
  %v365 = vld [vmem:[%s333 + $0x128] sm:$0xff]
  %v366 = vld [vmem:[%s333 + $0x130] sm:$0xff]
  %v367 = vld [vmem:[%s333 + $0x138] sm:$0xff]
  %v368 = vld [vmem:[%s333 + $0x140] sm:$0xff]
  %v369 = vld [vmem:[%s333 + $0x148] sm:$0xff]
  %v370 = vld [vmem:[%s333 + $0x150] sm:$0xff]
  %v371 = vld [vmem:[%s333 + $0x158] sm:$0xff]
  %v372 = vld [vmem:[%s333 + $0x160] sm:$0xff]
  %v373 = vld [vmem:[%s333 + $0x168] sm:$0xff]
  %v374 = vld [vmem:[%s333 + $0x180] sm:$0xff]
  %v375 = vld [vmem:[%s333 + $0x188] sm:$0xff]
  %v376 = vld [vmem:[%s333 + $0x190] sm:$0xff]
  %v377 = vld [vmem:[%s333 + $0x198] sm:$0xff]
  %v378 = vld [vmem:[%s333 + $0x1a0] sm:$0xff]
  %v379 = vld [vmem:[%s333 + $0x1a8] sm:$0xff]
  %v380 = vld [vmem:[%s333 + $0x1b0] sm:$0xff]
  %v381 = vld [vmem:[%s333 + $0x1b8] sm:$0xff]
  %v382 = vld [vmem:[%s333 + $0x1c0] sm:$0xff]
  %v383 = vld [vmem:[%s333 + $0x1c8] sm:$0xff]
  %s384 = scalar_lea.vmem %s1, 256
  %v385 = vld [vmem:[%s384] sm:$0xff]
  %v386 = vld [vmem:[%s384 + $0x8] sm:$0xff]
  %v387 = vld [vmem:[%s384 + $0x10] sm:$0xff]
  %v388 = vld [vmem:[%s384 + $0x18] sm:$0xff]
  %v389 = vld [vmem:[%s384 + $0x20] sm:$0xff]
  %v390 = vld [vmem:[%s384 + $0x28] sm:$0xff]
  %v391 = vld [vmem:[%s384 + $0x30] sm:$0xff]
  %v392 = vld [vmem:[%s384 + $0x38] sm:$0xff]
  %v393 = vld [vmem:[%s384 + $0x40] sm:$0xff]
  %v394 = vld [vmem:[%s384 + $0x48] sm:$0xff]
  %v395 = vld [vmem:[%s384 + $0x50] sm:$0xff]
  %v396 = vld [vmem:[%s384 + $0x58] sm:$0xff]
  %v397 = vld [vmem:[%s384 + $0x60] sm:$0xff]
  %v398 = vld [vmem:[%s384 + $0x68] sm:$0xff]
  %v399 = vld [vmem:[%s384 + $0x70] sm:$0xff]
  %v400 = vld [vmem:[%s384 + $0x78] sm:$0xff]
  %v401 = vld [vmem:[%s384 + $0x80] sm:$0xff]
  %v402 = vld [vmem:[%s384 + $0x88] sm:$0xff]
  %v403 = vld [vmem:[%s384 + $0x90] sm:$0xff]
  %v404 = vld [vmem:[%s384 + $0x98] sm:$0xff]
  %v405 = vld [vmem:[%s384 + $0xa0] sm:$0xff]
  %v406 = vld [vmem:[%s384 + $0xa8] sm:$0xff]
  %v407 = vld [vmem:[%s384 + $0xb0] sm:$0xff]
  %v408 = vld [vmem:[%s384 + $0xb8] sm:$0xff]
  %v409 = vld [vmem:[%s384 + $0xc0] sm:$0xff]
  %v410 = vld [vmem:[%s384 + $0xc8] sm:$0xff]
  %v411 = vld [vmem:[%s384 + $0xd0] sm:$0xff]
  %v412 = vld [vmem:[%s384 + $0xd8] sm:$0xff]
  %v413 = vld [vmem:[%s384 + $0xe0] sm:$0xff]
  %v414 = vld [vmem:[%s384 + $0xe8] sm:$0xff]
  %v415 = vld [vmem:[%s384 + $0xf0] sm:$0xff]
  %v416 = vld [vmem:[%s384 + $0xf8] sm:$0xff]
  %417 = vmatpush.msra.mxu0 %v400
  %418 = vmatpush.msra.mxu0 %v399
  %419 = vmatpush.msra.mxu0 %v398
  %420 = vmatpush.msra.mxu0 %v397
  %421 = vmatpush.msra.mxu0 %v396
  %422 = vmatpush.msra.mxu0 %v395
  %423 = vmatpush.msra.mxu0 %v394
  %424 = vmatpush.msra.mxu0 %v393
  %425 = vmatpush.msra.mxu0 %v392
  %426 = vmatpush.msra.mxu0 %v391
  %427 = vmatpush.msra.mxu0 %v390
  %428 = vmatpush.msra.mxu0 %v389
  %429 = vmatpush.msra.mxu0 %v388
  %430 = vmatpush.msra.mxu0 %v387
  %431 = vmatpush.msra.mxu0 %v386
  %432 = vmatpush.msra.mxu0 %v385
  %433 = vmatmul.f32.gmra.mxu0 %v334
  %v434 = vpop.f32.mrf.mxu0
  %v435 = vadd.f32 0.0, %v434
  %436 = vmatmul.f32.gmra.mxu0 %v336
  %v437 = vpop.f32.mrf.mxu0
  %v438 = vadd.f32 0.0, %v437
  %439 = vmatmul.f32.gmra.mxu0 %v338
  %v440 = vpop.f32.mrf.mxu0
  %v441 = vadd.f32 0.0, %v440
  %442 = vmatmul.f32.gmra.mxu0 %v340
  %v443 = vpop.f32.mrf.mxu0
  %v444 = vadd.f32 0.0, %v443
  %445 = vmatmul.f32.gmra.mxu0 %v342
  %v446 = vpop.f32.mrf.mxu0
  %v447 = vadd.f32 0.0, %v446
  %448 = vmatmul.f32.gmra.mxu0 %v344
  %v449 = vpop.f32.mrf.mxu0
  %v450 = vadd.f32 0.0, %v449
  %451 = vmatmul.f32.gmra.mxu0 %v346
  %v452 = vpop.f32.mrf.mxu0
  %v453 = vadd.f32 0.0, %v452
  %454 = vmatmul.f32.gmra.mxu0 %v348
  %v455 = vpop.f32.mrf.mxu0
  %v456 = vadd.f32 0.0, %v455
  %457 = vmatmul.f32.gmra.mxu0 %v350
  %v458 = vpop.f32.mrf.mxu0
  %v459 = vadd.f32 0.0, %v458
  %460 = vmatmul.f32.gmra.mxu0 %v352
  %v461 = vpop.f32.mrf.mxu0
  %v462 = vadd.f32 0.0, %v461
  %463 = vmatmul.f32.gmra.mxu0 %v354
  %v464 = vpop.f32.mrf.mxu0
  %v465 = vadd.f32 0.0, %v464
  %466 = vmatmul.f32.gmra.mxu0 %v356
  %v467 = vpop.f32.mrf.mxu0
  %v468 = vadd.f32 0.0, %v467
  %469 = vmatmul.f32.gmra.mxu0 %v358
  %v470 = vpop.f32.mrf.mxu0
  %v471 = vadd.f32 0.0, %v470
  %472 = vmatmul.f32.gmra.mxu0 %v360
  %v473 = vpop.f32.mrf.mxu0
  %v474 = vadd.f32 0.0, %v473
  %475 = vmatmul.f32.gmra.mxu0 %v362
  %v476 = vpop.f32.mrf.mxu0
  %v477 = vadd.f32 0.0, %v476
  %478 = vmatmul.f32.gmra.mxu0 %v364
  %v479 = vpop.f32.mrf.mxu0
  %v480 = vadd.f32 0.0, %v479
  %481 = vmatmul.f32.gmra.mxu0 %v366
  %v482 = vpop.f32.mrf.mxu0
  %v483 = vadd.f32 0.0, %v482
  %484 = vmatmul.f32.gmra.mxu0 %v368
  %v485 = vpop.f32.mrf.mxu0
  %v486 = vadd.f32 0.0, %v485
  %487 = vmatmul.f32.gmra.mxu0 %v370
  %v488 = vpop.f32.mrf.mxu0
  %v489 = vadd.f32 0.0, %v488
  %490 = vmatmul.f32.gmra.mxu0 %v372
  %v491 = vpop.f32.mrf.mxu0
  %v492 = vadd.f32 0.0, %v491
  %493 = vmatmul.f32.gmra.mxu0 %v374
  %v494 = vpop.f32.mrf.mxu0
  %v495 = vadd.f32 0.0, %v494
  %496 = vmatmul.f32.gmra.mxu0 %v376
  %v497 = vpop.f32.mrf.mxu0
  %v498 = vadd.f32 0.0, %v497
  %499 = vmatmul.f32.gmra.mxu0 %v378
  %v500 = vpop.f32.mrf.mxu0
  %v501 = vadd.f32 0.0, %v500
  %502 = vmatmul.f32.gmra.mxu0 %v380
  %v503 = vpop.f32.mrf.mxu0
  %v504 = vadd.f32 0.0, %v503
  %505 = vmatmul.f32.gmra.mxu0 %v382
  %v506 = vpop.f32.mrf.mxu0
  %v507 = vadd.f32 0.0, %v506
  %508 = vdwg.mxu0
  %509 = vmatpush.msra.mxu0 %v416
  %510 = vmatpush.msra.mxu0 %v415
  %511 = vmatpush.msra.mxu0 %v414
  %512 = vmatpush.msra.mxu0 %v413
  %513 = vmatpush.msra.mxu0 %v412
  %514 = vmatpush.msra.mxu0 %v411
  %515 = vmatpush.msra.mxu0 %v410
  %516 = vmatpush.msra.mxu0 %v409
  %517 = vmatpush.msra.mxu0 %v408
  %518 = vmatpush.msra.mxu0 %v407
  %519 = vmatpush.msra.mxu0 %v406
  %520 = vmatpush.msra.mxu0 %v405
  %521 = vmatpush.msra.mxu0 %v404
  %522 = vmatpush.msra.mxu0 %v403
  %523 = vmatpush.msra.mxu0 %v402
  %524 = vmatpush.msra.mxu0 %v401
  %525 = vmatmul.f32.gmra.mxu0 %v335
  %v526 = vpop.f32.mrf.mxu0
  %v527 = vadd.f32 %v435, %v526
  %528 = vmatmul.f32.gmra.mxu0 %v337
  %v529 = vpop.f32.mrf.mxu0
  %v530 = vadd.f32 %v438, %v529
  %531 = vmatmul.f32.gmra.mxu0 %v339
  %v532 = vpop.f32.mrf.mxu0
  %v533 = vadd.f32 %v441, %v532
  %534 = vmatmul.f32.gmra.mxu0 %v341
  %v535 = vpop.f32.mrf.mxu0
  %v536 = vadd.f32 %v444, %v535
  %537 = vmatmul.f32.gmra.mxu0 %v343
  %v538 = vpop.f32.mrf.mxu0
  %v539 = vadd.f32 %v447, %v538
  %540 = vmatmul.f32.gmra.mxu0 %v345
  %v541 = vpop.f32.mrf.mxu0
  %v542 = vadd.f32 %v450, %v541
  %543 = vmatmul.f32.gmra.mxu0 %v347
  %v544 = vpop.f32.mrf.mxu0
  %v545 = vadd.f32 %v453, %v544
  %546 = vmatmul.f32.gmra.mxu0 %v349
  %v547 = vpop.f32.mrf.mxu0
  %v548 = vadd.f32 %v456, %v547
  %549 = vmatmul.f32.gmra.mxu0 %v351
  %v550 = vpop.f32.mrf.mxu0
  %v551 = vadd.f32 %v459, %v550
  %552 = vmatmul.f32.gmra.mxu0 %v353
  %v553 = vpop.f32.mrf.mxu0
  %v554 = vadd.f32 %v462, %v553
  %555 = vmatmul.f32.gmra.mxu0 %v355
  %v556 = vpop.f32.mrf.mxu0
  %v557 = vadd.f32 %v465, %v556
  %558 = vmatmul.f32.gmra.mxu0 %v357
  %v559 = vpop.f32.mrf.mxu0
  %v560 = vadd.f32 %v468, %v559
  %561 = vmatmul.f32.gmra.mxu0 %v359
  %v562 = vpop.f32.mrf.mxu0
  %v563 = vadd.f32 %v471, %v562
  %564 = vmatmul.f32.gmra.mxu0 %v361
  %v565 = vpop.f32.mrf.mxu0
  %v566 = vadd.f32 %v474, %v565
  %567 = vmatmul.f32.gmra.mxu0 %v363
  %v568 = vpop.f32.mrf.mxu0
  %v569 = vadd.f32 %v477, %v568
  %570 = vmatmul.f32.gmra.mxu0 %v365
  %v571 = vpop.f32.mrf.mxu0
  %v572 = vadd.f32 %v480, %v571
  %573 = vmatmul.f32.gmra.mxu0 %v367
  %v574 = vpop.f32.mrf.mxu0
  %v575 = vadd.f32 %v483, %v574
  %576 = vmatmul.f32.gmra.mxu0 %v369
  %v577 = vpop.f32.mrf.mxu0
  %v578 = vadd.f32 %v486, %v577
  %579 = vmatmul.f32.gmra.mxu0 %v371
  %v580 = vpop.f32.mrf.mxu0
  %v581 = vadd.f32 %v489, %v580
  %582 = vmatmul.f32.gmra.mxu0 %v373
  %v583 = vpop.f32.mrf.mxu0
  %v584 = vadd.f32 %v492, %v583
  %585 = vmatmul.f32.gmra.mxu0 %v375
  %v586 = vpop.f32.mrf.mxu0
  %v587 = vadd.f32 %v495, %v586
  %588 = vmatmul.f32.gmra.mxu0 %v377
  %v589 = vpop.f32.mrf.mxu0
  %v590 = vadd.f32 %v498, %v589
  %591 = vmatmul.f32.gmra.mxu0 %v379
  %v592 = vpop.f32.mrf.mxu0
  %v593 = vadd.f32 %v501, %v592
  %594 = vmatmul.f32.gmra.mxu0 %v381
  %v595 = vpop.f32.mrf.mxu0
  %v596 = vadd.f32 %v504, %v595
  %597 = vmatmul.f32.gmra.mxu0 %v383
  %v598 = vpop.f32.mrf.mxu0
  %v599 = vadd.f32 %v507, %v598
  %600 = vdwg.mxu0
  %v601 = vadd.f32 %v308, %v527
  %v602 = vadd.f32 %v309, %v530
  %v603 = vadd.f32 %v310, %v533
  %v604 = vadd.f32 %v311, %v536
  %v605 = vadd.f32 %v312, %v539
  %v606 = vadd.f32 %v313, %v542
  %v607 = vadd.f32 %v314, %v545
  %v608 = vadd.f32 %v315, %v548
  %v609 = vadd.f32 %v316, %v551
  %v610 = vadd.f32 %v317, %v554
  %v611 = vadd.f32 %v318, %v557
  %v612 = vadd.f32 %v319, %v560
  %v613 = vadd.f32 %v320, %v563
  %v614 = vadd.f32 %v321, %v566
  %v615 = vadd.f32 %v322, %v569
  %v616 = vadd.f32 %v323, %v572
  %v617 = vadd.f32 %v324, %v575
  %v618 = vadd.f32 %v325, %v578
  %v619 = vadd.f32 %v326, %v581
  %v620 = vadd.f32 %v327, %v584
  %v621 = vadd.f32 %v328, %v587
  %v622 = vadd.f32 %v329, %v590
  %v623 = vadd.f32 %v330, %v593
  %v624 = vadd.f32 %v331, %v596
  %v625 = vadd.f32 %v332, %v599
  %s626 = scalar_lea.vmem %s0, 96
  %v627 = vld [vmem:[%s626] sm:$0xff]
  %v628 = vld [vmem:[%s626 + $0x8] sm:$0xff]
  %v629 = vld [vmem:[%s626 + $0x10] sm:$0xff]
  %v630 = vld [vmem:[%s626 + $0x18] sm:$0xff]
  %v631 = vld [vmem:[%s626 + $0x20] sm:$0xff]
  %v632 = vld [vmem:[%s626 + $0x28] sm:$0xff]
  %v633 = vld [vmem:[%s626 + $0x30] sm:$0xff]
  %v634 = vld [vmem:[%s626 + $0x38] sm:$0xff]
  %v635 = vld [vmem:[%s626 + $0x40] sm:$0xff]
  %v636 = vld [vmem:[%s626 + $0x48] sm:$0xff]
  %v637 = vld [vmem:[%s626 + $0x60] sm:$0xff]
  %v638 = vld [vmem:[%s626 + $0x68] sm:$0xff]
  %v639 = vld [vmem:[%s626 + $0x70] sm:$0xff]
  %v640 = vld [vmem:[%s626 + $0x78] sm:$0xff]
  %v641 = vld [vmem:[%s626 + $0x80] sm:$0xff]
  %v642 = vld [vmem:[%s626 + $0x88] sm:$0xff]
  %v643 = vld [vmem:[%s626 + $0x90] sm:$0xff]
  %v644 = vld [vmem:[%s626 + $0x98] sm:$0xff]
  %v645 = vld [vmem:[%s626 + $0xa0] sm:$0xff]
  %v646 = vld [vmem:[%s626 + $0xa8] sm:$0xff]
  %v647 = vld [vmem:[%s626 + $0xc0] sm:$0xff]
  %v648 = vld [vmem:[%s626 + $0xc8] sm:$0xff]
  %v649 = vld [vmem:[%s626 + $0xd0] sm:$0xff]
  %v650 = vld [vmem:[%s626 + $0xd8] sm:$0xff]
  %v651 = vld [vmem:[%s626 + $0xe0] sm:$0xff]
  %v652 = vld [vmem:[%s626 + $0xe8] sm:$0xff]
  %v653 = vld [vmem:[%s626 + $0xf0] sm:$0xff]
  %v654 = vld [vmem:[%s626 + $0xf8] sm:$0xff]
  %v655 = vld [vmem:[%s626 + $0x100] sm:$0xff]
  %v656 = vld [vmem:[%s626 + $0x108] sm:$0xff]
  %v657 = vld [vmem:[%s626 + $0x120] sm:$0xff]
  %v658 = vld [vmem:[%s626 + $0x128] sm:$0xff]
  %v659 = vld [vmem:[%s626 + $0x130] sm:$0xff]
  %v660 = vld [vmem:[%s626 + $0x138] sm:$0xff]
  %v661 = vld [vmem:[%s626 + $0x140] sm:$0xff]
  %v662 = vld [vmem:[%s626 + $0x148] sm:$0xff]
  %v663 = vld [vmem:[%s626 + $0x150] sm:$0xff]
  %v664 = vld [vmem:[%s626 + $0x158] sm:$0xff]
  %v665 = vld [vmem:[%s626 + $0x160] sm:$0xff]
  %v666 = vld [vmem:[%s626 + $0x168] sm:$0xff]
  %v667 = vld [vmem:[%s626 + $0x180] sm:$0xff]
  %v668 = vld [vmem:[%s626 + $0x188] sm:$0xff]
  %v669 = vld [vmem:[%s626 + $0x190] sm:$0xff]
  %v670 = vld [vmem:[%s626 + $0x198] sm:$0xff]
  %v671 = vld [vmem:[%s626 + $0x1a0] sm:$0xff]
  %v672 = vld [vmem:[%s626 + $0x1a8] sm:$0xff]
  %v673 = vld [vmem:[%s626 + $0x1b0] sm:$0xff]
  %v674 = vld [vmem:[%s626 + $0x1b8] sm:$0xff]
  %v675 = vld [vmem:[%s626 + $0x1c0] sm:$0xff]
  %v676 = vld [vmem:[%s626 + $0x1c8] sm:$0xff]
  %s677 = scalar_lea.vmem %s1, 512
  %v678 = vld [vmem:[%s677] sm:$0xff]
  %v679 = vld [vmem:[%s677 + $0x8] sm:$0xff]
  %v680 = vld [vmem:[%s677 + $0x10] sm:$0xff]
  %v681 = vld [vmem:[%s677 + $0x18] sm:$0xff]
  %v682 = vld [vmem:[%s677 + $0x20] sm:$0xff]
  %v683 = vld [vmem:[%s677 + $0x28] sm:$0xff]
  %v684 = vld [vmem:[%s677 + $0x30] sm:$0xff]
  %v685 = vld [vmem:[%s677 + $0x38] sm:$0xff]
  %v686 = vld [vmem:[%s677 + $0x40] sm:$0xff]
  %v687 = vld [vmem:[%s677 + $0x48] sm:$0xff]
  %v688 = vld [vmem:[%s677 + $0x50] sm:$0xff]
  %v689 = vld [vmem:[%s677 + $0x58] sm:$0xff]
  %v690 = vld [vmem:[%s677 + $0x60] sm:$0xff]
  %v691 = vld [vmem:[%s677 + $0x68] sm:$0xff]
  %v692 = vld [vmem:[%s677 + $0x70] sm:$0xff]
  %v693 = vld [vmem:[%s677 + $0x78] sm:$0xff]
  %v694 = vld [vmem:[%s677 + $0x80] sm:$0xff]
  %v695 = vld [vmem:[%s677 + $0x88] sm:$0xff]
  %v696 = vld [vmem:[%s677 + $0x90] sm:$0xff]
  %v697 = vld [vmem:[%s677 + $0x98] sm:$0xff]
  %v698 = vld [vmem:[%s677 + $0xa0] sm:$0xff]
  %v699 = vld [vmem:[%s677 + $0xa8] sm:$0xff]
  %v700 = vld [vmem:[%s677 + $0xb0] sm:$0xff]
  %v701 = vld [vmem:[%s677 + $0xb8] sm:$0xff]
  %v702 = vld [vmem:[%s677 + $0xc0] sm:$0xff]
  %v703 = vld [vmem:[%s677 + $0xc8] sm:$0xff]
  %v704 = vld [vmem:[%s677 + $0xd0] sm:$0xff]
  %v705 = vld [vmem:[%s677 + $0xd8] sm:$0xff]
  %v706 = vld [vmem:[%s677 + $0xe0] sm:$0xff]
  %v707 = vld [vmem:[%s677 + $0xe8] sm:$0xff]
  %v708 = vld [vmem:[%s677 + $0xf0] sm:$0xff]
  %v709 = vld [vmem:[%s677 + $0xf8] sm:$0xff]
  %710 = vmatpush.msra.mxu0 %v693
  %711 = vmatpush.msra.mxu0 %v692
  %712 = vmatpush.msra.mxu0 %v691
  %713 = vmatpush.msra.mxu0 %v690
  %714 = vmatpush.msra.mxu0 %v689
  %715 = vmatpush.msra.mxu0 %v688
  %716 = vmatpush.msra.mxu0 %v687
  %717 = vmatpush.msra.mxu0 %v686
  %718 = vmatpush.msra.mxu0 %v685
  %719 = vmatpush.msra.mxu0 %v684
  %720 = vmatpush.msra.mxu0 %v683
  %721 = vmatpush.msra.mxu0 %v682
  %722 = vmatpush.msra.mxu0 %v681
  %723 = vmatpush.msra.mxu0 %v680
  %724 = vmatpush.msra.mxu0 %v679
  %725 = vmatpush.msra.mxu0 %v678
  %726 = vmatmul.f32.gmra.mxu0 %v627
  %v727 = vpop.f32.mrf.mxu0
  %v728 = vadd.f32 0.0, %v727
  %729 = vmatmul.f32.gmra.mxu0 %v629
  %v730 = vpop.f32.mrf.mxu0
  %v731 = vadd.f32 0.0, %v730
  %732 = vmatmul.f32.gmra.mxu0 %v631
  %v733 = vpop.f32.mrf.mxu0
  %v734 = vadd.f32 0.0, %v733
  %735 = vmatmul.f32.gmra.mxu0 %v633
  %v736 = vpop.f32.mrf.mxu0
  %v737 = vadd.f32 0.0, %v736
  %738 = vmatmul.f32.gmra.mxu0 %v635
  %v739 = vpop.f32.mrf.mxu0
  %v740 = vadd.f32 0.0, %v739
  %741 = vmatmul.f32.gmra.mxu0 %v637
  %v742 = vpop.f32.mrf.mxu0
  %v743 = vadd.f32 0.0, %v742
  %744 = vmatmul.f32.gmra.mxu0 %v639
  %v745 = vpop.f32.mrf.mxu0
  %v746 = vadd.f32 0.0, %v745
  %747 = vmatmul.f32.gmra.mxu0 %v641
  %v748 = vpop.f32.mrf.mxu0
  %v749 = vadd.f32 0.0, %v748
  %750 = vmatmul.f32.gmra.mxu0 %v643
  %v751 = vpop.f32.mrf.mxu0
  %v752 = vadd.f32 0.0, %v751
  %753 = vmatmul.f32.gmra.mxu0 %v645
  %v754 = vpop.f32.mrf.mxu0
  %v755 = vadd.f32 0.0, %v754
  %756 = vmatmul.f32.gmra.mxu0 %v647
  %v757 = vpop.f32.mrf.mxu0
  %v758 = vadd.f32 0.0, %v757
  %759 = vmatmul.f32.gmra.mxu0 %v649
  %v760 = vpop.f32.mrf.mxu0
  %v761 = vadd.f32 0.0, %v760
  %762 = vmatmul.f32.gmra.mxu0 %v651
  %v763 = vpop.f32.mrf.mxu0
  %v764 = vadd.f32 0.0, %v763
  %765 = vmatmul.f32.gmra.mxu0 %v653
  %v766 = vpop.f32.mrf.mxu0
  %v767 = vadd.f32 0.0, %v766
  %768 = vmatmul.f32.gmra.mxu0 %v655
  %v769 = vpop.f32.mrf.mxu0
  %v770 = vadd.f32 0.0, %v769
  %771 = vmatmul.f32.gmra.mxu0 %v657
  %v772 = vpop.f32.mrf.mxu0
  %v773 = vadd.f32 0.0, %v772
  %774 = vmatmul.f32.gmra.mxu0 %v659
  %v775 = vpop.f32.mrf.mxu0
  %v776 = vadd.f32 0.0, %v775
  %777 = vmatmul.f32.gmra.mxu0 %v661
  %v778 = vpop.f32.mrf.mxu0
  %v779 = vadd.f32 0.0, %v778
  %780 = vmatmul.f32.gmra.mxu0 %v663
  %v781 = vpop.f32.mrf.mxu0
  %v782 = vadd.f32 0.0, %v781
  %783 = vmatmul.f32.gmra.mxu0 %v665
  %v784 = vpop.f32.mrf.mxu0
  %v785 = vadd.f32 0.0, %v784
  %786 = vmatmul.f32.gmra.mxu0 %v667
  %v787 = vpop.f32.mrf.mxu0
  %v788 = vadd.f32 0.0, %v787
  %789 = vmatmul.f32.gmra.mxu0 %v669
  %v790 = vpop.f32.mrf.mxu0
  %v791 = vadd.f32 0.0, %v790
  %792 = vmatmul.f32.gmra.mxu0 %v671
  %v793 = vpop.f32.mrf.mxu0
  %v794 = vadd.f32 0.0, %v793
  %795 = vmatmul.f32.gmra.mxu0 %v673
  %v796 = vpop.f32.mrf.mxu0
  %v797 = vadd.f32 0.0, %v796
  %798 = vmatmul.f32.gmra.mxu0 %v675
  %v799 = vpop.f32.mrf.mxu0
  %v800 = vadd.f32 0.0, %v799
  %801 = vdwg.mxu0
  %802 = vmatpush.msra.mxu0 %v709
  %803 = vmatpush.msra.mxu0 %v708
  %804 = vmatpush.msra.mxu0 %v707
  %805 = vmatpush.msra.mxu0 %v706
  %806 = vmatpush.msra.mxu0 %v705
  %807 = vmatpush.msra.mxu0 %v704
  %808 = vmatpush.msra.mxu0 %v703
  %809 = vmatpush.msra.mxu0 %v702
  %810 = vmatpush.msra.mxu0 %v701
  %811 = vmatpush.msra.mxu0 %v700
  %812 = vmatpush.msra.mxu0 %v699
  %813 = vmatpush.msra.mxu0 %v698
  %814 = vmatpush.msra.mxu0 %v697
  %815 = vmatpush.msra.mxu0 %v696
  %816 = vmatpush.msra.mxu0 %v695
  %817 = vmatpush.msra.mxu0 %v694
  %818 = vmatmul.f32.gmra.mxu0 %v628
  %v819 = vpop.f32.mrf.mxu0
  %v820 = vadd.f32 %v728, %v819
  %821 = vmatmul.f32.gmra.mxu0 %v630
  %v822 = vpop.f32.mrf.mxu0
  %v823 = vadd.f32 %v731, %v822
  %824 = vmatmul.f32.gmra.mxu0 %v632
  %v825 = vpop.f32.mrf.mxu0
  %v826 = vadd.f32 %v734, %v825
  %827 = vmatmul.f32.gmra.mxu0 %v634
  %v828 = vpop.f32.mrf.mxu0
  %v829 = vadd.f32 %v737, %v828
  %830 = vmatmul.f32.gmra.mxu0 %v636
  %v831 = vpop.f32.mrf.mxu0
  %v832 = vadd.f32 %v740, %v831
  %833 = vmatmul.f32.gmra.mxu0 %v638
  %v834 = vpop.f32.mrf.mxu0
  %v835 = vadd.f32 %v743, %v834
  %836 = vmatmul.f32.gmra.mxu0 %v640
  %v837 = vpop.f32.mrf.mxu0
  %v838 = vadd.f32 %v746, %v837
  %839 = vmatmul.f32.gmra.mxu0 %v642
  %v840 = vpop.f32.mrf.mxu0
  %v841 = vadd.f32 %v749, %v840
  %842 = vmatmul.f32.gmra.mxu0 %v644
  %v843 = vpop.f32.mrf.mxu0
  %v844 = vadd.f32 %v752, %v843
  %845 = vmatmul.f32.gmra.mxu0 %v646
  %v846 = vpop.f32.mrf.mxu0
  %v847 = vadd.f32 %v755, %v846
  %848 = vmatmul.f32.gmra.mxu0 %v648
  %v849 = vpop.f32.mrf.mxu0
  %v850 = vadd.f32 %v758, %v849
  %851 = vmatmul.f32.gmra.mxu0 %v650
  %v852 = vpop.f32.mrf.mxu0
  %v853 = vadd.f32 %v761, %v852
  %854 = vmatmul.f32.gmra.mxu0 %v652
  %v855 = vpop.f32.mrf.mxu0
  %v856 = vadd.f32 %v764, %v855
  %857 = vmatmul.f32.gmra.mxu0 %v654
  %v858 = vpop.f32.mrf.mxu0
  %v859 = vadd.f32 %v767, %v858
  %860 = vmatmul.f32.gmra.mxu0 %v656
  %v861 = vpop.f32.mrf.mxu0
  %v862 = vadd.f32 %v770, %v861
  %863 = vmatmul.f32.gmra.mxu0 %v658
  %v864 = vpop.f32.mrf.mxu0
  %v865 = vadd.f32 %v773, %v864
  %866 = vmatmul.f32.gmra.mxu0 %v660
  %v867 = vpop.f32.mrf.mxu0
  %v868 = vadd.f32 %v776, %v867
  %869 = vmatmul.f32.gmra.mxu0 %v662
  %v870 = vpop.f32.mrf.mxu0
  %v871 = vadd.f32 %v779, %v870
  %872 = vmatmul.f32.gmra.mxu0 %v664
  %v873 = vpop.f32.mrf.mxu0
  %v874 = vadd.f32 %v782, %v873
  %875 = vmatmul.f32.gmra.mxu0 %v666
  %v876 = vpop.f32.mrf.mxu0
  %v877 = vadd.f32 %v785, %v876
  %878 = vmatmul.f32.gmra.mxu0 %v668
  %v879 = vpop.f32.mrf.mxu0
  %v880 = vadd.f32 %v788, %v879
  %881 = vmatmul.f32.gmra.mxu0 %v670
  %v882 = vpop.f32.mrf.mxu0
  %v883 = vadd.f32 %v791, %v882
  %884 = vmatmul.f32.gmra.mxu0 %v672
  %v885 = vpop.f32.mrf.mxu0
  %v886 = vadd.f32 %v794, %v885
  %887 = vmatmul.f32.gmra.mxu0 %v674
  %v888 = vpop.f32.mrf.mxu0
  %v889 = vadd.f32 %v797, %v888
  %890 = vmatmul.f32.gmra.mxu0 %v676
  %v891 = vpop.f32.mrf.mxu0
  %v892 = vadd.f32 %v800, %v891
  %893 = vdwg.mxu0
  %v894 = vadd.f32 %v601, %v820
  %v895 = vadd.f32 %v602, %v823
  %v896 = vadd.f32 %v603, %v826
  %v897 = vadd.f32 %v604, %v829
  %v898 = vadd.f32 %v605, %v832
  %v899 = vadd.f32 %v606, %v835
  %v900 = vadd.f32 %v607, %v838
  %v901 = vadd.f32 %v608, %v841
  %v902 = vadd.f32 %v609, %v844
  %v903 = vadd.f32 %v610, %v847
  %v904 = vadd.f32 %v611, %v850
  %v905 = vadd.f32 %v612, %v853
  %v906 = vadd.f32 %v613, %v856
  %v907 = vadd.f32 %v614, %v859
  %v908 = vadd.f32 %v615, %v862
  %v909 = vadd.f32 %v616, %v865
  %v910 = vadd.f32 %v617, %v868
  %v911 = vadd.f32 %v618, %v871
  %v912 = vadd.f32 %v619, %v874
  %v913 = vadd.f32 %v620, %v877
  %v914 = vadd.f32 %v621, %v880
  %v915 = vadd.f32 %v622, %v883
  %v916 = vadd.f32 %v623, %v886
  %v917 = vadd.f32 %v624, %v889
  %v918 = vadd.f32 %v625, %v892
  %s919 = scalar_lea.vmem %s0, 112
  %v920 = vld [vmem:[%s919] sm:$0xff]
  %v921 = vld [vmem:[%s919 + $0x8] sm:$0xff]
  %v922 = vld [vmem:[%s919 + $0x10] sm:$0xff]
  %v923 = vld [vmem:[%s919 + $0x18] sm:$0xff]
  %v924 = vld [vmem:[%s919 + $0x20] sm:$0xff]
  %v925 = vld [vmem:[%s919 + $0x28] sm:$0xff]
  %v926 = vld [vmem:[%s919 + $0x30] sm:$0xff]
  %v927 = vld [vmem:[%s919 + $0x38] sm:$0xff]
  %v928 = vld [vmem:[%s919 + $0x40] sm:$0xff]
  %v929 = vld [vmem:[%s919 + $0x48] sm:$0xff]
  %v930 = vld [vmem:[%s919 + $0x60] sm:$0xff]
  %v931 = vld [vmem:[%s919 + $0x68] sm:$0xff]
  %v932 = vld [vmem:[%s919 + $0x70] sm:$0xff]
  %v933 = vld [vmem:[%s919 + $0x78] sm:$0xff]
  %v934 = vld [vmem:[%s919 + $0x80] sm:$0xff]
  %v935 = vld [vmem:[%s919 + $0x88] sm:$0xff]
  %v936 = vld [vmem:[%s919 + $0x90] sm:$0xff]
  %v937 = vld [vmem:[%s919 + $0x98] sm:$0xff]
  %v938 = vld [vmem:[%s919 + $0xa0] sm:$0xff]
  %v939 = vld [vmem:[%s919 + $0xa8] sm:$0xff]
  %v940 = vld [vmem:[%s919 + $0xc0] sm:$0xff]
  %v941 = vld [vmem:[%s919 + $0xc8] sm:$0xff]
  %v942 = vld [vmem:[%s919 + $0xd0] sm:$0xff]
  %v943 = vld [vmem:[%s919 + $0xd8] sm:$0xff]
  %v944 = vld [vmem:[%s919 + $0xe0] sm:$0xff]
  %v945 = vld [vmem:[%s919 + $0xe8] sm:$0xff]
  %v946 = vld [vmem:[%s919 + $0xf0] sm:$0xff]
  %v947 = vld [vmem:[%s919 + $0xf8] sm:$0xff]
  %v948 = vld [vmem:[%s919 + $0x100] sm:$0xff]
  %v949 = vld [vmem:[%s919 + $0x108] sm:$0xff]
  %v950 = vld [vmem:[%s919 + $0x120] sm:$0xff]
  %v951 = vld [vmem:[%s919 + $0x128] sm:$0xff]
  %v952 = vld [vmem:[%s919 + $0x130] sm:$0xff]
  %v953 = vld [vmem:[%s919 + $0x138] sm:$0xff]
  %v954 = vld [vmem:[%s919 + $0x140] sm:$0xff]
  %v955 = vld [vmem:[%s919 + $0x148] sm:$0xff]
  %v956 = vld [vmem:[%s919 + $0x150] sm:$0xff]
  %v957 = vld [vmem:[%s919 + $0x158] sm:$0xff]
  %v958 = vld [vmem:[%s919 + $0x160] sm:$0xff]
  %v959 = vld [vmem:[%s919 + $0x168] sm:$0xff]
  %v960 = vld [vmem:[%s919 + $0x180] sm:$0xff]
  %v961 = vld [vmem:[%s919 + $0x188] sm:$0xff]
  %v962 = vld [vmem:[%s919 + $0x190] sm:$0xff]
  %v963 = vld [vmem:[%s919 + $0x198] sm:$0xff]
  %v964 = vld [vmem:[%s919 + $0x1a0] sm:$0xff]
  %v965 = vld [vmem:[%s919 + $0x1a8] sm:$0xff]
  %v966 = vld [vmem:[%s919 + $0x1b0] sm:$0xff]
  %v967 = vld [vmem:[%s919 + $0x1b8] sm:$0xff]
  %v968 = vld [vmem:[%s919 + $0x1c0] sm:$0xff]
  %v969 = vld [vmem:[%s919 + $0x1c8] sm:$0xff]
  %s970 = scalar_lea.vmem %s1, 768
  %v971 = vld [vmem:[%s970] sm:$0xff]
  %v972 = vld [vmem:[%s970 + $0x8] sm:$0xff]
  %v973 = vld [vmem:[%s970 + $0x10] sm:$0xff]
  %v974 = vld [vmem:[%s970 + $0x18] sm:$0xff]
  %v975 = vld [vmem:[%s970 + $0x20] sm:$0xff]
  %v976 = vld [vmem:[%s970 + $0x28] sm:$0xff]
  %v977 = vld [vmem:[%s970 + $0x30] sm:$0xff]
  %v978 = vld [vmem:[%s970 + $0x38] sm:$0xff]
  %v979 = vld [vmem:[%s970 + $0x40] sm:$0xff]
  %v980 = vld [vmem:[%s970 + $0x48] sm:$0xff]
  %v981 = vld [vmem:[%s970 + $0x50] sm:$0xff]
  %v982 = vld [vmem:[%s970 + $0x58] sm:$0xff]
  %v983 = vld [vmem:[%s970 + $0x60] sm:$0xff]
  %v984 = vld [vmem:[%s970 + $0x68] sm:$0xff]
  %v985 = vld [vmem:[%s970 + $0x70] sm:$0xff]
  %v986 = vld [vmem:[%s970 + $0x78] sm:$0xff]
  %v987 = vld [vmem:[%s970 + $0x80] sm:$0xff]
  %v988 = vld [vmem:[%s970 + $0x88] sm:$0xff]
  %v989 = vld [vmem:[%s970 + $0x90] sm:$0xff]
  %v990 = vld [vmem:[%s970 + $0x98] sm:$0xff]
  %v991 = vld [vmem:[%s970 + $0xa0] sm:$0xff]
  %v992 = vld [vmem:[%s970 + $0xa8] sm:$0xff]
  %v993 = vld [vmem:[%s970 + $0xb0] sm:$0xff]
  %v994 = vld [vmem:[%s970 + $0xb8] sm:$0xff]
  %v995 = vld [vmem:[%s970 + $0xc0] sm:$0xff]
  %v996 = vld [vmem:[%s970 + $0xc8] sm:$0xff]
  %v997 = vld [vmem:[%s970 + $0xd0] sm:$0xff]
  %v998 = vld [vmem:[%s970 + $0xd8] sm:$0xff]
  %v999 = vld [vmem:[%s970 + $0xe0] sm:$0xff]
  %v1000 = vld [vmem:[%s970 + $0xe8] sm:$0xff]
  %v1001 = vld [vmem:[%s970 + $0xf0] sm:$0xff]
  %v1002 = vld [vmem:[%s970 + $0xf8] sm:$0xff]
  %1003 = vmatpush.msra.mxu0 %v986
  %1004 = vmatpush.msra.mxu0 %v985
  %1005 = vmatpush.msra.mxu0 %v984
  %1006 = vmatpush.msra.mxu0 %v983
  %1007 = vmatpush.msra.mxu0 %v982
  %1008 = vmatpush.msra.mxu0 %v981
  %1009 = vmatpush.msra.mxu0 %v980
  %1010 = vmatpush.msra.mxu0 %v979
  %1011 = vmatpush.msra.mxu0 %v978
  %1012 = vmatpush.msra.mxu0 %v977
  %1013 = vmatpush.msra.mxu0 %v976
  %1014 = vmatpush.msra.mxu0 %v975
  %1015 = vmatpush.msra.mxu0 %v974
  %1016 = vmatpush.msra.mxu0 %v973
  %1017 = vmatpush.msra.mxu0 %v972
  %1018 = vmatpush.msra.mxu0 %v971
  %1019 = vmatmul.f32.gmra.mxu0 %v920
  %v1020 = vpop.f32.mrf.mxu0
  %v1021 = vadd.f32 0.0, %v1020
  %1022 = vmatmul.f32.gmra.mxu0 %v922
  %v1023 = vpop.f32.mrf.mxu0
  %v1024 = vadd.f32 0.0, %v1023
  %1025 = vmatmul.f32.gmra.mxu0 %v924
  %v1026 = vpop.f32.mrf.mxu0
  %v1027 = vadd.f32 0.0, %v1026
  %1028 = vmatmul.f32.gmra.mxu0 %v926
  %v1029 = vpop.f32.mrf.mxu0
  %v1030 = vadd.f32 0.0, %v1029
  %1031 = vmatmul.f32.gmra.mxu0 %v928
  %v1032 = vpop.f32.mrf.mxu0
  %v1033 = vadd.f32 0.0, %v1032
  %1034 = vmatmul.f32.gmra.mxu0 %v930
  %v1035 = vpop.f32.mrf.mxu0
  %v1036 = vadd.f32 0.0, %v1035
  %1037 = vmatmul.f32.gmra.mxu0 %v932
  %v1038 = vpop.f32.mrf.mxu0
  %v1039 = vadd.f32 0.0, %v1038
  %1040 = vmatmul.f32.gmra.mxu0 %v934
  %v1041 = vpop.f32.mrf.mxu0
  %v1042 = vadd.f32 0.0, %v1041
  %1043 = vmatmul.f32.gmra.mxu0 %v936
  %v1044 = vpop.f32.mrf.mxu0
  %v1045 = vadd.f32 0.0, %v1044
  %1046 = vmatmul.f32.gmra.mxu0 %v938
  %v1047 = vpop.f32.mrf.mxu0
  %v1048 = vadd.f32 0.0, %v1047
  %1049 = vmatmul.f32.gmra.mxu0 %v940
  %v1050 = vpop.f32.mrf.mxu0
  %v1051 = vadd.f32 0.0, %v1050
  %1052 = vmatmul.f32.gmra.mxu0 %v942
  %v1053 = vpop.f32.mrf.mxu0
  %v1054 = vadd.f32 0.0, %v1053
  %1055 = vmatmul.f32.gmra.mxu0 %v944
  %v1056 = vpop.f32.mrf.mxu0
  %v1057 = vadd.f32 0.0, %v1056
  %1058 = vmatmul.f32.gmra.mxu0 %v946
  %v1059 = vpop.f32.mrf.mxu0
  %v1060 = vadd.f32 0.0, %v1059
  %1061 = vmatmul.f32.gmra.mxu0 %v948
  %v1062 = vpop.f32.mrf.mxu0
  %v1063 = vadd.f32 0.0, %v1062
  %1064 = vmatmul.f32.gmra.mxu0 %v950
  %v1065 = vpop.f32.mrf.mxu0
  %v1066 = vadd.f32 0.0, %v1065
  %1067 = vmatmul.f32.gmra.mxu0 %v952
  %v1068 = vpop.f32.mrf.mxu0
  %v1069 = vadd.f32 0.0, %v1068
  %1070 = vmatmul.f32.gmra.mxu0 %v954
  %v1071 = vpop.f32.mrf.mxu0
  %v1072 = vadd.f32 0.0, %v1071
  %1073 = vmatmul.f32.gmra.mxu0 %v956
  %v1074 = vpop.f32.mrf.mxu0
  %v1075 = vadd.f32 0.0, %v1074
  %1076 = vmatmul.f32.gmra.mxu0 %v958
  %v1077 = vpop.f32.mrf.mxu0
  %v1078 = vadd.f32 0.0, %v1077
  %1079 = vmatmul.f32.gmra.mxu0 %v960
  %v1080 = vpop.f32.mrf.mxu0
  %v1081 = vadd.f32 0.0, %v1080
  %1082 = vmatmul.f32.gmra.mxu0 %v962
  %v1083 = vpop.f32.mrf.mxu0
  %v1084 = vadd.f32 0.0, %v1083
  %1085 = vmatmul.f32.gmra.mxu0 %v964
  %v1086 = vpop.f32.mrf.mxu0
  %v1087 = vadd.f32 0.0, %v1086
  %1088 = vmatmul.f32.gmra.mxu0 %v966
  %v1089 = vpop.f32.mrf.mxu0
  %v1090 = vadd.f32 0.0, %v1089
  %1091 = vmatmul.f32.gmra.mxu0 %v968
  %v1092 = vpop.f32.mrf.mxu0
  %v1093 = vadd.f32 0.0, %v1092
  %1094 = vdwg.mxu0
  %1095 = vmatpush.msra.mxu0 %v1002
  %1096 = vmatpush.msra.mxu0 %v1001
  %1097 = vmatpush.msra.mxu0 %v1000
  %1098 = vmatpush.msra.mxu0 %v999
  %1099 = vmatpush.msra.mxu0 %v998
  %1100 = vmatpush.msra.mxu0 %v997
  %1101 = vmatpush.msra.mxu0 %v996
  %1102 = vmatpush.msra.mxu0 %v995
  %1103 = vmatpush.msra.mxu0 %v994
  %1104 = vmatpush.msra.mxu0 %v993
  %1105 = vmatpush.msra.mxu0 %v992
  %1106 = vmatpush.msra.mxu0 %v991
  %1107 = vmatpush.msra.mxu0 %v990
  %1108 = vmatpush.msra.mxu0 %v989
  %1109 = vmatpush.msra.mxu0 %v988
  %1110 = vmatpush.msra.mxu0 %v987
  %1111 = vmatmul.f32.gmra.mxu0 %v921
  %v1112 = vpop.f32.mrf.mxu0
  %v1113 = vadd.f32 %v1021, %v1112
  %1114 = vmatmul.f32.gmra.mxu0 %v923
  %v1115 = vpop.f32.mrf.mxu0
  %v1116 = vadd.f32 %v1024, %v1115
  %1117 = vmatmul.f32.gmra.mxu0 %v925
  %v1118 = vpop.f32.mrf.mxu0
  %v1119 = vadd.f32 %v1027, %v1118
  %1120 = vmatmul.f32.gmra.mxu0 %v927
  %v1121 = vpop.f32.mrf.mxu0
  %v1122 = vadd.f32 %v1030, %v1121
  %1123 = vmatmul.f32.gmra.mxu0 %v929
  %v1124 = vpop.f32.mrf.mxu0
  %v1125 = vadd.f32 %v1033, %v1124
  %1126 = vmatmul.f32.gmra.mxu0 %v931
  %v1127 = vpop.f32.mrf.mxu0
  %v1128 = vadd.f32 %v1036, %v1127
  %1129 = vmatmul.f32.gmra.mxu0 %v933
  %v1130 = vpop.f32.mrf.mxu0
  %v1131 = vadd.f32 %v1039, %v1130
  %1132 = vmatmul.f32.gmra.mxu0 %v935
  %v1133 = vpop.f32.mrf.mxu0
  %v1134 = vadd.f32 %v1042, %v1133
  %1135 = vmatmul.f32.gmra.mxu0 %v937
  %v1136 = vpop.f32.mrf.mxu0
  %v1137 = vadd.f32 %v1045, %v1136
  %1138 = vmatmul.f32.gmra.mxu0 %v939
  %v1139 = vpop.f32.mrf.mxu0
  %v1140 = vadd.f32 %v1048, %v1139
  %1141 = vmatmul.f32.gmra.mxu0 %v941
  %v1142 = vpop.f32.mrf.mxu0
  %v1143 = vadd.f32 %v1051, %v1142
  %1144 = vmatmul.f32.gmra.mxu0 %v943
  %v1145 = vpop.f32.mrf.mxu0
  %v1146 = vadd.f32 %v1054, %v1145
  %1147 = vmatmul.f32.gmra.mxu0 %v945
  %v1148 = vpop.f32.mrf.mxu0
  %v1149 = vadd.f32 %v1057, %v1148
  %1150 = vmatmul.f32.gmra.mxu0 %v947
  %v1151 = vpop.f32.mrf.mxu0
  %v1152 = vadd.f32 %v1060, %v1151
  %1153 = vmatmul.f32.gmra.mxu0 %v949
  %v1154 = vpop.f32.mrf.mxu0
  %v1155 = vadd.f32 %v1063, %v1154
  %1156 = vmatmul.f32.gmra.mxu0 %v951
  %v1157 = vpop.f32.mrf.mxu0
  %v1158 = vadd.f32 %v1066, %v1157
  %1159 = vmatmul.f32.gmra.mxu0 %v953
  %v1160 = vpop.f32.mrf.mxu0
  %v1161 = vadd.f32 %v1069, %v1160
  %1162 = vmatmul.f32.gmra.mxu0 %v955
  %v1163 = vpop.f32.mrf.mxu0
  %v1164 = vadd.f32 %v1072, %v1163
  %1165 = vmatmul.f32.gmra.mxu0 %v957
  %v1166 = vpop.f32.mrf.mxu0
  %v1167 = vadd.f32 %v1075, %v1166
  %1168 = vmatmul.f32.gmra.mxu0 %v959
  %v1169 = vpop.f32.mrf.mxu0
  %v1170 = vadd.f32 %v1078, %v1169
  %1171 = vmatmul.f32.gmra.mxu0 %v961
  %v1172 = vpop.f32.mrf.mxu0
  %v1173 = vadd.f32 %v1081, %v1172
  %1174 = vmatmul.f32.gmra.mxu0 %v963
  %v1175 = vpop.f32.mrf.mxu0
  %v1176 = vadd.f32 %v1084, %v1175
  %1177 = vmatmul.f32.gmra.mxu0 %v965
  %v1178 = vpop.f32.mrf.mxu0
  %v1179 = vadd.f32 %v1087, %v1178
  %1180 = vmatmul.f32.gmra.mxu0 %v967
  %v1181 = vpop.f32.mrf.mxu0
  %v1182 = vadd.f32 %v1090, %v1181
  %1183 = vmatmul.f32.gmra.mxu0 %v969
  %v1184 = vpop.f32.mrf.mxu0
  %v1185 = vadd.f32 %v1093, %v1184
  %1186 = vdwg.mxu0
  %v1187 = vadd.f32 %v894, %v1113
  %v1188 = vadd.f32 %v895, %v1116
  %v1189 = vadd.f32 %v896, %v1119
  %v1190 = vadd.f32 %v897, %v1122
  %v1191 = vadd.f32 %v898, %v1125
  %v1192 = vadd.f32 %v899, %v1128
  %v1193 = vadd.f32 %v900, %v1131
  %v1194 = vadd.f32 %v901, %v1134
  %v1195 = vadd.f32 %v902, %v1137
  %v1196 = vadd.f32 %v903, %v1140
  %v1197 = vadd.f32 %v904, %v1143
  %v1198 = vadd.f32 %v905, %v1146
  %v1199 = vadd.f32 %v906, %v1149
  %v1200 = vadd.f32 %v907, %v1152
  %v1201 = vadd.f32 %v908, %v1155
  %v1202 = vadd.f32 %v909, %v1158
  %v1203 = vadd.f32 %v910, %v1161
  %v1204 = vadd.f32 %v911, %v1164
  %v1205 = vadd.f32 %v912, %v1167
  %v1206 = vadd.f32 %v913, %v1170
  %v1207 = vadd.f32 %v914, %v1173
  %v1208 = vadd.f32 %v915, %v1176
  %v1209 = vadd.f32 %v916, %v1179
  %v1210 = vadd.f32 %v917, %v1182
  %v1211 = vadd.f32 %v918, %v1185
  %v1212 = vmax.f32 %v1187, 0.0
  %v1213 = vmax.f32 %v1188, 0.0
  %v1214 = vmax.f32 %v1189, 0.0
  %v1215 = vmax.f32 %v1190, 0.0
  %v1216 = vmax.f32 %v1191, 0.0
  %v1217 = vmax.f32 %v1192, 0.0
  %v1218 = vmax.f32 %v1193, 0.0
  %v1219 = vmax.f32 %v1194, 0.0
  %v1220 = vmax.f32 %v1195, 0.0
  %v1221 = vmax.f32 %v1196, 0.0
  %v1222 = vmax.f32 %v1197, 0.0
  %v1223 = vmax.f32 %v1198, 0.0
  %v1224 = vmax.f32 %v1199, 0.0
  %v1225 = vmax.f32 %v1200, 0.0
  %v1226 = vmax.f32 %v1201, 0.0
  %v1227 = vmax.f32 %v1202, 0.0
  %v1228 = vmax.f32 %v1203, 0.0
  %v1229 = vmax.f32 %v1204, 0.0
  %v1230 = vmax.f32 %v1205, 0.0
  %v1231 = vmax.f32 %v1206, 0.0
  %v1232 = vmax.f32 %v1207, 0.0
  %v1233 = vmax.f32 %v1208, 0.0
  %v1234 = vmax.f32 %v1209, 0.0
  %v1235 = vmax.f32 %v1210, 0.0
  %v1236 = vmax.f32 %v1211, 0.0
  %1237 = vst [vmem:[#allocation2] sm:$0xff] %v1212
  %1238 = vst [vmem:[#allocation2 + $0x8] sm:$0xff] %v1213
  %1239 = vst [vmem:[#allocation2 + $0x10] sm:$0xff] %v1214
  %1240 = vst [vmem:[#allocation2 + $0x18] sm:$0xff] %v1215
  %1241 = vst [vmem:[#allocation2 + $0x20] sm:$0xff] %v1216
  %1242 = vst [vmem:[#allocation2 + $0x28] sm:$0xff] %v1217
  %1243 = vst [vmem:[#allocation2 + $0x30] sm:$0xff] %v1218
  %1244 = vst [vmem:[#allocation2 + $0x38] sm:$0xff] %v1219
  %1245 = vst [vmem:[#allocation2 + $0x40] sm:$0xff] %v1220
  %1246 = vst [vmem:[#allocation2 + $0x48] sm:$0xff] %v1221
  %1247 = vst [vmem:[#allocation2 + $0x50] sm:$0xff] %v1222
  %1248 = vst [vmem:[#allocation2 + $0x58] sm:$0xff] %v1223
  %1249 = vst [vmem:[#allocation2 + $0x60] sm:$0xff] %v1224
  %1250 = vst [vmem:[#allocation2 + $0x68] sm:$0xff] %v1225
  %1251 = vst [vmem:[#allocation2 + $0x70] sm:$0xff] %v1226
  %1252 = vst [vmem:[#allocation2 + $0x78] sm:$0xff] %v1227
  %1253 = vst [vmem:[#allocation2 + $0x80] sm:$0xff] %v1228
  %1254 = vst [vmem:[#allocation2 + $0x88] sm:$0xff] %v1229
  %1255 = vst [vmem:[#allocation2 + $0x90] sm:$0xff] %v1230
  %1256 = vst [vmem:[#allocation2 + $0x98] sm:$0xff] %v1231
  %1257 = vst [vmem:[#allocation2 + $0xa0] sm:$0xff] %v1232
  %1258 = vst [vmem:[#allocation2 + $0xa8] sm:$0xff] %v1233
  %1259 = vst [vmem:[#allocation2 + $0xb0] sm:$0xff] %v1234
  %1260 = vst [vmem:[#allocation2 + $0xb8] sm:$0xff] %v1235
  %1261 = vst [vmem:[#allocation2 + $0xc0] sm:$0xff] %v1236
  %v1262 = vld [vmem:[%s4] sm:$0x1]
  %v1264 = vperm.slane %v1262, 0
  %v1266 = vld [vmem:[#allocation2] sm:$0xff]
  %v1267 = vld [vmem:[#allocation2 + $0x8] sm:$0xff]
  %v1268 = vld [vmem:[#allocation2 + $0x10] sm:$0xff]
  %v1269 = vld [vmem:[#allocation2 + $0x18] sm:$0xff]
  %v1270 = vld [vmem:[#allocation2 + $0x28] sm:$0xff]
  %v1271 = vld [vmem:[#allocation2 + $0x30] sm:$0xff]
  %v1272 = vld [vmem:[#allocation2 + $0x38] sm:$0xff]
  %v1273 = vld [vmem:[#allocation2 + $0x40] sm:$0xff]
  %v1274 = vld [vmem:[#allocation2 + $0x50] sm:$0xff]
  %v1275 = vld [vmem:[#allocation2 + $0x58] sm:$0xff]
  %v1276 = vld [vmem:[#allocation2 + $0x60] sm:$0xff]
  %v1277 = vld [vmem:[#allocation2 + $0x68] sm:$0xff]
  %v1278 = vld [vmem:[#allocation2 + $0x78] sm:$0xff]
  %v1279 = vld [vmem:[#allocation2 + $0x80] sm:$0xff]
  %v1280 = vld [vmem:[#allocation2 + $0x88] sm:$0xff]
  %v1281 = vld [vmem:[#allocation2 + $0x90] sm:$0xff]
  %v1282 = vld [vmem:[%s3] sm:$0xff]
  %v1283 = vld [vmem:[%s3 + $0x8] sm:$0xff]
  %v1284 = vld [vmem:[%s3 + $0x10] sm:$0xff]
  %v1285 = vld [vmem:[%s3 + $0x18] sm:$0xff]
  %v1286 = vld [vmem:[%s3 + $0x20] sm:$0xff]
  %v1287 = vld [vmem:[%s3 + $0x28] sm:$0xff]
  %v1288 = vld [vmem:[%s3 + $0x30] sm:$0xff]
  %v1289 = vld [vmem:[%s3 + $0x38] sm:$0xff]
  %v1290 = vld [vmem:[%s3 + $0x40] sm:$0xff]
  %v1291 = vld [vmem:[%s3 + $0x48] sm:$0xff]
  %v1292 = vld [vmem:[%s3 + $0x50] sm:$0xff]
  %v1293 = vld [vmem:[%s3 + $0x58] sm:$0xff]
  %v1294 = vld [vmem:[%s3 + $0x60] sm:$0xff]
  %v1295 = vld [vmem:[%s3 + $0x68] sm:$0xff]
  %v1296 = vld [vmem:[%s3 + $0x70] sm:$0xff]
  %v1297 = vld [vmem:[%s3 + $0x78] sm:$0xff]
  %1298 = vmatpush.msra.mxu0 %v1297
  %1299 = vmatpush.msra.mxu0 %v1296
  %1300 = vmatpush.msra.mxu0 %v1295
  %1301 = vmatpush.msra.mxu0 %v1294
  %1302 = vmatpush.msra.mxu0 %v1293
  %1303 = vmatpush.msra.mxu0 %v1292
  %1304 = vmatpush.msra.mxu0 %v1291
  %1305 = vmatpush.msra.mxu0 %v1290
  %1306 = vmatpush.msra.mxu0 %v1289
  %1307 = vmatpush.msra.mxu0 %v1288
  %1308 = vmatpush.msra.mxu0 %v1287
  %1309 = vmatpush.msra.mxu0 %v1286
  %1310 = vmatpush.msra.mxu0 %v1285
  %1311 = vmatpush.msra.mxu0 %v1284
  %1312 = vmatpush.msra.mxu0 %v1283
  %1313 = vmatpush.msra.mxu0 %v1282
  %1314 = vmatmul.f32.gmra.mxu0 %v1266
  %v1315 = vpop.f32.mrf.mxu0
  %v1316 = vadd.f32 0.0, %v1315
  %1317 = vmatmul.f32.gmra.mxu0 %v1267
  %v1318 = vpop.f32.mrf.mxu0
  %v1319 = vadd.f32 0.0, %v1318
  %1320 = vmatmul.f32.gmra.mxu0 %v1268
  %v1321 = vpop.f32.mrf.mxu0
  %v1322 = vadd.f32 0.0, %v1321
  %1323 = vmatmul.f32.gmra.mxu0 %v1269
  %v1324 = vpop.f32.mrf.mxu0
  %v1325 = vadd.f32 0.0, %v1324
  %1326 = vmatmul.f32.gmra.mxu0 %v1270
  %v1327 = vpop.f32.mrf.mxu0
  %v1328 = vadd.f32 0.0, %v1327
  %1329 = vmatmul.f32.gmra.mxu0 %v1271
  %v1330 = vpop.f32.mrf.mxu0
  %v1331 = vadd.f32 0.0, %v1330
  %1332 = vmatmul.f32.gmra.mxu0 %v1272
  %v1333 = vpop.f32.mrf.mxu0
  %v1334 = vadd.f32 0.0, %v1333
  %1335 = vmatmul.f32.gmra.mxu0 %v1273
  %v1336 = vpop.f32.mrf.mxu0
  %v1337 = vadd.f32 0.0, %v1336
  %1338 = vmatmul.f32.gmra.mxu0 %v1274
  %v1339 = vpop.f32.mrf.mxu0
  %v1340 = vadd.f32 0.0, %v1339
  %1341 = vmatmul.f32.gmra.mxu0 %v1275
  %v1342 = vpop.f32.mrf.mxu0
  %v1343 = vadd.f32 0.0, %v1342
  %1344 = vmatmul.f32.gmra.mxu0 %v1276
  %v1345 = vpop.f32.mrf.mxu0
  %v1346 = vadd.f32 0.0, %v1345
  %1347 = vmatmul.f32.gmra.mxu0 %v1277
  %v1348 = vpop.f32.mrf.mxu0
  %v1349 = vadd.f32 0.0, %v1348
  %1350 = vmatmul.f32.gmra.mxu0 %v1278
  %v1351 = vpop.f32.mrf.mxu0
  %v1352 = vadd.f32 0.0, %v1351
  %1353 = vmatmul.f32.gmra.mxu0 %v1279
  %v1354 = vpop.f32.mrf.mxu0
  %v1355 = vadd.f32 0.0, %v1354
  %1356 = vmatmul.f32.gmra.mxu0 %v1280
  %v1357 = vpop.f32.mrf.mxu0
  %v1358 = vadd.f32 0.0, %v1357
  %1359 = vmatmul.f32.gmra.mxu0 %v1281
  %v1360 = vpop.f32.mrf.mxu0
  %v1361 = vadd.f32 0.0, %v1360
  %1362 = vdwg.mxu0
  %v1363 = vadd.f32 %v1264, %v1316
  %v1364 = vadd.f32 %v1264, %v1319
  %v1365 = vadd.f32 %v1264, %v1322
  %v1366 = vadd.f32 %v1264, %v1325
  %v1367 = vadd.f32 %v1264, %v1328
  %v1368 = vadd.f32 %v1264, %v1331
  %v1369 = vadd.f32 %v1264, %v1334
  %v1370 = vadd.f32 %v1264, %v1337
  %v1371 = vadd.f32 %v1264, %v1340
  %v1372 = vadd.f32 %v1264, %v1343
  %v1373 = vadd.f32 %v1264, %v1346
  %v1374 = vadd.f32 %v1264, %v1349
  %v1375 = vadd.f32 %v1264, %v1352
  %v1376 = vadd.f32 %v1264, %v1355
  %v1377 = vadd.f32 %v1264, %v1358
  %v1378 = vadd.f32 %v1264, %v1361
  %s1379 = scalar_lea.vmem [#allocation2], 8
  %v1380 = vld [vmem:[%s1379] sm:$0xff]
  %v1381 = vld [vmem:[%s1379 + $0x8] sm:$0xff]
  %v1382 = vld [vmem:[%s1379 + $0x10] sm:$0xff]
  %v1383 = vld [vmem:[%s1379 + $0x18] sm:$0xff]
  %v1384 = vld [vmem:[%s1379 + $0x28] sm:$0xff]
  %v1385 = vld [vmem:[%s1379 + $0x30] sm:$0xff]
  %v1386 = vld [vmem:[%s1379 + $0x38] sm:$0xff]
  %v1387 = vld [vmem:[%s1379 + $0x40] sm:$0xff]
  %v1388 = vld [vmem:[%s1379 + $0x50] sm:$0xff]
  %v1389 = vld [vmem:[%s1379 + $0x58] sm:$0xff]
  %v1390 = vld [vmem:[%s1379 + $0x60] sm:$0xff]
  %v1391 = vld [vmem:[%s1379 + $0x68] sm:$0xff]
  %v1392 = vld [vmem:[%s1379 + $0x78] sm:$0xff]
  %v1393 = vld [vmem:[%s1379 + $0x80] sm:$0xff]
  %v1394 = vld [vmem:[%s1379 + $0x88] sm:$0xff]
  %v1395 = vld [vmem:[%s1379 + $0x90] sm:$0xff]
  %s1396 = scalar_lea.vmem %s3, 128
  %v1397 = vld [vmem:[%s1396] sm:$0xff]
  %v1398 = vld [vmem:[%s1396 + $0x8] sm:$0xff]
  %v1399 = vld [vmem:[%s1396 + $0x10] sm:$0xff]
  %v1400 = vld [vmem:[%s1396 + $0x18] sm:$0xff]
  %v1401 = vld [vmem:[%s1396 + $0x20] sm:$0xff]
  %v1402 = vld [vmem:[%s1396 + $0x28] sm:$0xff]
  %v1403 = vld [vmem:[%s1396 + $0x30] sm:$0xff]
  %v1404 = vld [vmem:[%s1396 + $0x38] sm:$0xff]
  %v1405 = vld [vmem:[%s1396 + $0x40] sm:$0xff]
  %v1406 = vld [vmem:[%s1396 + $0x48] sm:$0xff]
  %v1407 = vld [vmem:[%s1396 + $0x50] sm:$0xff]
  %v1408 = vld [vmem:[%s1396 + $0x58] sm:$0xff]
  %v1409 = vld [vmem:[%s1396 + $0x60] sm:$0xff]
  %v1410 = vld [vmem:[%s1396 + $0x68] sm:$0xff]
  %v1411 = vld [vmem:[%s1396 + $0x70] sm:$0xff]
  %v1412 = vld [vmem:[%s1396 + $0x78] sm:$0xff]
  %1413 = vmatpush.msra.mxu0 %v1412
  %1414 = vmatpush.msra.mxu0 %v1411
  %1415 = vmatpush.msra.mxu0 %v1410
  %1416 = vmatpush.msra.mxu0 %v1409
  %1417 = vmatpush.msra.mxu0 %v1408
  %1418 = vmatpush.msra.mxu0 %v1407
  %1419 = vmatpush.msra.mxu0 %v1406
  %1420 = vmatpush.msra.mxu0 %v1405
  %1421 = vmatpush.msra.mxu0 %v1404
  %1422 = vmatpush.msra.mxu0 %v1403
  %1423 = vmatpush.msra.mxu0 %v1402
  %1424 = vmatpush.msra.mxu0 %v1401
  %1425 = vmatpush.msra.mxu0 %v1400
  %1426 = vmatpush.msra.mxu0 %v1399
  %1427 = vmatpush.msra.mxu0 %v1398
  %1428 = vmatpush.msra.mxu0 %v1397
  %1429 = vmatmul.f32.gmra.mxu0 %v1380
  %v1430 = vpop.f32.mrf.mxu0
  %v1431 = vadd.f32 0.0, %v1430
  %1432 = vmatmul.f32.gmra.mxu0 %v1381
  %v1433 = vpop.f32.mrf.mxu0
  %v1434 = vadd.f32 0.0, %v1433
  %1435 = vmatmul.f32.gmra.mxu0 %v1382
  %v1436 = vpop.f32.mrf.mxu0
  %v1437 = vadd.f32 0.0, %v1436
  %1438 = vmatmul.f32.gmra.mxu0 %v1383
  %v1439 = vpop.f32.mrf.mxu0
  %v1440 = vadd.f32 0.0, %v1439
  %1441 = vmatmul.f32.gmra.mxu0 %v1384
  %v1442 = vpop.f32.mrf.mxu0
  %v1443 = vadd.f32 0.0, %v1442
  %1444 = vmatmul.f32.gmra.mxu0 %v1385
  %v1445 = vpop.f32.mrf.mxu0
  %v1446 = vadd.f32 0.0, %v1445
  %1447 = vmatmul.f32.gmra.mxu0 %v1386
  %v1448 = vpop.f32.mrf.mxu0
  %v1449 = vadd.f32 0.0, %v1448
  %1450 = vmatmul.f32.gmra.mxu0 %v1387
  %v1451 = vpop.f32.mrf.mxu0
  %v1452 = vadd.f32 0.0, %v1451
  %1453 = vmatmul.f32.gmra.mxu0 %v1388
  %v1454 = vpop.f32.mrf.mxu0
  %v1455 = vadd.f32 0.0, %v1454
  %1456 = vmatmul.f32.gmra.mxu0 %v1389
  %v1457 = vpop.f32.mrf.mxu0
  %v1458 = vadd.f32 0.0, %v1457
  %1459 = vmatmul.f32.gmra.mxu0 %v1390
  %v1460 = vpop.f32.mrf.mxu0
  %v1461 = vadd.f32 0.0, %v1460
  %1462 = vmatmul.f32.gmra.mxu0 %v1391
  %v1463 = vpop.f32.mrf.mxu0
  %v1464 = vadd.f32 0.0, %v1463
  %1465 = vmatmul.f32.gmra.mxu0 %v1392
  %v1466 = vpop.f32.mrf.mxu0
  %v1467 = vadd.f32 0.0, %v1466
  %1468 = vmatmul.f32.gmra.mxu0 %v1393
  %v1469 = vpop.f32.mrf.mxu0
  %v1470 = vadd.f32 0.0, %v1469
  %1471 = vmatmul.f32.gmra.mxu0 %v1394
  %v1472 = vpop.f32.mrf.mxu0
  %v1473 = vadd.f32 0.0, %v1472
  %1474 = vmatmul.f32.gmra.mxu0 %v1395
  %v1475 = vpop.f32.mrf.mxu0
  %v1476 = vadd.f32 0.0, %v1475
  %1477 = vdwg.mxu0
  %v1478 = vadd.f32 %v1363, %v1431
  %v1479 = vadd.f32 %v1364, %v1434
  %v1480 = vadd.f32 %v1365, %v1437
  %v1481 = vadd.f32 %v1366, %v1440
  %v1482 = vadd.f32 %v1367, %v1443
  %v1483 = vadd.f32 %v1368, %v1446
  %v1484 = vadd.f32 %v1369, %v1449
  %v1485 = vadd.f32 %v1370, %v1452
  %v1486 = vadd.f32 %v1371, %v1455
  %v1487 = vadd.f32 %v1372, %v1458
  %v1488 = vadd.f32 %v1373, %v1461
  %v1489 = vadd.f32 %v1374, %v1464
  %v1490 = vadd.f32 %v1375, %v1467
  %v1491 = vadd.f32 %v1376, %v1470
  %v1492 = vadd.f32 %v1377, %v1473
  %v1493 = vadd.f32 %v1378, %v1476
  %s1494 = scalar_lea.vmem [#allocation2], 40
  %v1495 = vld [vmem:[%s1494] sm:$0xff]
  %v1496 = vld [vmem:[%s1494 + $0x8] sm:$0xff]
  %v1497 = vld [vmem:[%s1494 + $0x10] sm:$0xff]
  %v1498 = vld [vmem:[%s1494 + $0x18] sm:$0xff]
  %v1499 = vld [vmem:[%s1494 + $0x28] sm:$0xff]
  %v1500 = vld [vmem:[%s1494 + $0x30] sm:$0xff]
  %v1501 = vld [vmem:[%s1494 + $0x38] sm:$0xff]
  %v1502 = vld [vmem:[%s1494 + $0x40] sm:$0xff]
  %v1503 = vld [vmem:[%s1494 + $0x50] sm:$0xff]
  %v1504 = vld [vmem:[%s1494 + $0x58] sm:$0xff]
  %v1505 = vld [vmem:[%s1494 + $0x60] sm:$0xff]
  %v1506 = vld [vmem:[%s1494 + $0x68] sm:$0xff]
  %v1507 = vld [vmem:[%s1494 + $0x78] sm:$0xff]
  %v1508 = vld [vmem:[%s1494 + $0x80] sm:$0xff]
  %v1509 = vld [vmem:[%s1494 + $0x88] sm:$0xff]
  %v1510 = vld [vmem:[%s1494 + $0x90] sm:$0xff]
  %s1511 = scalar_lea.vmem %s3, 256
  %v1512 = vld [vmem:[%s1511] sm:$0xff]
  %v1513 = vld [vmem:[%s1511 + $0x8] sm:$0xff]
  %v1514 = vld [vmem:[%s1511 + $0x10] sm:$0xff]
  %v1515 = vld [vmem:[%s1511 + $0x18] sm:$0xff]
  %v1516 = vld [vmem:[%s1511 + $0x20] sm:$0xff]
  %v1517 = vld [vmem:[%s1511 + $0x28] sm:$0xff]
  %v1518 = vld [vmem:[%s1511 + $0x30] sm:$0xff]
  %v1519 = vld [vmem:[%s1511 + $0x38] sm:$0xff]
  %v1520 = vld [vmem:[%s1511 + $0x40] sm:$0xff]
  %v1521 = vld [vmem:[%s1511 + $0x48] sm:$0xff]
  %v1522 = vld [vmem:[%s1511 + $0x50] sm:$0xff]
  %v1523 = vld [vmem:[%s1511 + $0x58] sm:$0xff]
  %v1524 = vld [vmem:[%s1511 + $0x60] sm:$0xff]
  %v1525 = vld [vmem:[%s1511 + $0x68] sm:$0xff]
  %v1526 = vld [vmem:[%s1511 + $0x70] sm:$0xff]
  %v1527 = vld [vmem:[%s1511 + $0x78] sm:$0xff]
  %1528 = vmatpush.msra.mxu0 %v1527
  %1529 = vmatpush.msra.mxu0 %v1526
  %1530 = vmatpush.msra.mxu0 %v1525
  %1531 = vmatpush.msra.mxu0 %v1524
  %1532 = vmatpush.msra.mxu0 %v1523
  %1533 = vmatpush.msra.mxu0 %v1522
  %1534 = vmatpush.msra.mxu0 %v1521
  %1535 = vmatpush.msra.mxu0 %v1520
  %1536 = vmatpush.msra.mxu0 %v1519
  %1537 = vmatpush.msra.mxu0 %v1518
  %1538 = vmatpush.msra.mxu0 %v1517
  %1539 = vmatpush.msra.mxu0 %v1516
  %1540 = vmatpush.msra.mxu0 %v1515
  %1541 = vmatpush.msra.mxu0 %v1514
  %1542 = vmatpush.msra.mxu0 %v1513
  %1543 = vmatpush.msra.mxu0 %v1512
  %1544 = vmatmul.f32.gmra.mxu0 %v1495
  %v1545 = vpop.f32.mrf.mxu0
  %v1546 = vadd.f32 0.0, %v1545
  %1547 = vmatmul.f32.gmra.mxu0 %v1496
  %v1548 = vpop.f32.mrf.mxu0
  %v1549 = vadd.f32 0.0, %v1548
  %1550 = vmatmul.f32.gmra.mxu0 %v1497
  %v1551 = vpop.f32.mrf.mxu0
  %v1552 = vadd.f32 0.0, %v1551
  %1553 = vmatmul.f32.gmra.mxu0 %v1498
  %v1554 = vpop.f32.mrf.mxu0
  %v1555 = vadd.f32 0.0, %v1554
  %1556 = vmatmul.f32.gmra.mxu0 %v1499
  %v1557 = vpop.f32.mrf.mxu0
  %v1558 = vadd.f32 0.0, %v1557
  %1559 = vmatmul.f32.gmra.mxu0 %v1500
  %v1560 = vpop.f32.mrf.mxu0
  %v1561 = vadd.f32 0.0, %v1560
  %1562 = vmatmul.f32.gmra.mxu0 %v1501
  %v1563 = vpop.f32.mrf.mxu0
  %v1564 = vadd.f32 0.0, %v1563
  %1565 = vmatmul.f32.gmra.mxu0 %v1502
  %v1566 = vpop.f32.mrf.mxu0
  %v1567 = vadd.f32 0.0, %v1566
  %1568 = vmatmul.f32.gmra.mxu0 %v1503
  %v1569 = vpop.f32.mrf.mxu0
  %v1570 = vadd.f32 0.0, %v1569
  %1571 = vmatmul.f32.gmra.mxu0 %v1504
  %v1572 = vpop.f32.mrf.mxu0
  %v1573 = vadd.f32 0.0, %v1572
  %1574 = vmatmul.f32.gmra.mxu0 %v1505
  %v1575 = vpop.f32.mrf.mxu0
  %v1576 = vadd.f32 0.0, %v1575
  %1577 = vmatmul.f32.gmra.mxu0 %v1506
  %v1578 = vpop.f32.mrf.mxu0
  %v1579 = vadd.f32 0.0, %v1578
  %1580 = vmatmul.f32.gmra.mxu0 %v1507
  %v1581 = vpop.f32.mrf.mxu0
  %v1582 = vadd.f32 0.0, %v1581
  %1583 = vmatmul.f32.gmra.mxu0 %v1508
  %v1584 = vpop.f32.mrf.mxu0
  %v1585 = vadd.f32 0.0, %v1584
  %1586 = vmatmul.f32.gmra.mxu0 %v1509
  %v1587 = vpop.f32.mrf.mxu0
  %v1588 = vadd.f32 0.0, %v1587
  %1589 = vmatmul.f32.gmra.mxu0 %v1510
  %v1590 = vpop.f32.mrf.mxu0
  %v1591 = vadd.f32 0.0, %v1590
  %1592 = vdwg.mxu0
  %v1593 = vadd.f32 %v1478, %v1546
  %v1594 = vadd.f32 %v1479, %v1549
  %v1595 = vadd.f32 %v1480, %v1552
  %v1596 = vadd.f32 %v1481, %v1555
  %v1597 = vadd.f32 %v1482, %v1558
  %v1598 = vadd.f32 %v1483, %v1561
  %v1599 = vadd.f32 %v1484, %v1564
  %v1600 = vadd.f32 %v1485, %v1567
  %v1601 = vadd.f32 %v1486, %v1570
  %v1602 = vadd.f32 %v1487, %v1573
  %v1603 = vadd.f32 %v1488, %v1576
  %v1604 = vadd.f32 %v1489, %v1579
  %v1605 = vadd.f32 %v1490, %v1582
  %v1606 = vadd.f32 %v1491, %v1585
  %v1607 = vadd.f32 %v1492, %v1588
  %v1608 = vadd.f32 %v1493, %v1591
  %s1609 = scalar_lea.vmem [#allocation2], 48
  %v1610 = vld [vmem:[%s1609] sm:$0xff]
  %v1611 = vld [vmem:[%s1609 + $0x8] sm:$0xff]
  %v1612 = vld [vmem:[%s1609 + $0x10] sm:$0xff]
  %v1613 = vld [vmem:[%s1609 + $0x18] sm:$0xff]
  %v1614 = vld [vmem:[%s1609 + $0x28] sm:$0xff]
  %v1615 = vld [vmem:[%s1609 + $0x30] sm:$0xff]
  %v1616 = vld [vmem:[%s1609 + $0x38] sm:$0xff]
  %v1617 = vld [vmem:[%s1609 + $0x40] sm:$0xff]
  %v1618 = vld [vmem:[%s1609 + $0x50] sm:$0xff]
  %v1619 = vld [vmem:[%s1609 + $0x58] sm:$0xff]
  %v1620 = vld [vmem:[%s1609 + $0x60] sm:$0xff]
  %v1621 = vld [vmem:[%s1609 + $0x68] sm:$0xff]
  %v1622 = vld [vmem:[%s1609 + $0x78] sm:$0xff]
  %v1623 = vld [vmem:[%s1609 + $0x80] sm:$0xff]
  %v1624 = vld [vmem:[%s1609 + $0x88] sm:$0xff]
  %v1625 = vld [vmem:[%s1609 + $0x90] sm:$0xff]
  %s1626 = scalar_lea.vmem %s3, 384
  %v1627 = vld [vmem:[%s1626] sm:$0xff]
  %v1628 = vld [vmem:[%s1626 + $0x8] sm:$0xff]
  %v1629 = vld [vmem:[%s1626 + $0x10] sm:$0xff]
  %v1630 = vld [vmem:[%s1626 + $0x18] sm:$0xff]
  %v1631 = vld [vmem:[%s1626 + $0x20] sm:$0xff]
  %v1632 = vld [vmem:[%s1626 + $0x28] sm:$0xff]
  %v1633 = vld [vmem:[%s1626 + $0x30] sm:$0xff]
  %v1634 = vld [vmem:[%s1626 + $0x38] sm:$0xff]
  %v1635 = vld [vmem:[%s1626 + $0x40] sm:$0xff]
  %v1636 = vld [vmem:[%s1626 + $0x48] sm:$0xff]
  %v1637 = vld [vmem:[%s1626 + $0x50] sm:$0xff]
  %v1638 = vld [vmem:[%s1626 + $0x58] sm:$0xff]
  %v1639 = vld [vmem:[%s1626 + $0x60] sm:$0xff]
  %v1640 = vld [vmem:[%s1626 + $0x68] sm:$0xff]
  %v1641 = vld [vmem:[%s1626 + $0x70] sm:$0xff]
  %v1642 = vld [vmem:[%s1626 + $0x78] sm:$0xff]
  %1643 = vmatpush.msra.mxu0 %v1642
  %1644 = vmatpush.msra.mxu0 %v1641
  %1645 = vmatpush.msra.mxu0 %v1640
  %1646 = vmatpush.msra.mxu0 %v1639
  %1647 = vmatpush.msra.mxu0 %v1638
  %1648 = vmatpush.msra.mxu0 %v1637
  %1649 = vmatpush.msra.mxu0 %v1636
  %1650 = vmatpush.msra.mxu0 %v1635
  %1651 = vmatpush.msra.mxu0 %v1634
  %1652 = vmatpush.msra.mxu0 %v1633
  %1653 = vmatpush.msra.mxu0 %v1632
  %1654 = vmatpush.msra.mxu0 %v1631
  %1655 = vmatpush.msra.mxu0 %v1630
  %1656 = vmatpush.msra.mxu0 %v1629
  %1657 = vmatpush.msra.mxu0 %v1628
  %1658 = vmatpush.msra.mxu0 %v1627
  %1659 = vmatmul.f32.gmra.mxu0 %v1610
  %v1660 = vpop.f32.mrf.mxu0
  %v1661 = vadd.f32 0.0, %v1660
  %1662 = vmatmul.f32.gmra.mxu0 %v1611
  %v1663 = vpop.f32.mrf.mxu0
  %v1664 = vadd.f32 0.0, %v1663
  %1665 = vmatmul.f32.gmra.mxu0 %v1612
  %v1666 = vpop.f32.mrf.mxu0
  %v1667 = vadd.f32 0.0, %v1666
  %1668 = vmatmul.f32.gmra.mxu0 %v1613
  %v1669 = vpop.f32.mrf.mxu0
  %v1670 = vadd.f32 0.0, %v1669
  %1671 = vmatmul.f32.gmra.mxu0 %v1614
  %v1672 = vpop.f32.mrf.mxu0
  %v1673 = vadd.f32 0.0, %v1672
  %1674 = vmatmul.f32.gmra.mxu0 %v1615
  %v1675 = vpop.f32.mrf.mxu0
  %v1676 = vadd.f32 0.0, %v1675
  %1677 = vmatmul.f32.gmra.mxu0 %v1616
  %v1678 = vpop.f32.mrf.mxu0
  %v1679 = vadd.f32 0.0, %v1678
  %1680 = vmatmul.f32.gmra.mxu0 %v1617
  %v1681 = vpop.f32.mrf.mxu0
  %v1682 = vadd.f32 0.0, %v1681
  %1683 = vmatmul.f32.gmra.mxu0 %v1618
  %v1684 = vpop.f32.mrf.mxu0
  %v1685 = vadd.f32 0.0, %v1684
  %1686 = vmatmul.f32.gmra.mxu0 %v1619
  %v1687 = vpop.f32.mrf.mxu0
  %v1688 = vadd.f32 0.0, %v1687
  %1689 = vmatmul.f32.gmra.mxu0 %v1620
  %v1690 = vpop.f32.mrf.mxu0
  %v1691 = vadd.f32 0.0, %v1690
  %1692 = vmatmul.f32.gmra.mxu0 %v1621
  %v1693 = vpop.f32.mrf.mxu0
  %v1694 = vadd.f32 0.0, %v1693
  %1695 = vmatmul.f32.gmra.mxu0 %v1622
  %v1696 = vpop.f32.mrf.mxu0
  %v1697 = vadd.f32 0.0, %v1696
  %1698 = vmatmul.f32.gmra.mxu0 %v1623
  %v1699 = vpop.f32.mrf.mxu0
  %v1700 = vadd.f32 0.0, %v1699
  %1701 = vmatmul.f32.gmra.mxu0 %v1624
  %v1702 = vpop.f32.mrf.mxu0
  %v1703 = vadd.f32 0.0, %v1702
  %1704 = vmatmul.f32.gmra.mxu0 %v1625
  %v1705 = vpop.f32.mrf.mxu0
  %v1706 = vadd.f32 0.0, %v1705
  %1707 = vdwg.mxu0
  %v1708 = vadd.f32 %v1593, %v1661
  %v1709 = vadd.f32 %v1594, %v1664
  %v1710 = vadd.f32 %v1595, %v1667
  %v1711 = vadd.f32 %v1596, %v1670
  %v1712 = vadd.f32 %v1597, %v1673
  %v1713 = vadd.f32 %v1598, %v1676
  %v1714 = vadd.f32 %v1599, %v1679
  %v1715 = vadd.f32 %v1600, %v1682
  %v1716 = vadd.f32 %v1601, %v1685
  %v1717 = vadd.f32 %v1602, %v1688
  %v1718 = vadd.f32 %v1603, %v1691
  %v1719 = vadd.f32 %v1604, %v1694
  %v1720 = vadd.f32 %v1605, %v1697
  %v1721 = vadd.f32 %v1606, %v1700
  %v1722 = vadd.f32 %v1607, %v1703
  %v1723 = vadd.f32 %v1608, %v1706
  %v1724 = vmax.f32 %v1708, 0.0
  %v1725 = vmax.f32 %v1709, 0.0
  %v1726 = vmax.f32 %v1710, 0.0
  %v1727 = vmax.f32 %v1711, 0.0
  %v1728 = vmax.f32 %v1712, 0.0
  %v1729 = vmax.f32 %v1713, 0.0
  %v1730 = vmax.f32 %v1714, 0.0
  %v1731 = vmax.f32 %v1715, 0.0
  %v1732 = vmax.f32 %v1716, 0.0
  %v1733 = vmax.f32 %v1717, 0.0
  %v1734 = vmax.f32 %v1718, 0.0
  %v1735 = vmax.f32 %v1719, 0.0
  %v1736 = vmax.f32 %v1720, 0.0
  %v1737 = vmax.f32 %v1721, 0.0
  %v1738 = vmax.f32 %v1722, 0.0
  %v1739 = vmax.f32 %v1723, 0.0
  %vm1740 = vcmask 523264
  %1741 = vst.msk [vmem:[#allocation3] sm:$0xff] %vm1740, %v1724
  %1742 = vst.msk [vmem:[#allocation3 + $0x8] sm:$0xff] %vm1740, %v1725
  %1743 = vst.msk [vmem:[#allocation3 + $0x10] sm:$0xff] %vm1740, %v1726
  %1744 = vst.msk [vmem:[#allocation3 + $0x18] sm:$0xff] %vm1740, %v1727
  %1745 = vst.msk [vmem:[#allocation3 + $0x20] sm:$0xff] %vm1740, %v1728
  %1746 = vst.msk [vmem:[#allocation3 + $0x28] sm:$0xff] %vm1740, %v1729
  %1747 = vst.msk [vmem:[#allocation3 + $0x30] sm:$0xff] %vm1740, %v1730
  %1748 = vst.msk [vmem:[#allocation3 + $0x38] sm:$0xff] %vm1740, %v1731
  %1749 = vst.msk [vmem:[#allocation3 + $0x40] sm:$0xff] %vm1740, %v1732
  %1750 = vst.msk [vmem:[#allocation3 + $0x48] sm:$0xff] %vm1740, %v1733
  %1751 = vst.msk [vmem:[#allocation3 + $0x50] sm:$0xff] %vm1740, %v1734
  %1752 = vst.msk [vmem:[#allocation3 + $0x58] sm:$0xff] %vm1740, %v1735
  %1753 = vst.msk [vmem:[#allocation3 + $0x60] sm:$0xff] %vm1740, %v1736
  %1754 = vst.msk [vmem:[#allocation3 + $0x68] sm:$0xff] %vm1740, %v1737
  %1755 = vst.msk [vmem:[#allocation3 + $0x70] sm:$0xff] %vm1740, %v1738
  %1756 = vst.msk [vmem:[#allocation3 + $0x78] sm:$0xff] %vm1740, %v1739
  %v1757 = vld [vmem:[%s6] sm:$0x1]
  %v1759 = vperm.slane %v1757, 0
  %v1761 = vld [vmem:[#allocation3] sm:$0xff]
  %v1762 = vld [vmem:[#allocation3 + $0x8] sm:$0xff]
  %v1763 = vld [vmem:[#allocation3 + $0x20] sm:$0xff]
  %v1764 = vld [vmem:[#allocation3 + $0x28] sm:$0xff]
  %v1765 = vld [vmem:[%s5] sm:$0xff]
  %v1766 = vld [vmem:[%s5 + $0x8] sm:$0xff]
  %v1767 = vld [vmem:[%s5 + $0x10] sm:$0xff]
  %v1768 = vld [vmem:[%s5 + $0x18] sm:$0xff]
  %v1769 = vld [vmem:[%s5 + $0x20] sm:$0xff]
  %v1770 = vld [vmem:[%s5 + $0x28] sm:$0xff]
  %v1771 = vld [vmem:[%s5 + $0x30] sm:$0xff]
  %v1772 = vld [vmem:[%s5 + $0x38] sm:$0xff]
  %v1774 = vsel %vm1740, %v1761, 0
  %v1777 = vsel %vm1740, %v1762, 0
  %v1780 = vsel %vm1740, %v1763, 0
  %v1783 = vsel %vm1740, %v1764, 0
  %1785 = vmatpush.msra.mxu0 0.0
  %1786 = vmatpush.msra.mxu0 0.0
  %1787 = vmatpush.msra.mxu0 0.0
  %1788 = vmatpush.msra.mxu0 0.0
  %1789 = vmatpush.msra.mxu0 0.0
  %1790 = vmatpush.msra.mxu0 0.0
  %1791 = vmatpush.msra.mxu0 0.0
  %1792 = vmatpush.msra.mxu0 0.0
  %1793 = vmatpush.msra.mxu0 %v1772
  %1794 = vmatpush.msra.mxu0 %v1771
  %1795 = vmatpush.msra.mxu0 %v1770
  %1796 = vmatpush.msra.mxu0 %v1769
  %1797 = vmatpush.msra.mxu0 %v1768
  %1798 = vmatpush.msra.mxu0 %v1767
  %1799 = vmatpush.msra.mxu0 %v1766
  %1800 = vmatpush.msra.mxu0 %v1765
  %1801 = vmatmul.f32.gmra.mxu0 %v1774
  %v1802 = vpop.f32.mrf.mxu0
  %v1803 = vadd.f32 0.0, %v1802
  %1804 = vmatmul.f32.gmra.mxu0 %v1777
  %v1805 = vpop.f32.mrf.mxu0
  %v1806 = vadd.f32 0.0, %v1805
  %1807 = vmatmul.f32.gmra.mxu0 %v1780
  %v1808 = vpop.f32.mrf.mxu0
  %v1809 = vadd.f32 0.0, %v1808
  %1810 = vmatmul.f32.gmra.mxu0 %v1783
  %v1811 = vpop.f32.mrf.mxu0
  %v1812 = vadd.f32 0.0, %v1811
  %1813 = vdwg.mxu0
  %v1814 = vadd.f32 %v1759, %v1803
  %v1815 = vadd.f32 %v1759, %v1806
  %v1816 = vadd.f32 %v1759, %v1809
  %v1817 = vadd.f32 %v1759, %v1812
  %s1818 = scalar_lea.vmem [#allocation3], 8
  %v1819 = vld [vmem:[%s1818] sm:$0xff]
  %v1820 = vld [vmem:[%s1818 + $0x8] sm:$0xff]
  %v1821 = vld [vmem:[%s1818 + $0x20] sm:$0xff]
  %v1822 = vld [vmem:[%s1818 + $0x28] sm:$0xff]
  %s1823 = scalar_lea.vmem %s5, 64
  %v1824 = vld [vmem:[%s1823] sm:$0xff]
  %v1825 = vld [vmem:[%s1823 + $0x8] sm:$0xff]
  %v1826 = vld [vmem:[%s1823 + $0x10] sm:$0xff]
  %v1827 = vld [vmem:[%s1823 + $0x18] sm:$0xff]
  %v1828 = vld [vmem:[%s1823 + $0x20] sm:$0xff]
  %v1829 = vld [vmem:[%s1823 + $0x28] sm:$0xff]
  %v1830 = vld [vmem:[%s1823 + $0x30] sm:$0xff]
  %v1831 = vld [vmem:[%s1823 + $0x38] sm:$0xff]
  %v1833 = vsel %vm1740, %v1819, 0
  %v1836 = vsel %vm1740, %v1820, 0
  %v1839 = vsel %vm1740, %v1821, 0
  %v1842 = vsel %vm1740, %v1822, 0
  %1844 = vmatpush.msra.mxu0 0.0
  %1845 = vmatpush.msra.mxu0 0.0
  %1846 = vmatpush.msra.mxu0 0.0
  %1847 = vmatpush.msra.mxu0 0.0
  %1848 = vmatpush.msra.mxu0 0.0
  %1849 = vmatpush.msra.mxu0 0.0
  %1850 = vmatpush.msra.mxu0 0.0
  %1851 = vmatpush.msra.mxu0 0.0
  %1852 = vmatpush.msra.mxu0 %v1831
  %1853 = vmatpush.msra.mxu0 %v1830
  %1854 = vmatpush.msra.mxu0 %v1829
  %1855 = vmatpush.msra.mxu0 %v1828
  %1856 = vmatpush.msra.mxu0 %v1827
  %1857 = vmatpush.msra.mxu0 %v1826
  %1858 = vmatpush.msra.mxu0 %v1825
  %1859 = vmatpush.msra.mxu0 %v1824
  %1860 = vmatmul.f32.gmra.mxu0 %v1833
  %v1861 = vpop.f32.mrf.mxu0
  %v1862 = vadd.f32 0.0, %v1861
  %1863 = vmatmul.f32.gmra.mxu0 %v1836
  %v1864 = vpop.f32.mrf.mxu0
  %v1865 = vadd.f32 0.0, %v1864
  %1866 = vmatmul.f32.gmra.mxu0 %v1839
  %v1867 = vpop.f32.mrf.mxu0
  %v1868 = vadd.f32 0.0, %v1867
  %1869 = vmatmul.f32.gmra.mxu0 %v1842
  %v1870 = vpop.f32.mrf.mxu0
  %v1871 = vadd.f32 0.0, %v1870
  %1872 = vdwg.mxu0
  %v1873 = vadd.f32 %v1814, %v1862
  %v1874 = vadd.f32 %v1815, %v1865
  %v1875 = vadd.f32 %v1816, %v1868
  %v1876 = vadd.f32 %v1817, %v1871
  %s1877 = scalar_lea.vmem [#allocation3], 16
  %v1878 = vld [vmem:[%s1877] sm:$0xff]
  %v1879 = vld [vmem:[%s1877 + $0x8] sm:$0xff]
  %v1880 = vld [vmem:[%s1877 + $0x20] sm:$0xff]
  %v1881 = vld [vmem:[%s1877 + $0x28] sm:$0xff]
  %s1882 = scalar_lea.vmem %s5, 128
  %v1883 = vld [vmem:[%s1882] sm:$0xff]
  %v1884 = vld [vmem:[%s1882 + $0x8] sm:$0xff]
  %v1885 = vld [vmem:[%s1882 + $0x10] sm:$0xff]
  %v1886 = vld [vmem:[%s1882 + $0x18] sm:$0xff]
  %v1887 = vld [vmem:[%s1882 + $0x20] sm:$0xff]
  %v1888 = vld [vmem:[%s1882 + $0x28] sm:$0xff]
  %v1889 = vld [vmem:[%s1882 + $0x30] sm:$0xff]
  %v1890 = vld [vmem:[%s1882 + $0x38] sm:$0xff]
  %v1892 = vsel %vm1740, %v1878, 0
  %v1895 = vsel %vm1740, %v1879, 0
  %v1898 = vsel %vm1740, %v1880, 0
  %v1901 = vsel %vm1740, %v1881, 0
  %1903 = vmatpush.msra.mxu0 0.0
  %1904 = vmatpush.msra.mxu0 0.0
  %1905 = vmatpush.msra.mxu0 0.0
  %1906 = vmatpush.msra.mxu0 0.0
  %1907 = vmatpush.msra.mxu0 0.0
  %1908 = vmatpush.msra.mxu0 0.0
  %1909 = vmatpush.msra.mxu0 0.0
  %1910 = vmatpush.msra.mxu0 0.0
  %1911 = vmatpush.msra.mxu0 %v1890
  %1912 = vmatpush.msra.mxu0 %v1889
  %1913 = vmatpush.msra.mxu0 %v1888
  %1914 = vmatpush.msra.mxu0 %v1887
  %1915 = vmatpush.msra.mxu0 %v1886
  %1916 = vmatpush.msra.mxu0 %v1885
  %1917 = vmatpush.msra.mxu0 %v1884
  %1918 = vmatpush.msra.mxu0 %v1883
  %1919 = vmatmul.f32.gmra.mxu0 %v1892
  %v1920 = vpop.f32.mrf.mxu0
  %v1921 = vadd.f32 0.0, %v1920
  %1922 = vmatmul.f32.gmra.mxu0 %v1895
  %v1923 = vpop.f32.mrf.mxu0
  %v1924 = vadd.f32 0.0, %v1923
  %1925 = vmatmul.f32.gmra.mxu0 %v1898
  %v1926 = vpop.f32.mrf.mxu0
  %v1927 = vadd.f32 0.0, %v1926
  %1928 = vmatmul.f32.gmra.mxu0 %v1901
  %v1929 = vpop.f32.mrf.mxu0
  %v1930 = vadd.f32 0.0, %v1929
  %1931 = vdwg.mxu0
  %v1932 = vadd.f32 %v1873, %v1921
  %v1933 = vadd.f32 %v1874, %v1924
  %v1934 = vadd.f32 %v1875, %v1927
  %v1935 = vadd.f32 %v1876, %v1930
  %s1936 = scalar_lea.vmem [#allocation3], 32
  %v1937 = vld [vmem:[%s1936] sm:$0xff]
  %v1938 = vld [vmem:[%s1936 + $0x8] sm:$0xff]
  %v1939 = vld [vmem:[%s1936 + $0x20] sm:$0xff]
  %v1940 = vld [vmem:[%s1936 + $0x28] sm:$0xff]
  %s1941 = scalar_lea.vmem %s5, 192
  %v1942 = vld [vmem:[%s1941] sm:$0xff]
  %v1943 = vld [vmem:[%s1941 + $0x8] sm:$0xff]
  %v1944 = vld [vmem:[%s1941 + $0x10] sm:$0xff]
  %v1945 = vld [vmem:[%s1941 + $0x18] sm:$0xff]
  %v1946 = vld [vmem:[%s1941 + $0x20] sm:$0xff]
  %v1947 = vld [vmem:[%s1941 + $0x28] sm:$0xff]
  %v1948 = vld [vmem:[%s1941 + $0x30] sm:$0xff]
  %v1949 = vld [vmem:[%s1941 + $0x38] sm:$0xff]
  %v1951 = vsel %vm1740, %v1937, 0
  %v1954 = vsel %vm1740, %v1938, 0
  %v1957 = vsel %vm1740, %v1939, 0
  %v1960 = vsel %vm1740, %v1940, 0
  %1962 = vmatpush.msra.mxu0 0.0
  %1963 = vmatpush.msra.mxu0 0.0
  %1964 = vmatpush.msra.mxu0 0.0
  %1965 = vmatpush.msra.mxu0 0.0
  %1966 = vmatpush.msra.mxu0 0.0
  %1967 = vmatpush.msra.mxu0 0.0
  %1968 = vmatpush.msra.mxu0 0.0
  %1969 = vmatpush.msra.mxu0 0.0
  %1970 = vmatpush.msra.mxu0 %v1949
  %1971 = vmatpush.msra.mxu0 %v1948
  %1972 = vmatpush.msra.mxu0 %v1947
  %1973 = vmatpush.msra.mxu0 %v1946
  %1974 = vmatpush.msra.mxu0 %v1945
  %1975 = vmatpush.msra.mxu0 %v1944
  %1976 = vmatpush.msra.mxu0 %v1943
  %1977 = vmatpush.msra.mxu0 %v1942
  %1978 = vmatmul.f32.gmra.mxu0 %v1951
  %v1979 = vpop.f32.mrf.mxu0
  %v1980 = vadd.f32 0.0, %v1979
  %1981 = vmatmul.f32.gmra.mxu0 %v1954
  %v1982 = vpop.f32.mrf.mxu0
  %v1983 = vadd.f32 0.0, %v1982
  %1984 = vmatmul.f32.gmra.mxu0 %v1957
  %v1985 = vpop.f32.mrf.mxu0
  %v1986 = vadd.f32 0.0, %v1985
  %1987 = vmatmul.f32.gmra.mxu0 %v1960
  %v1988 = vpop.f32.mrf.mxu0
  %v1989 = vadd.f32 0.0, %v1988
  %1990 = vdwg.mxu0
  %v1991 = vadd.f32 %v1932, %v1980
  %v1992 = vadd.f32 %v1933, %v1983
  %v1993 = vadd.f32 %v1934, %v1986
  %v1994 = vadd.f32 %v1935, %v1989
  %s1995 = scalar_lea.vmem [#allocation3], 40
  %v1996 = vld [vmem:[%s1995] sm:$0xff]
  %v1997 = vld [vmem:[%s1995 + $0x8] sm:$0xff]
  %v1998 = vld [vmem:[%s1995 + $0x20] sm:$0xff]
  %v1999 = vld [vmem:[%s1995 + $0x28] sm:$0xff]
  %s2000 = scalar_lea.vmem %s5, 256
  %v2001 = vld [vmem:[%s2000] sm:$0xff]
  %v2002 = vld [vmem:[%s2000 + $0x8] sm:$0xff]
  %v2003 = vld [vmem:[%s2000 + $0x10] sm:$0xff]
  %v2004 = vld [vmem:[%s2000 + $0x18] sm:$0xff]
  %v2005 = vld [vmem:[%s2000 + $0x20] sm:$0xff]
  %v2006 = vld [vmem:[%s2000 + $0x28] sm:$0xff]
  %v2007 = vld [vmem:[%s2000 + $0x30] sm:$0xff]
  %v2008 = vld [vmem:[%s2000 + $0x38] sm:$0xff]
  %v2010 = vsel %vm1740, %v1996, 0
  %v2013 = vsel %vm1740, %v1997, 0
  %v2016 = vsel %vm1740, %v1998, 0
  %v2019 = vsel %vm1740, %v1999, 0
  %2021 = vmatpush.msra.mxu0 0.0
  %2022 = vmatpush.msra.mxu0 0.0
  %2023 = vmatpush.msra.mxu0 0.0
  %2024 = vmatpush.msra.mxu0 0.0
  %2025 = vmatpush.msra.mxu0 0.0
  %2026 = vmatpush.msra.mxu0 0.0
  %2027 = vmatpush.msra.mxu0 0.0
  %2028 = vmatpush.msra.mxu0 0.0
  %2029 = vmatpush.msra.mxu0 %v2008
  %2030 = vmatpush.msra.mxu0 %v2007
  %2031 = vmatpush.msra.mxu0 %v2006
  %2032 = vmatpush.msra.mxu0 %v2005
  %2033 = vmatpush.msra.mxu0 %v2004
  %2034 = vmatpush.msra.mxu0 %v2003
  %2035 = vmatpush.msra.mxu0 %v2002
  %2036 = vmatpush.msra.mxu0 %v2001
  %2037 = vmatmul.f32.gmra.mxu0 %v2010
  %v2038 = vpop.f32.mrf.mxu0
  %v2039 = vadd.f32 0.0, %v2038
  %2040 = vmatmul.f32.gmra.mxu0 %v2013
  %v2041 = vpop.f32.mrf.mxu0
  %v2042 = vadd.f32 0.0, %v2041
  %2043 = vmatmul.f32.gmra.mxu0 %v2016
  %v2044 = vpop.f32.mrf.mxu0
  %v2045 = vadd.f32 0.0, %v2044
  %2046 = vmatmul.f32.gmra.mxu0 %v2019
  %v2047 = vpop.f32.mrf.mxu0
  %v2048 = vadd.f32 0.0, %v2047
  %2049 = vdwg.mxu0
  %v2050 = vadd.f32 %v1991, %v2039
  %v2051 = vadd.f32 %v1992, %v2042
  %v2052 = vadd.f32 %v1993, %v2045
  %v2053 = vadd.f32 %v1994, %v2048
  %s2054 = scalar_lea.vmem [#allocation3], 48
  %v2055 = vld [vmem:[%s2054] sm:$0xff]
  %v2056 = vld [vmem:[%s2054 + $0x8] sm:$0xff]
  %v2057 = vld [vmem:[%s2054 + $0x20] sm:$0xff]
  %v2058 = vld [vmem:[%s2054 + $0x28] sm:$0xff]
  %s2059 = scalar_lea.vmem %s5, 320
  %v2060 = vld [vmem:[%s2059] sm:$0xff]
  %v2061 = vld [vmem:[%s2059 + $0x8] sm:$0xff]
  %v2062 = vld [vmem:[%s2059 + $0x10] sm:$0xff]
  %v2063 = vld [vmem:[%s2059 + $0x18] sm:$0xff]
  %v2064 = vld [vmem:[%s2059 + $0x20] sm:$0xff]
  %v2065 = vld [vmem:[%s2059 + $0x28] sm:$0xff]
  %v2066 = vld [vmem:[%s2059 + $0x30] sm:$0xff]
  %v2067 = vld [vmem:[%s2059 + $0x38] sm:$0xff]
  %v2069 = vsel %vm1740, %v2055, 0
  %v2072 = vsel %vm1740, %v2056, 0
  %v2075 = vsel %vm1740, %v2057, 0
  %v2078 = vsel %vm1740, %v2058, 0
  %2080 = vmatpush.msra.mxu0 0.0
  %2081 = vmatpush.msra.mxu0 0.0
  %2082 = vmatpush.msra.mxu0 0.0
  %2083 = vmatpush.msra.mxu0 0.0
  %2084 = vmatpush.msra.mxu0 0.0
  %2085 = vmatpush.msra.mxu0 0.0
  %2086 = vmatpush.msra.mxu0 0.0
  %2087 = vmatpush.msra.mxu0 0.0
  %2088 = vmatpush.msra.mxu0 %v2067
  %2089 = vmatpush.msra.mxu0 %v2066
  %2090 = vmatpush.msra.mxu0 %v2065
  %2091 = vmatpush.msra.mxu0 %v2064
  %2092 = vmatpush.msra.mxu0 %v2063
  %2093 = vmatpush.msra.mxu0 %v2062
  %2094 = vmatpush.msra.mxu0 %v2061
  %2095 = vmatpush.msra.mxu0 %v2060
  %2096 = vmatmul.f32.gmra.mxu0 %v2069
  %v2097 = vpop.f32.mrf.mxu0
  %v2098 = vadd.f32 0.0, %v2097
  %2099 = vmatmul.f32.gmra.mxu0 %v2072
  %v2100 = vpop.f32.mrf.mxu0
  %v2101 = vadd.f32 0.0, %v2100
  %2102 = vmatmul.f32.gmra.mxu0 %v2075
  %v2103 = vpop.f32.mrf.mxu0
  %v2104 = vadd.f32 0.0, %v2103
  %2105 = vmatmul.f32.gmra.mxu0 %v2078
  %v2106 = vpop.f32.mrf.mxu0
  %v2107 = vadd.f32 0.0, %v2106
  %2108 = vdwg.mxu0
  %v2109 = vadd.f32 %v2050, %v2098
  %v2110 = vadd.f32 %v2051, %v2101
  %v2111 = vadd.f32 %v2052, %v2104
  %v2112 = vadd.f32 %v2053, %v2107
  %s2113 = scalar_lea.vmem [#allocation3], 64
  %v2114 = vld [vmem:[%s2113] sm:$0xff]
  %v2115 = vld [vmem:[%s2113 + $0x8] sm:$0xff]
  %v2116 = vld [vmem:[%s2113 + $0x20] sm:$0xff]
  %v2117 = vld [vmem:[%s2113 + $0x28] sm:$0xff]
  %s2118 = scalar_lea.vmem %s5, 384
  %v2119 = vld [vmem:[%s2118] sm:$0xff]
  %v2120 = vld [vmem:[%s2118 + $0x8] sm:$0xff]
  %v2121 = vld [vmem:[%s2118 + $0x10] sm:$0xff]
  %v2122 = vld [vmem:[%s2118 + $0x18] sm:$0xff]
  %v2123 = vld [vmem:[%s2118 + $0x20] sm:$0xff]
  %v2124 = vld [vmem:[%s2118 + $0x28] sm:$0xff]
  %v2125 = vld [vmem:[%s2118 + $0x30] sm:$0xff]
  %v2126 = vld [vmem:[%s2118 + $0x38] sm:$0xff]
  %v2128 = vsel %vm1740, %v2114, 0
  %v2131 = vsel %vm1740, %v2115, 0
  %v2134 = vsel %vm1740, %v2116, 0
  %v2137 = vsel %vm1740, %v2117, 0
  %2139 = vmatpush.msra.mxu0 0.0
  %2140 = vmatpush.msra.mxu0 0.0
  %2141 = vmatpush.msra.mxu0 0.0
  %2142 = vmatpush.msra.mxu0 0.0
  %2143 = vmatpush.msra.mxu0 0.0
  %2144 = vmatpush.msra.mxu0 0.0
  %2145 = vmatpush.msra.mxu0 0.0
  %2146 = vmatpush.msra.mxu0 0.0
  %2147 = vmatpush.msra.mxu0 %v2126
  %2148 = vmatpush.msra.mxu0 %v2125
  %2149 = vmatpush.msra.mxu0 %v2124
  %2150 = vmatpush.msra.mxu0 %v2123
  %2151 = vmatpush.msra.mxu0 %v2122
  %2152 = vmatpush.msra.mxu0 %v2121
  %2153 = vmatpush.msra.mxu0 %v2120
  %2154 = vmatpush.msra.mxu0 %v2119
  %2155 = vmatmul.f32.gmra.mxu0 %v2128
  %v2156 = vpop.f32.mrf.mxu0
  %v2157 = vadd.f32 0.0, %v2156
  %2158 = vmatmul.f32.gmra.mxu0 %v2131
  %v2159 = vpop.f32.mrf.mxu0
  %v2160 = vadd.f32 0.0, %v2159
  %2161 = vmatmul.f32.gmra.mxu0 %v2134
  %v2162 = vpop.f32.mrf.mxu0
  %v2163 = vadd.f32 0.0, %v2162
  %2164 = vmatmul.f32.gmra.mxu0 %v2137
  %v2165 = vpop.f32.mrf.mxu0
  %v2166 = vadd.f32 0.0, %v2165
  %2167 = vdwg.mxu0
  %v2168 = vadd.f32 %v2109, %v2157
  %v2169 = vadd.f32 %v2110, %v2160
  %v2170 = vadd.f32 %v2111, %v2163
  %v2171 = vadd.f32 %v2112, %v2166
  %s2172 = scalar_lea.vmem [#allocation3], 72
  %v2173 = vld [vmem:[%s2172] sm:$0xff]
  %v2174 = vld [vmem:[%s2172 + $0x8] sm:$0xff]
  %v2175 = vld [vmem:[%s2172 + $0x20] sm:$0xff]
  %v2176 = vld [vmem:[%s2172 + $0x28] sm:$0xff]
  %s2177 = scalar_lea.vmem %s5, 448
  %v2178 = vld [vmem:[%s2177] sm:$0xff]
  %v2179 = vld [vmem:[%s2177 + $0x8] sm:$0xff]
  %v2180 = vld [vmem:[%s2177 + $0x10] sm:$0xff]
  %v2181 = vld [vmem:[%s2177 + $0x18] sm:$0xff]
  %v2182 = vld [vmem:[%s2177 + $0x20] sm:$0xff]
  %v2183 = vld [vmem:[%s2177 + $0x28] sm:$0xff]
  %v2184 = vld [vmem:[%s2177 + $0x30] sm:$0xff]
  %v2185 = vld [vmem:[%s2177 + $0x38] sm:$0xff]
  %v2187 = vsel %vm1740, %v2173, 0
  %v2190 = vsel %vm1740, %v2174, 0
  %v2193 = vsel %vm1740, %v2175, 0
  %v2196 = vsel %vm1740, %v2176, 0
  %2198 = vmatpush.msra.mxu0 0.0
  %2199 = vmatpush.msra.mxu0 0.0
  %2200 = vmatpush.msra.mxu0 0.0
  %2201 = vmatpush.msra.mxu0 0.0
  %2202 = vmatpush.msra.mxu0 0.0
  %2203 = vmatpush.msra.mxu0 0.0
  %2204 = vmatpush.msra.mxu0 0.0
  %2205 = vmatpush.msra.mxu0 0.0
  %2206 = vmatpush.msra.mxu0 %v2185
  %2207 = vmatpush.msra.mxu0 %v2184
  %2208 = vmatpush.msra.mxu0 %v2183
  %2209 = vmatpush.msra.mxu0 %v2182
  %2210 = vmatpush.msra.mxu0 %v2181
  %2211 = vmatpush.msra.mxu0 %v2180
  %2212 = vmatpush.msra.mxu0 %v2179
  %2213 = vmatpush.msra.mxu0 %v2178
  %2214 = vmatmul.f32.gmra.mxu0 %v2187
  %v2215 = vpop.f32.mrf.mxu0
  %v2216 = vadd.f32 0.0, %v2215
  %2217 = vmatmul.f32.gmra.mxu0 %v2190
  %v2218 = vpop.f32.mrf.mxu0
  %v2219 = vadd.f32 0.0, %v2218
  %2220 = vmatmul.f32.gmra.mxu0 %v2193
  %v2221 = vpop.f32.mrf.mxu0
  %v2222 = vadd.f32 0.0, %v2221
  %2223 = vmatmul.f32.gmra.mxu0 %v2196
  %v2224 = vpop.f32.mrf.mxu0
  %v2225 = vadd.f32 0.0, %v2224
  %2226 = vdwg.mxu0
  %v2227 = vadd.f32 %v2168, %v2216
  %v2228 = vadd.f32 %v2169, %v2219
  %v2229 = vadd.f32 %v2170, %v2222
  %v2230 = vadd.f32 %v2171, %v2225
  %s2231 = scalar_lea.vmem [#allocation3], 80
  %v2232 = vld [vmem:[%s2231] sm:$0xff]
  %v2233 = vld [vmem:[%s2231 + $0x8] sm:$0xff]
  %v2234 = vld [vmem:[%s2231 + $0x20] sm:$0xff]
  %v2235 = vld [vmem:[%s2231 + $0x28] sm:$0xff]
  %s2236 = scalar_lea.vmem %s5, 512
  %v2237 = vld [vmem:[%s2236] sm:$0xff]
  %v2238 = vld [vmem:[%s2236 + $0x8] sm:$0xff]
  %v2239 = vld [vmem:[%s2236 + $0x10] sm:$0xff]
  %v2240 = vld [vmem:[%s2236 + $0x18] sm:$0xff]
  %v2241 = vld [vmem:[%s2236 + $0x20] sm:$0xff]
  %v2242 = vld [vmem:[%s2236 + $0x28] sm:$0xff]
  %v2243 = vld [vmem:[%s2236 + $0x30] sm:$0xff]
  %v2244 = vld [vmem:[%s2236 + $0x38] sm:$0xff]
  %v2246 = vsel %vm1740, %v2232, 0
  %v2249 = vsel %vm1740, %v2233, 0
  %v2252 = vsel %vm1740, %v2234, 0
  %v2255 = vsel %vm1740, %v2235, 0
  %2257 = vmatpush.msra.mxu0 0.0
  %2258 = vmatpush.msra.mxu0 0.0
  %2259 = vmatpush.msra.mxu0 0.0
  %2260 = vmatpush.msra.mxu0 0.0
  %2261 = vmatpush.msra.mxu0 0.0
  %2262 = vmatpush.msra.mxu0 0.0
  %2263 = vmatpush.msra.mxu0 0.0
  %2264 = vmatpush.msra.mxu0 0.0
  %2265 = vmatpush.msra.mxu0 %v2244
  %2266 = vmatpush.msra.mxu0 %v2243
  %2267 = vmatpush.msra.mxu0 %v2242
  %2268 = vmatpush.msra.mxu0 %v2241
  %2269 = vmatpush.msra.mxu0 %v2240
  %2270 = vmatpush.msra.mxu0 %v2239
  %2271 = vmatpush.msra.mxu0 %v2238
  %2272 = vmatpush.msra.mxu0 %v2237
  %2273 = vmatmul.f32.gmra.mxu0 %v2246
  %v2274 = vpop.f32.mrf.mxu0
  %v2275 = vadd.f32 0.0, %v2274
  %2276 = vmatmul.f32.gmra.mxu0 %v2249
  %v2277 = vpop.f32.mrf.mxu0
  %v2278 = vadd.f32 0.0, %v2277
  %2279 = vmatmul.f32.gmra.mxu0 %v2252
  %v2280 = vpop.f32.mrf.mxu0
  %v2281 = vadd.f32 0.0, %v2280
  %2282 = vmatmul.f32.gmra.mxu0 %v2255
  %v2283 = vpop.f32.mrf.mxu0
  %v2284 = vadd.f32 0.0, %v2283
  %2285 = vdwg.mxu0
  %v2286 = vadd.f32 %v2227, %v2275
  %v2287 = vadd.f32 %v2228, %v2278
  %v2288 = vadd.f32 %v2229, %v2281
  %v2289 = vadd.f32 %v2230, %v2284
  %v2290 = vmax.f32 %v2286, 0.0
  %v2291 = vmax.f32 %v2287, 0.0
  %v2292 = vmax.f32 %v2288, 0.0
  %v2293 = vmax.f32 %v2289, 0.0
  %v2294 = vld [vmem:[%s8] sm:$0xf]
  %v2296 = vperm.slane %v2294, 0
  %v2297 = vperm.slane %v2294, 1
  %v2298 = vperm.slane %v2294, 2
  %v2299 = vperm.slane %v2294, 3
  %v2304 = vld [vmem:[%s7] sm:$0xff]
  %v2305 = vld [vmem:[%s7 + $0x8] sm:$0xff]
  %v2306 = vld [vmem:[%s7 + $0x10] sm:$0xff]
  %v2307 = vld [vmem:[%s7 + $0x18] sm:$0xff]
  %v2308 = vld [vmem:[%s7 + $0x20] sm:$0xff]
  %v2309 = vld [vmem:[%s7 + $0x28] sm:$0xff]
  %v2310 = vld [vmem:[%s7 + $0x30] sm:$0xff]
  %v2311 = vld [vmem:[%s7 + $0x38] sm:$0xff]
  %v2312 = vld [vmem:[%s7 + $0x40] sm:$0xff]
  %v2313 = vld [vmem:[%s7 + $0x48] sm:$0xff]
  %v2314 = vld [vmem:[%s7 + $0x50] sm:$0xff]
  %v2315 = vld [vmem:[%s7 + $0x58] sm:$0xff]
  %v2316 = vld [vmem:[%s7 + $0x60] sm:$0xff]
  %v2317 = vld [vmem:[%s7 + $0x68] sm:$0xff]
  %v2318 = vld [vmem:[%s7 + $0x70] sm:$0xff]
  %v2319 = vld [vmem:[%s7 + $0x78] sm:$0xff]
  %v2320 = vld [vmem:[%s7 + $0x80] sm:$0xff]
  %v2321 = vld [vmem:[%s7 + $0x88] sm:$0xff]
  %v2322 = vld [vmem:[%s7 + $0x90] sm:$0xff]
  %v2323 = vld [vmem:[%s7 + $0x98] sm:$0xff]
  %v2324 = vld [vmem:[%s7 + $0xa0] sm:$0xff]
  %v2325 = vld [vmem:[%s7 + $0xa8] sm:$0xff]
  %v2326 = vld [vmem:[%s7 + $0xb0] sm:$0xff]
  %v2327 = vld [vmem:[%s7 + $0xb8] sm:$0xff]
  %v2328 = vld [vmem:[%s7 + $0xc0] sm:$0xff]
  %v2329 = vld [vmem:[%s7 + $0xc8] sm:$0xff]
  %v2330 = vld [vmem:[%s7 + $0xd0] sm:$0xff]
  %v2331 = vld [vmem:[%s7 + $0xd8] sm:$0xff]
  %v2332 = vld [vmem:[%s7 + $0xe0] sm:$0xff]
  %v2333 = vld [vmem:[%s7 + $0xe8] sm:$0xff]
  %v2334 = vld [vmem:[%s7 + $0xf0] sm:$0xff]
  %v2335 = vld [vmem:[%s7 + $0xf8] sm:$0xff]
  %v2337 = vsel %vm1740, %v2290, 0
  %2339 = vmatpush.msra.mxu0 0.0
  %2340 = vmatpush.msra.mxu0 0.0
  %2341 = vmatpush.msra.mxu0 0.0
  %2342 = vmatpush.msra.mxu0 0.0
  %2343 = vmatpush.msra.mxu0 0.0
  %2344 = vmatpush.msra.mxu0 0.0
  %2345 = vmatpush.msra.mxu0 0.0
  %2346 = vmatpush.msra.mxu0 0.0
  %2347 = vmatpush.msra.mxu0 %v2332
  %2348 = vmatpush.msra.mxu0 %v2328
  %2349 = vmatpush.msra.mxu0 %v2324
  %2350 = vmatpush.msra.mxu0 %v2320
  %2351 = vmatpush.msra.mxu0 %v2316
  %2352 = vmatpush.msra.mxu0 %v2312
  %2353 = vmatpush.msra.mxu0 %v2308
  %2354 = vmatpush.msra.mxu0 %v2304
  %2355 = vmatmul.f32.gmra.mxu0 %v2337
  %v2356 = vpop.f32.mrf.mxu0
  %v2357 = vadd.f32 0.0, %v2356
  %2358 = vdwg.mxu0
  %2359 = vmatpush.msra.mxu0 0.0
  %2360 = vmatpush.msra.mxu0 0.0
  %2361 = vmatpush.msra.mxu0 0.0
  %2362 = vmatpush.msra.mxu0 0.0
  %2363 = vmatpush.msra.mxu0 0.0
  %2364 = vmatpush.msra.mxu0 0.0
  %2365 = vmatpush.msra.mxu0 0.0
  %2366 = vmatpush.msra.mxu0 0.0
  %2367 = vmatpush.msra.mxu0 %v2333
  %2368 = vmatpush.msra.mxu0 %v2329
  %2369 = vmatpush.msra.mxu0 %v2325
  %2370 = vmatpush.msra.mxu0 %v2321
  %2371 = vmatpush.msra.mxu0 %v2317
  %2372 = vmatpush.msra.mxu0 %v2313
  %2373 = vmatpush.msra.mxu0 %v2309
  %2374 = vmatpush.msra.mxu0 %v2305
  %2375 = vmatmul.f32.gmra.mxu0 %v2337
  %v2376 = vpop.f32.mrf.mxu0
  %v2377 = vadd.f32 0.0, %v2376
  %2378 = vdwg.mxu0
  %2379 = vmatpush.msra.mxu0 0.0
  %2380 = vmatpush.msra.mxu0 0.0
  %2381 = vmatpush.msra.mxu0 0.0
  %2382 = vmatpush.msra.mxu0 0.0
  %2383 = vmatpush.msra.mxu0 0.0
  %2384 = vmatpush.msra.mxu0 0.0
  %2385 = vmatpush.msra.mxu0 0.0
  %2386 = vmatpush.msra.mxu0 0.0
  %2387 = vmatpush.msra.mxu0 %v2334
  %2388 = vmatpush.msra.mxu0 %v2330
  %2389 = vmatpush.msra.mxu0 %v2326
  %2390 = vmatpush.msra.mxu0 %v2322
  %2391 = vmatpush.msra.mxu0 %v2318
  %2392 = vmatpush.msra.mxu0 %v2314
  %2393 = vmatpush.msra.mxu0 %v2310
  %2394 = vmatpush.msra.mxu0 %v2306
  %2395 = vmatmul.f32.gmra.mxu0 %v2337
  %v2396 = vpop.f32.mrf.mxu0
  %v2397 = vadd.f32 0.0, %v2396
  %2398 = vdwg.mxu0
  %2399 = vmatpush.msra.mxu0 0.0
  %2400 = vmatpush.msra.mxu0 0.0
  %2401 = vmatpush.msra.mxu0 0.0
  %2402 = vmatpush.msra.mxu0 0.0
  %2403 = vmatpush.msra.mxu0 0.0
  %2404 = vmatpush.msra.mxu0 0.0
  %2405 = vmatpush.msra.mxu0 0.0
  %2406 = vmatpush.msra.mxu0 0.0
  %2407 = vmatpush.msra.mxu0 %v2335
  %2408 = vmatpush.msra.mxu0 %v2331
  %2409 = vmatpush.msra.mxu0 %v2327
  %2410 = vmatpush.msra.mxu0 %v2323
  %2411 = vmatpush.msra.mxu0 %v2319
  %2412 = vmatpush.msra.mxu0 %v2315
  %2413 = vmatpush.msra.mxu0 %v2311
  %2414 = vmatpush.msra.mxu0 %v2307
  %2415 = vmatmul.f32.gmra.mxu0 %v2337
  %v2416 = vpop.f32.mrf.mxu0
  %v2417 = vadd.f32 0.0, %v2416
  %2418 = vdwg.mxu0
  %v2419 = vadd.f32 %v2296, %v2357
  %v2420 = vadd.f32 %v2297, %v2377
  %v2421 = vadd.f32 %v2298, %v2397
  %v2422 = vadd.f32 %v2299, %v2417
  %s2423 = scalar_lea.vmem %s7, 256
  %v2424 = vld [vmem:[%s2423] sm:$0xff]
  %v2425 = vld [vmem:[%s2423 + $0x8] sm:$0xff]
  %v2426 = vld [vmem:[%s2423 + $0x10] sm:$0xff]
  %v2427 = vld [vmem:[%s2423 + $0x18] sm:$0xff]
  %v2428 = vld [vmem:[%s2423 + $0x20] sm:$0xff]
  %v2429 = vld [vmem:[%s2423 + $0x28] sm:$0xff]
  %v2430 = vld [vmem:[%s2423 + $0x30] sm:$0xff]
  %v2431 = vld [vmem:[%s2423 + $0x38] sm:$0xff]
  %v2432 = vld [vmem:[%s2423 + $0x40] sm:$0xff]
  %v2433 = vld [vmem:[%s2423 + $0x48] sm:$0xff]
  %v2434 = vld [vmem:[%s2423 + $0x50] sm:$0xff]
  %v2435 = vld [vmem:[%s2423 + $0x58] sm:$0xff]
  %v2436 = vld [vmem:[%s2423 + $0x60] sm:$0xff]
  %v2437 = vld [vmem:[%s2423 + $0x68] sm:$0xff]
  %v2438 = vld [vmem:[%s2423 + $0x70] sm:$0xff]
  %v2439 = vld [vmem:[%s2423 + $0x78] sm:$0xff]
  %v2440 = vld [vmem:[%s2423 + $0x80] sm:$0xff]
  %v2441 = vld [vmem:[%s2423 + $0x88] sm:$0xff]
  %v2442 = vld [vmem:[%s2423 + $0x90] sm:$0xff]
  %v2443 = vld [vmem:[%s2423 + $0x98] sm:$0xff]
  %v2444 = vld [vmem:[%s2423 + $0xa0] sm:$0xff]
  %v2445 = vld [vmem:[%s2423 + $0xa8] sm:$0xff]
  %v2446 = vld [vmem:[%s2423 + $0xb0] sm:$0xff]
  %v2447 = vld [vmem:[%s2423 + $0xb8] sm:$0xff]
  %v2448 = vld [vmem:[%s2423 + $0xc0] sm:$0xff]
  %v2449 = vld [vmem:[%s2423 + $0xc8] sm:$0xff]
  %v2450 = vld [vmem:[%s2423 + $0xd0] sm:$0xff]
  %v2451 = vld [vmem:[%s2423 + $0xd8] sm:$0xff]
  %v2452 = vld [vmem:[%s2423 + $0xe0] sm:$0xff]
  %v2453 = vld [vmem:[%s2423 + $0xe8] sm:$0xff]
  %v2454 = vld [vmem:[%s2423 + $0xf0] sm:$0xff]
  %v2455 = vld [vmem:[%s2423 + $0xf8] sm:$0xff]
  %v2457 = vsel %vm1740, %v2291, 0
  %2459 = vmatpush.msra.mxu0 0.0
  %2460 = vmatpush.msra.mxu0 0.0
  %2461 = vmatpush.msra.mxu0 0.0
  %2462 = vmatpush.msra.mxu0 0.0
  %2463 = vmatpush.msra.mxu0 0.0
  %2464 = vmatpush.msra.mxu0 0.0
  %2465 = vmatpush.msra.mxu0 0.0
  %2466 = vmatpush.msra.mxu0 0.0
  %2467 = vmatpush.msra.mxu0 %v2452
  %2468 = vmatpush.msra.mxu0 %v2448
  %2469 = vmatpush.msra.mxu0 %v2444
  %2470 = vmatpush.msra.mxu0 %v2440
  %2471 = vmatpush.msra.mxu0 %v2436
  %2472 = vmatpush.msra.mxu0 %v2432
  %2473 = vmatpush.msra.mxu0 %v2428
  %2474 = vmatpush.msra.mxu0 %v2424
  %2475 = vmatmul.f32.gmra.mxu0 %v2457
  %v2476 = vpop.f32.mrf.mxu0
  %v2477 = vadd.f32 0.0, %v2476
  %2478 = vdwg.mxu0
  %2479 = vmatpush.msra.mxu0 0.0
  %2480 = vmatpush.msra.mxu0 0.0
  %2481 = vmatpush.msra.mxu0 0.0
  %2482 = vmatpush.msra.mxu0 0.0
  %2483 = vmatpush.msra.mxu0 0.0
  %2484 = vmatpush.msra.mxu0 0.0
  %2485 = vmatpush.msra.mxu0 0.0
  %2486 = vmatpush.msra.mxu0 0.0
  %2487 = vmatpush.msra.mxu0 %v2453
  %2488 = vmatpush.msra.mxu0 %v2449
  %2489 = vmatpush.msra.mxu0 %v2445
  %2490 = vmatpush.msra.mxu0 %v2441
  %2491 = vmatpush.msra.mxu0 %v2437
  %2492 = vmatpush.msra.mxu0 %v2433
  %2493 = vmatpush.msra.mxu0 %v2429
  %2494 = vmatpush.msra.mxu0 %v2425
  %2495 = vmatmul.f32.gmra.mxu0 %v2457
  %v2496 = vpop.f32.mrf.mxu0
  %v2497 = vadd.f32 0.0, %v2496
  %2498 = vdwg.mxu0
  %2499 = vmatpush.msra.mxu0 0.0
  %2500 = vmatpush.msra.mxu0 0.0
  %2501 = vmatpush.msra.mxu0 0.0
  %2502 = vmatpush.msra.mxu0 0.0
  %2503 = vmatpush.msra.mxu0 0.0
  %2504 = vmatpush.msra.mxu0 0.0
  %2505 = vmatpush.msra.mxu0 0.0
  %2506 = vmatpush.msra.mxu0 0.0
  %2507 = vmatpush.msra.mxu0 %v2454
  %2508 = vmatpush.msra.mxu0 %v2450
  %2509 = vmatpush.msra.mxu0 %v2446
  %2510 = vmatpush.msra.mxu0 %v2442
  %2511 = vmatpush.msra.mxu0 %v2438
  %2512 = vmatpush.msra.mxu0 %v2434
  %2513 = vmatpush.msra.mxu0 %v2430
  %2514 = vmatpush.msra.mxu0 %v2426
  %2515 = vmatmul.f32.gmra.mxu0 %v2457
  %v2516 = vpop.f32.mrf.mxu0
  %v2517 = vadd.f32 0.0, %v2516
  %2518 = vdwg.mxu0
  %2519 = vmatpush.msra.mxu0 0.0
  %2520 = vmatpush.msra.mxu0 0.0
  %2521 = vmatpush.msra.mxu0 0.0
  %2522 = vmatpush.msra.mxu0 0.0
  %2523 = vmatpush.msra.mxu0 0.0
  %2524 = vmatpush.msra.mxu0 0.0
  %2525 = vmatpush.msra.mxu0 0.0
  %2526 = vmatpush.msra.mxu0 0.0
  %2527 = vmatpush.msra.mxu0 %v2455
  %2528 = vmatpush.msra.mxu0 %v2451
  %2529 = vmatpush.msra.mxu0 %v2447
  %2530 = vmatpush.msra.mxu0 %v2443
  %2531 = vmatpush.msra.mxu0 %v2439
  %2532 = vmatpush.msra.mxu0 %v2435
  %2533 = vmatpush.msra.mxu0 %v2431
  %2534 = vmatpush.msra.mxu0 %v2427
  %2535 = vmatmul.f32.gmra.mxu0 %v2457
  %v2536 = vpop.f32.mrf.mxu0
  %v2537 = vadd.f32 0.0, %v2536
  %2538 = vdwg.mxu0
  %v2539 = vadd.f32 %v2419, %v2477
  %v2540 = vadd.f32 %v2420, %v2497
  %v2541 = vadd.f32 %v2421, %v2517
  %v2542 = vadd.f32 %v2422, %v2537
  %s2543 = scalar_lea.vmem %s7, 512
  %v2544 = vld [vmem:[%s2543] sm:$0xff]
  %v2545 = vld [vmem:[%s2543 + $0x8] sm:$0xff]
  %v2546 = vld [vmem:[%s2543 + $0x10] sm:$0xff]
  %v2547 = vld [vmem:[%s2543 + $0x18] sm:$0xff]
  %v2548 = vld [vmem:[%s2543 + $0x20] sm:$0xff]
  %v2549 = vld [vmem:[%s2543 + $0x28] sm:$0xff]
  %v2550 = vld [vmem:[%s2543 + $0x30] sm:$0xff]
  %v2551 = vld [vmem:[%s2543 + $0x38] sm:$0xff]
  %v2552 = vld [vmem:[%s2543 + $0x40] sm:$0xff]
  %v2553 = vld [vmem:[%s2543 + $0x48] sm:$0xff]
  %v2554 = vld [vmem:[%s2543 + $0x50] sm:$0xff]
  %v2555 = vld [vmem:[%s2543 + $0x58] sm:$0xff]
  %v2556 = vld [vmem:[%s2543 + $0x60] sm:$0xff]
  %v2557 = vld [vmem:[%s2543 + $0x68] sm:$0xff]
  %v2558 = vld [vmem:[%s2543 + $0x70] sm:$0xff]
  %v2559 = vld [vmem:[%s2543 + $0x78] sm:$0xff]
  %v2560 = vld [vmem:[%s2543 + $0x80] sm:$0xff]
  %v2561 = vld [vmem:[%s2543 + $0x88] sm:$0xff]
  %v2562 = vld [vmem:[%s2543 + $0x90] sm:$0xff]
  %v2563 = vld [vmem:[%s2543 + $0x98] sm:$0xff]
  %v2564 = vld [vmem:[%s2543 + $0xa0] sm:$0xff]
  %v2565 = vld [vmem:[%s2543 + $0xa8] sm:$0xff]
  %v2566 = vld [vmem:[%s2543 + $0xb0] sm:$0xff]
  %v2567 = vld [vmem:[%s2543 + $0xb8] sm:$0xff]
  %v2568 = vld [vmem:[%s2543 + $0xc0] sm:$0xff]
  %v2569 = vld [vmem:[%s2543 + $0xc8] sm:$0xff]
  %v2570 = vld [vmem:[%s2543 + $0xd0] sm:$0xff]
  %v2571 = vld [vmem:[%s2543 + $0xd8] sm:$0xff]
  %v2572 = vld [vmem:[%s2543 + $0xe0] sm:$0xff]
  %v2573 = vld [vmem:[%s2543 + $0xe8] sm:$0xff]
  %v2574 = vld [vmem:[%s2543 + $0xf0] sm:$0xff]
  %v2575 = vld [vmem:[%s2543 + $0xf8] sm:$0xff]
  %v2577 = vsel %vm1740, %v2292, 0
  %2579 = vmatpush.msra.mxu0 0.0
  %2580 = vmatpush.msra.mxu0 0.0
  %2581 = vmatpush.msra.mxu0 0.0
  %2582 = vmatpush.msra.mxu0 0.0
  %2583 = vmatpush.msra.mxu0 0.0
  %2584 = vmatpush.msra.mxu0 0.0
  %2585 = vmatpush.msra.mxu0 0.0
  %2586 = vmatpush.msra.mxu0 0.0
  %2587 = vmatpush.msra.mxu0 %v2572
  %2588 = vmatpush.msra.mxu0 %v2568
  %2589 = vmatpush.msra.mxu0 %v2564
  %2590 = vmatpush.msra.mxu0 %v2560
  %2591 = vmatpush.msra.mxu0 %v2556
  %2592 = vmatpush.msra.mxu0 %v2552
  %2593 = vmatpush.msra.mxu0 %v2548
  %2594 = vmatpush.msra.mxu0 %v2544
  %2595 = vmatmul.f32.gmra.mxu0 %v2577
  %v2596 = vpop.f32.mrf.mxu0
  %v2597 = vadd.f32 0.0, %v2596
  %2598 = vdwg.mxu0
  %2599 = vmatpush.msra.mxu0 0.0
  %2600 = vmatpush.msra.mxu0 0.0
  %2601 = vmatpush.msra.mxu0 0.0
  %2602 = vmatpush.msra.mxu0 0.0
  %2603 = vmatpush.msra.mxu0 0.0
  %2604 = vmatpush.msra.mxu0 0.0
  %2605 = vmatpush.msra.mxu0 0.0
  %2606 = vmatpush.msra.mxu0 0.0
  %2607 = vmatpush.msra.mxu0 %v2573
  %2608 = vmatpush.msra.mxu0 %v2569
  %2609 = vmatpush.msra.mxu0 %v2565
  %2610 = vmatpush.msra.mxu0 %v2561
  %2611 = vmatpush.msra.mxu0 %v2557
  %2612 = vmatpush.msra.mxu0 %v2553
  %2613 = vmatpush.msra.mxu0 %v2549
  %2614 = vmatpush.msra.mxu0 %v2545
  %2615 = vmatmul.f32.gmra.mxu0 %v2577
  %v2616 = vpop.f32.mrf.mxu0
  %v2617 = vadd.f32 0.0, %v2616
  %2618 = vdwg.mxu0
  %2619 = vmatpush.msra.mxu0 0.0
  %2620 = vmatpush.msra.mxu0 0.0
  %2621 = vmatpush.msra.mxu0 0.0
  %2622 = vmatpush.msra.mxu0 0.0
  %2623 = vmatpush.msra.mxu0 0.0
  %2624 = vmatpush.msra.mxu0 0.0
  %2625 = vmatpush.msra.mxu0 0.0
  %2626 = vmatpush.msra.mxu0 0.0
  %2627 = vmatpush.msra.mxu0 %v2574
  %2628 = vmatpush.msra.mxu0 %v2570
  %2629 = vmatpush.msra.mxu0 %v2566
  %2630 = vmatpush.msra.mxu0 %v2562
  %2631 = vmatpush.msra.mxu0 %v2558
  %2632 = vmatpush.msra.mxu0 %v2554
  %2633 = vmatpush.msra.mxu0 %v2550
  %2634 = vmatpush.msra.mxu0 %v2546
  %2635 = vmatmul.f32.gmra.mxu0 %v2577
  %v2636 = vpop.f32.mrf.mxu0
  %v2637 = vadd.f32 0.0, %v2636
  %2638 = vdwg.mxu0
  %2639 = vmatpush.msra.mxu0 0.0
  %2640 = vmatpush.msra.mxu0 0.0
  %2641 = vmatpush.msra.mxu0 0.0
  %2642 = vmatpush.msra.mxu0 0.0
  %2643 = vmatpush.msra.mxu0 0.0
  %2644 = vmatpush.msra.mxu0 0.0
  %2645 = vmatpush.msra.mxu0 0.0
  %2646 = vmatpush.msra.mxu0 0.0
  %2647 = vmatpush.msra.mxu0 %v2575
  %2648 = vmatpush.msra.mxu0 %v2571
  %2649 = vmatpush.msra.mxu0 %v2567
  %2650 = vmatpush.msra.mxu0 %v2563
  %2651 = vmatpush.msra.mxu0 %v2559
  %2652 = vmatpush.msra.mxu0 %v2555
  %2653 = vmatpush.msra.mxu0 %v2551
  %2654 = vmatpush.msra.mxu0 %v2547
  %2655 = vmatmul.f32.gmra.mxu0 %v2577
  %v2656 = vpop.f32.mrf.mxu0
  %v2657 = vadd.f32 0.0, %v2656
  %2658 = vdwg.mxu0
  %v2659 = vadd.f32 %v2539, %v2597
  %v2660 = vadd.f32 %v2540, %v2617
  %v2661 = vadd.f32 %v2541, %v2637
  %v2662 = vadd.f32 %v2542, %v2657
  %s2663 = scalar_lea.vmem %s7, 768
  %v2664 = vld [vmem:[%s2663] sm:$0xff]
  %v2665 = vld [vmem:[%s2663 + $0x8] sm:$0xff]
  %v2666 = vld [vmem:[%s2663 + $0x10] sm:$0xff]
  %v2667 = vld [vmem:[%s2663 + $0x18] sm:$0xff]
  %v2668 = vld [vmem:[%s2663 + $0x20] sm:$0xff]
  %v2669 = vld [vmem:[%s2663 + $0x28] sm:$0xff]
  %v2670 = vld [vmem:[%s2663 + $0x30] sm:$0xff]
  %v2671 = vld [vmem:[%s2663 + $0x38] sm:$0xff]
  %v2672 = vld [vmem:[%s2663 + $0x40] sm:$0xff]
  %v2673 = vld [vmem:[%s2663 + $0x48] sm:$0xff]
  %v2674 = vld [vmem:[%s2663 + $0x50] sm:$0xff]
  %v2675 = vld [vmem:[%s2663 + $0x58] sm:$0xff]
  %v2676 = vld [vmem:[%s2663 + $0x60] sm:$0xff]
  %v2677 = vld [vmem:[%s2663 + $0x68] sm:$0xff]
  %v2678 = vld [vmem:[%s2663 + $0x70] sm:$0xff]
  %v2679 = vld [vmem:[%s2663 + $0x78] sm:$0xff]
  %v2680 = vld [vmem:[%s2663 + $0x80] sm:$0xff]
  %v2681 = vld [vmem:[%s2663 + $0x88] sm:$0xff]
  %v2682 = vld [vmem:[%s2663 + $0x90] sm:$0xff]
  %v2683 = vld [vmem:[%s2663 + $0x98] sm:$0xff]
  %v2684 = vld [vmem:[%s2663 + $0xa0] sm:$0xff]
  %v2685 = vld [vmem:[%s2663 + $0xa8] sm:$0xff]
  %v2686 = vld [vmem:[%s2663 + $0xb0] sm:$0xff]
  %v2687 = vld [vmem:[%s2663 + $0xb8] sm:$0xff]
  %v2688 = vld [vmem:[%s2663 + $0xc0] sm:$0xff]
  %v2689 = vld [vmem:[%s2663 + $0xc8] sm:$0xff]
  %v2690 = vld [vmem:[%s2663 + $0xd0] sm:$0xff]
  %v2691 = vld [vmem:[%s2663 + $0xd8] sm:$0xff]
  %v2692 = vld [vmem:[%s2663 + $0xe0] sm:$0xff]
  %v2693 = vld [vmem:[%s2663 + $0xe8] sm:$0xff]
  %v2694 = vld [vmem:[%s2663 + $0xf0] sm:$0xff]
  %v2695 = vld [vmem:[%s2663 + $0xf8] sm:$0xff]
  %v2697 = vsel %vm1740, %v2293, 0
  %2699 = vmatpush.msra.mxu0 0.0
  %2700 = vmatpush.msra.mxu0 0.0
  %2701 = vmatpush.msra.mxu0 0.0
  %2702 = vmatpush.msra.mxu0 0.0
  %2703 = vmatpush.msra.mxu0 0.0
  %2704 = vmatpush.msra.mxu0 0.0
  %2705 = vmatpush.msra.mxu0 0.0
  %2706 = vmatpush.msra.mxu0 0.0
  %2707 = vmatpush.msra.mxu0 %v2692
  %2708 = vmatpush.msra.mxu0 %v2688
  %2709 = vmatpush.msra.mxu0 %v2684
  %2710 = vmatpush.msra.mxu0 %v2680
  %2711 = vmatpush.msra.mxu0 %v2676
  %2712 = vmatpush.msra.mxu0 %v2672
  %2713 = vmatpush.msra.mxu0 %v2668
  %2714 = vmatpush.msra.mxu0 %v2664
  %2715 = vmatmul.f32.gmra.mxu0 %v2697
  %v2716 = vpop.f32.mrf.mxu0
  %v2717 = vadd.f32 0.0, %v2716
  %2718 = vdwg.mxu0
  %2719 = vmatpush.msra.mxu0 0.0
  %2720 = vmatpush.msra.mxu0 0.0
  %2721 = vmatpush.msra.mxu0 0.0
  %2722 = vmatpush.msra.mxu0 0.0
  %2723 = vmatpush.msra.mxu0 0.0
  %2724 = vmatpush.msra.mxu0 0.0
  %2725 = vmatpush.msra.mxu0 0.0
  %2726 = vmatpush.msra.mxu0 0.0
  %2727 = vmatpush.msra.mxu0 %v2693
  %2728 = vmatpush.msra.mxu0 %v2689
  %2729 = vmatpush.msra.mxu0 %v2685
  %2730 = vmatpush.msra.mxu0 %v2681
  %2731 = vmatpush.msra.mxu0 %v2677
  %2732 = vmatpush.msra.mxu0 %v2673
  %2733 = vmatpush.msra.mxu0 %v2669
  %2734 = vmatpush.msra.mxu0 %v2665
  %2735 = vmatmul.f32.gmra.mxu0 %v2697
  %v2736 = vpop.f32.mrf.mxu0
  %v2737 = vadd.f32 0.0, %v2736
  %2738 = vdwg.mxu0
  %2739 = vmatpush.msra.mxu0 0.0
  %2740 = vmatpush.msra.mxu0 0.0
  %2741 = vmatpush.msra.mxu0 0.0
  %2742 = vmatpush.msra.mxu0 0.0
  %2743 = vmatpush.msra.mxu0 0.0
  %2744 = vmatpush.msra.mxu0 0.0
  %2745 = vmatpush.msra.mxu0 0.0
  %2746 = vmatpush.msra.mxu0 0.0
  %2747 = vmatpush.msra.mxu0 %v2694
  %2748 = vmatpush.msra.mxu0 %v2690
  %2749 = vmatpush.msra.mxu0 %v2686
  %2750 = vmatpush.msra.mxu0 %v2682
  %2751 = vmatpush.msra.mxu0 %v2678
  %2752 = vmatpush.msra.mxu0 %v2674
  %2753 = vmatpush.msra.mxu0 %v2670
  %2754 = vmatpush.msra.mxu0 %v2666
  %2755 = vmatmul.f32.gmra.mxu0 %v2697
  %v2756 = vpop.f32.mrf.mxu0
  %v2757 = vadd.f32 0.0, %v2756
  %2758 = vdwg.mxu0
  %2759 = vmatpush.msra.mxu0 0.0
  %2760 = vmatpush.msra.mxu0 0.0
  %2761 = vmatpush.msra.mxu0 0.0
  %2762 = vmatpush.msra.mxu0 0.0
  %2763 = vmatpush.msra.mxu0 0.0
  %2764 = vmatpush.msra.mxu0 0.0
  %2765 = vmatpush.msra.mxu0 0.0
  %2766 = vmatpush.msra.mxu0 0.0
  %2767 = vmatpush.msra.mxu0 %v2695
  %2768 = vmatpush.msra.mxu0 %v2691
  %2769 = vmatpush.msra.mxu0 %v2687
  %2770 = vmatpush.msra.mxu0 %v2683
  %2771 = vmatpush.msra.mxu0 %v2679
  %2772 = vmatpush.msra.mxu0 %v2675
  %2773 = vmatpush.msra.mxu0 %v2671
  %2774 = vmatpush.msra.mxu0 %v2667
  %2775 = vmatmul.f32.gmra.mxu0 %v2697
  %v2776 = vpop.f32.mrf.mxu0
  %v2777 = vadd.f32 0.0, %v2776
  %2778 = vdwg.mxu0
  %v2779 = vadd.f32 %v2659, %v2717
  %v2780 = vadd.f32 %v2660, %v2737
  %v2781 = vadd.f32 %v2661, %v2757
  %v2782 = vadd.f32 %v2662, %v2777
  %v2783 = vmax.f32 %v2779, 0.0
  %v2784 = vmax.f32 %v2780, 0.0
  %v2785 = vmax.f32 %v2781, 0.0
  %v2786 = vmax.f32 %v2782, 0.0
  %v2787 = vld [vmem:[%s9] sm:$0xff]
  %v2788 = vld [vmem:[%s9 + $0x8] sm:$0xff]
  %v2789 = vld [vmem:[%s9 + $0x10] sm:$0xff]
  %v2790 = vld [vmem:[%s9 + $0x18] sm:$0xff]
  %v2791 = vld [vmem:[%s9 + $0x20] sm:$0xff]
  %v2792 = vld [vmem:[%s9 + $0x28] sm:$0xff]
  %v2793 = vld [vmem:[%s9 + $0x30] sm:$0xff]
  %v2794 = vld [vmem:[%s9 + $0x38] sm:$0xff]
  %v2795 = vld [vmem:[%s9 + $0x40] sm:$0xff]
  %v2796 = vld [vmem:[%s9 + $0x48] sm:$0xff]
  %v2797 = vld [vmem:[%s9 + $0x50] sm:$0xff]
  %v2798 = vld [vmem:[%s9 + $0x58] sm:$0xff]
  %v2799 = vld [vmem:[%s9 + $0x60] sm:$0xff]
  %v2800 = vld [vmem:[%s9 + $0x68] sm:$0xff]
  %v2801 = vld [vmem:[%s9 + $0x70] sm:$0xff]
  %v2802 = vld [vmem:[%s9 + $0x78] sm:$0xff]
  %v2803 = vld [vmem:[%s9 + $0x80] sm:$0xff]
  %v2804 = vld [vmem:[%s9 + $0x88] sm:$0xff]
  %v2805 = vld [vmem:[%s9 + $0x90] sm:$0xff]
  %v2806 = vld [vmem:[%s9 + $0x98] sm:$0xff]
  %v2807 = vld [vmem:[%s9 + $0xa0] sm:$0xff]
  %v2808 = vld [vmem:[%s9 + $0xa8] sm:$0xff]
  %v2809 = vld [vmem:[%s9 + $0xb0] sm:$0xff]
  %v2810 = vld [vmem:[%s9 + $0xb8] sm:$0xff]
  %v2811 = vld [vmem:[%s9 + $0xc0] sm:$0xff]
  %v2812 = vld [vmem:[%s9 + $0xc8] sm:$0xff]
  %v2813 = vld [vmem:[%s9 + $0xd0] sm:$0xff]
  %v2814 = vld [vmem:[%s9 + $0xd8] sm:$0xff]
  %v2815 = vld [vmem:[%s9 + $0xe0] sm:$0xff]
  %v2816 = vld [vmem:[%s9 + $0xe8] sm:$0xff]
  %v2817 = vld [vmem:[%s9 + $0xf0] sm:$0xff]
  %v2818 = vld [vmem:[%s9 + $0xf8] sm:$0xff]
  %v2819 = vld [vmem:[%s9 + $0x100] sm:$0xff]
  %v2820 = vld [vmem:[%s9 + $0x108] sm:$0xff]
  %v2821 = vld [vmem:[%s9 + $0x110] sm:$0xff]
  %v2822 = vld [vmem:[%s9 + $0x118] sm:$0xff]
  %v2823 = vld [vmem:[%s9 + $0x120] sm:$0xff]
  %v2824 = vld [vmem:[%s9 + $0x128] sm:$0xff]
  %v2825 = vld [vmem:[%s9 + $0x130] sm:$0xff]
  %v2826 = vld [vmem:[%s9 + $0x138] sm:$0xff]
  %v2827 = vld [vmem:[%s9 + $0x140] sm:$0xff]
  %v2828 = vld [vmem:[%s9 + $0x148] sm:$0xff]
  %v2829 = vld [vmem:[%s9 + $0x150] sm:$0xff]
  %v2830 = vld [vmem:[%s9 + $0x158] sm:$0xff]
  %v2831 = vld [vmem:[%s9 + $0x160] sm:$0xff]
  %v2832 = vld [vmem:[%s9 + $0x168] sm:$0xff]
  %v2833 = vld [vmem:[%s9 + $0x170] sm:$0xff]
  %v2834 = vld [vmem:[%s9 + $0x178] sm:$0xff]
  %v2835 = vld [vmem:[%s9 + $0x180] sm:$0xff]
  %v2836 = vld [vmem:[%s9 + $0x188] sm:$0xff]
  %v2837 = vld [vmem:[%s9 + $0x190] sm:$0xff]
  %v2838 = vld [vmem:[%s9 + $0x198] sm:$0xff]
  %v2839 = vld [vmem:[%s9 + $0x1a0] sm:$0xff]
  %v2840 = vld [vmem:[%s9 + $0x1a8] sm:$0xff]
  %v2841 = vld [vmem:[%s9 + $0x1b0] sm:$0xff]
  %v2842 = vld [vmem:[%s9 + $0x1b8] sm:$0xff]
  %v2843 = vld [vmem:[%s9 + $0x1c0] sm:$0xff]
  %v2844 = vld [vmem:[%s9 + $0x1c8] sm:$0xff]
  %v2845 = vld [vmem:[%s9 + $0x1d0] sm:$0xff]
  %v2846 = vld [vmem:[%s9 + $0x1d8] sm:$0xff]
  %v2847 = vld [vmem:[%s9 + $0x1e0] sm:$0xff]
  %v2848 = vld [vmem:[%s9 + $0x1e8] sm:$0xff]
  %v2849 = vld [vmem:[%s9 + $0x1f0] sm:$0xff]
  %v2850 = vld [vmem:[%s9 + $0x1f8] sm:$0xff]
  %v2851 = vld [vmem:[%s10] sm:$0x1]
  %v2853 = vperm.slane %v2851, 0
  %2855 = vmatpush.msra.mxu0 %v2802
  %2856 = vmatpush.msra.mxu0 %v2801
  %2857 = vmatpush.msra.mxu0 %v2800
  %2858 = vmatpush.msra.mxu0 %v2799
  %2859 = vmatpush.msra.mxu0 %v2798
  %2860 = vmatpush.msra.mxu0 %v2797
  %2861 = vmatpush.msra.mxu0 %v2796
  %2862 = vmatpush.msra.mxu0 %v2795
  %2863 = vmatpush.msra.mxu0 %v2794
  %2864 = vmatpush.msra.mxu0 %v2793
  %2865 = vmatpush.msra.mxu0 %v2792
  %2866 = vmatpush.msra.mxu0 %v2791
  %2867 = vmatpush.msra.mxu0 %v2790
  %2868 = vmatpush.msra.mxu0 %v2789
  %2869 = vmatpush.msra.mxu0 %v2788
  %2870 = vmatpush.msra.mxu0 %v2787
  %2871 = vmatmul.f32.gmra.mxu0 %v2783
  %v2872 = vpop.f32.mrf.mxu0
  %v2873 = vadd.f32 %v2853, %v2872
  %2874 = vdwg.mxu0
  %2875 = vmatpush.msra.mxu0 %v2818
  %2876 = vmatpush.msra.mxu0 %v2817
  %2877 = vmatpush.msra.mxu0 %v2816
  %2878 = vmatpush.msra.mxu0 %v2815
  %2879 = vmatpush.msra.mxu0 %v2814
  %2880 = vmatpush.msra.mxu0 %v2813
  %2881 = vmatpush.msra.mxu0 %v2812
  %2882 = vmatpush.msra.mxu0 %v2811
  %2883 = vmatpush.msra.mxu0 %v2810
  %2884 = vmatpush.msra.mxu0 %v2809
  %2885 = vmatpush.msra.mxu0 %v2808
  %2886 = vmatpush.msra.mxu0 %v2807
  %2887 = vmatpush.msra.mxu0 %v2806
  %2888 = vmatpush.msra.mxu0 %v2805
  %2889 = vmatpush.msra.mxu0 %v2804
  %2890 = vmatpush.msra.mxu0 %v2803
  %2891 = vmatmul.f32.gmra.mxu0 %v2784
  %v2892 = vpop.f32.mrf.mxu0
  %v2893 = vadd.f32 %v2873, %v2892
  %2894 = vdwg.mxu0
  %2895 = vmatpush.msra.mxu0 %v2834
  %2896 = vmatpush.msra.mxu0 %v2833
  %2897 = vmatpush.msra.mxu0 %v2832
  %2898 = vmatpush.msra.mxu0 %v2831
  %2899 = vmatpush.msra.mxu0 %v2830
  %2900 = vmatpush.msra.mxu0 %v2829
  %2901 = vmatpush.msra.mxu0 %v2828
  %2902 = vmatpush.msra.mxu0 %v2827
  %2903 = vmatpush.msra.mxu0 %v2826
  %2904 = vmatpush.msra.mxu0 %v2825
  %2905 = vmatpush.msra.mxu0 %v2824
  %2906 = vmatpush.msra.mxu0 %v2823
  %2907 = vmatpush.msra.mxu0 %v2822
  %2908 = vmatpush.msra.mxu0 %v2821
  %2909 = vmatpush.msra.mxu0 %v2820
  %2910 = vmatpush.msra.mxu0 %v2819
  %2911 = vmatmul.f32.gmra.mxu0 %v2785
  %v2912 = vpop.f32.mrf.mxu0
  %v2913 = vadd.f32 %v2893, %v2912
  %2914 = vdwg.mxu0
  %2915 = vmatpush.msra.mxu0 %v2850
  %2916 = vmatpush.msra.mxu0 %v2849
  %2917 = vmatpush.msra.mxu0 %v2848
  %2918 = vmatpush.msra.mxu0 %v2847
  %2919 = vmatpush.msra.mxu0 %v2846
  %2920 = vmatpush.msra.mxu0 %v2845
  %2921 = vmatpush.msra.mxu0 %v2844
  %2922 = vmatpush.msra.mxu0 %v2843
  %2923 = vmatpush.msra.mxu0 %v2842
  %2924 = vmatpush.msra.mxu0 %v2841
  %2925 = vmatpush.msra.mxu0 %v2840
  %2926 = vmatpush.msra.mxu0 %v2839
  %2927 = vmatpush.msra.mxu0 %v2838
  %2928 = vmatpush.msra.mxu0 %v2837
  %2929 = vmatpush.msra.mxu0 %v2836
  %2930 = vmatpush.msra.mxu0 %v2835
  %2931 = vmatmul.f32.gmra.mxu0 %v2786
  %v2932 = vpop.f32.mrf.mxu0
  %v2933 = vadd.f32 %v2913, %v2932
  %2934 = vdwg.mxu0
  %2935 = vst [vmem:[%s11] sm:$0xff] %v2933
  // Predicated region
  $region46: #{cnn_dqn_forward.1} parent=0 // pred_check
    _
  $region47: #{cnn_dqn_forward.1} parent=0 // pred_check_branch
    %2937 = sbr.rel (0) target = $region49
  $region48: #{cnn_dqn_forward.1} parent=0 // pred_region
    _
  $region49: #{cnn_dqn_forward.1} parent=0 // pred_fallthru
    _
  // Predicated region
  $region50: #{cnn_dqn_forward.1} parent=0 // pred_check
    _
  $region51: #{cnn_dqn_forward.1} parent=0 // pred_check_branch
    %2939 = sbr.rel (0) target = $region53
  $region52: #{cnn_dqn_forward.1} parent=0 // pred_region
    _
  $region53: #{cnn_dqn_forward.1} parent=0 // pred_fallthru
    _

</llo_original>
